<compile_context>
chip_gen: v6e
topology: v6e:2x2x1
jax: 0.10.0
libtpu: 0.0.40
codegen_flags: <defaults>
</compile_context>

<pallas_src>
import functools

import jax
import jax.numpy as jnp
from jax.experimental import pallas as pl
from jax.experimental.pallas import tpu as pltpu

_MIB = 1024 * 1024


# ----------------------------------------------------------------------------
# In-kernel helpers (trace-time)
# ----------------------------------------------------------------------------
def _shifted(plane, d, axis, idx, size, fill):
    """result[i] = plane[i + d] along `axis`; out-of-range -> fill.

    A (non-negative) pltpu.roll + one VPU select: the data movement lands on
    the otherwise-idle XLU slot instead of vld/vst copies.
    """
    if d == 0:
        return plane
    rolled = pltpu.roll(plane, shift=(-d) % size, axis=axis)
    if d > 0:
        valid = idx < (size - d)
    else:
        valid = idx >= (-d)
    return jnp.where(valid, rolled, fill)


def _window_min_2d(plane, win, pad, row, col):
    """Separable win x win sliding minimum with constant pad value 1.

    Matches torch: F.pad(value=1) followed by -max_pool2d(-x, win, stride=1)
    with left/top pad = floor(win/2) (right/bottom one less for even win).
    """
    H, W = plane.shape
    offsets = list(range(-pad, win - pad))
    rmin = None
    for d in offsets:                               # columns (lane axis)
        s = _shifted(plane, d, 1, col, W, 1.0)
        rmin = s if rmin is None else jnp.minimum(rmin, s)
    out = None
    for d in offsets:                               # rows (sublane axis)
        s = _shifted(rmin, d, 0, row, H, 1.0)
        out = s if out is None else jnp.minimum(out, s)
    return out


def _window_sum_1d(plane, win, pad, axis, idx, size):
    """Sliding sum over window [i-pad, i-pad+win-1] ∩ [0, size) (zero fill).

    Binary decomposition: build power-of-two partial sums (log2(win) rolls),
    then compose win from them (popcount(win) rolls).  ~9 rolls per axis for
    win = 31 instead of 31, and no MXU / band matrices at all.
    """
    pows = [plane]                                  # pows[i] has width 2**i
    width = 1
    while width * 2 <= win:
        p = pows[-1]
        pows.append(p + _shifted(p, width, axis, idx, size, 0.0))
        width *= 2
    widths = [1 << i for i in range(len(pows))]
    acc = None
    off = -pad
    rem = win
    for k, p in zip(reversed(widths), reversed(pows)):
        if k <= rem:
            term = _shifted(p, off, axis, idx, size, 0.0)
            acc = term if acc is None else acc + term
            off += k
            rem -= k
    return acc


def _box_sum_2d(plane, win, pad, row, col):
    """(2r+1) x (2r+1) valid-window box sum (== banded-ones Bh @ z @ Bw)."""
    H, W = plane.shape
    s = _window_sum_1d(plane, win, pad, 1, col, W)   # lane axis
    return _window_sum_1d(s, win, pad, 0, row, H)    # sublane axis


# ----------------------------------------------------------------------------
# Kernel A: dark channel of imgPatch = (x + 1) / 2  (affine fused in-kernel)
# ----------------------------------------------------------------------------
def _dark_channel_kernel(x_ref, dark_ref, *, win, pad):
    C, H, W = x_ref.shape[1], x_ref.shape[2], x_ref.shape[3]
    row = jax.lax.broadcasted_iota(jnp.int32, (H, W), 0)
    col = jax.lax.broadcasted_iota(jnp.int32, (H, W), 1)
    chmin = x_ref[0, 0]
    for c in range(1, C):
        chmin = jnp.minimum(chmin, x_ref[0, c])
    # (x+1)/2 is monotone -> apply once after the channel min.
    chmin = chmin * 0.5 + 0.5
    dark_ref[0, 0] = _window_min_2d(chmin, win, pad, row, col)


def dark_channel_of_imgpatch(x, win_size):
    """x: raw input (N, C, H, W) in [-1, 1] -> dark channel of (x+1)/2."""
    N, C, H, W = x.shape
    pad = win_size // 2
    plane = H * W * 4
    # double-buffered x/dark blocks + a handful of live (H,W) temporaries
    need = plane * 2 * (C + 1) + plane * 8
    vmem_limit = int(min(max(need, 32 * _MIB), 64 * _MIB))
    kernel = functools.partial(_dark_channel_kernel, win=win_size, pad=pad)
    # TODO(synk): for large images add an H-strip grid axis with a pad-row
    # halo so blocks fit v7x's 64 MiB VMEM and both TCs stay busy at N==1.
    return pl.pallas_call(
        kernel,
        out_shape=jax.ShapeDtypeStruct((N, 1, H, W), jnp.float32),
        grid=(N,),
        in_specs=[pl.BlockSpec((1, C, H, W), lambda n: (n, 0, 0, 0))],
        out_specs=pl.BlockSpec((1, 1, H, W), lambda n: (n, 0, 0, 0)),
        compiler_params=pltpu.CompilerParams(
            dimension_semantics=("parallel",),
            vmem_limit_bytes=vmem_limit),
    )(x)


# ----------------------------------------------------------------------------
# Kernel B: fused {scaled dark channel -> trans_raw -> guided filter -> J,
#                  map_A}
# ----------------------------------------------------------------------------
def _fused_dehaze_kernel(a_ref, x_ref, j_ref, t_ref, ma_ref,
                         *, win, pad, r, omega, eps):
    n = pl.program_id(0)
    C, H, W = x_ref.shape[1], x_ref.shape[2], x_ref.shape[3]
    row = jax.lax.broadcasted_iota(jnp.int32, (H, W), 0)
    col = jax.lax.broadcasted_iota(jnp.int32, (H, W), 1)
    bwin = 2 * r + 1

    def box(z):
        return _box_sum_2d(z, bwin, r, row, col)

    # ---- 1 / box(ones): analytic valid-window counts (no HBM plane) --------
    rf = row.astype(jnp.float32)
    cf = col.astype(jnp.float32)
    fr = float(r)
    cnt_h = jnp.minimum(rf, fr) + jnp.minimum(float(H - 1) - rf, fr) + 1.0
    cnt_w = jnp.minimum(cf, fr) + jnp.minimum(float(W - 1) - cf, fr) + 1.0
    inv_cnt = 1.0 / (cnt_h * cnt_w)

    # ---- scaled dark channel: min_c( (x_c+1)/2 / A_c ), pad value 1 --------
    # Per-channel scalar hia = 0.5 / A_c (scalar unit) avoids full-plane divides.
    hia0 = 0.5 / a_ref[n, 0]
    chmin = x_ref[0, 0] * hia0 + hia0
    for c in range(1, C):
        hia = 0.5 / a_ref[n, c]
        chmin = jnp.minimum(chmin, x_ref[0, c] * hia + hia)
    traw = 1.0 - omega * _window_min_2d(chmin, win, pad, row, col)

    # ---- grayscale guidance (computed in-kernel, no extra HBM round trip) --
    if C >= 3:
        xg = (0.2989 * x_ref[0, 0] + 0.587 * x_ref[0, 1]
              + 0.114 * x_ref[0, 2] + 1.0) * 0.5
    else:
        xg = (x_ref[0, 0] + 1.0) * 0.5

    # ---- guided filter (inv_cnt folded immediately -> short live ranges) ---
    mean_x = box(xg) * inv_cnt
    mean_y = box(traw) * inv_cnt
    cov_xy = box(xg * traw) * inv_cnt - mean_x * mean_y
    var_x = box(xg * xg) * inv_cnt - mean_x * mean_x
    a_coef = cov_xy / (var_x + eps)
    b_coef = mean_y - a_coef * mean_x
    t_plane = (box(a_coef) * inv_cnt) * xg + box(b_coef) * inv_cnt
    t_ref[0, 0] = t_plane

    # ---- J = (imgPatch - A) / T + A  and map_A, fused into the store pass --
    # NOTE: the reference module does not clamp T before dividing; we match it.
    inv_t = pl.reciprocal(t_plane)                 # exact (matches torch divide)
    zeros = jnp.zeros((H, W), jnp.float32)
    for c in range(C):
        a_c = a_ref[n, c]
        j_ref[0, c] = (x_ref[0, c] * 0.5 + (0.5 - a_c)) * inv_t + a_c
        ma_ref[0, c] = zeros + a_c


def fused_trans_and_dehaze(x, A, win_size, r, eps, omega):
    """x: (N,C,H,W) raw input, A: (N,C) atmospheric light -> (J, T, map_A)."""
    N, C, H, W = x.shape
    pad = win_size // 2
    plane = H * W * 4
    # double-buffered x/J/map_A (C planes each) + T + ~16 live (H,W) temporaries
    need = plane * 2 * (3 * C + 1) + plane * 16
    vmem_limit = int(min(max(need, 32 * _MIB), 64 * _MIB))

    kernel = functools.partial(_fused_dehaze_kernel, win=win_size, pad=pad,
                               r=int(r), omega=float(omega), eps=float(eps))
    grid_spec = pltpu.PrefetchScalarGridSpec(
        num_scalar_prefetch=1,                    # A -> SMEM
        grid=(N,),
        in_specs=[
            pl.BlockSpec((1, C, H, W), lambda n, a: (n, 0, 0, 0)),  # x
        ],
        out_specs=[
            pl.BlockSpec((1, C, H, W), lambda n, a: (n, 0, 0, 0)),  # J
            pl.BlockSpec((1, 1, H, W), lambda n, a: (n, 0, 0, 0)),  # T
            pl.BlockSpec((1, C, H, W), lambda n, a: (n, 0, 0, 0)),  # map_A
        ],
    )
    # TODO(synk): for large images add an H-strip grid axis with a
    # (2r + win//2)-row halo (and pad W to a 128 multiple in the wrapper) so
    # blocks fit v7x's 64 MiB VMEM and output stores stay lane-dense.
    J, T, MA = pl.pallas_call(
        kernel,
        out_shape=(jax.ShapeDtypeStruct((N, C, H, W), jnp.float32),
                   jax.ShapeDtypeStruct((N, 1, H, W), jnp.float32),
                   jax.ShapeDtypeStruct((N, C, H, W), jnp.float32)),
        grid_spec=grid_spec,
        compiler_params=pltpu.CompilerParams(
            dimension_semantics=("parallel",),
            vmem_limit_bytes=vmem_limit),
    )(A, x)
    return J, T, MA


# ----------------------------------------------------------------------------
# Full forward pass (mirrors DCPDehazeGenerator.forward)
# ----------------------------------------------------------------------------
def dcp_dehaze_forward(x, win_size=5, r=15, eps=1e-3, omega=0.95):
    x = x.astype(jnp.float32)
    N, C, H, W = x.shape

    # dark channel of imgPatch = (x+1)/2  (affine fused into the kernel)
    dark1 = dark_channel_of_imgpatch(x, win_size)                # (N,1,H,W)

    # Atmospheric light: mean of imgPatch at the top-1% brightest dark-channel
    # pixels. Since (x+1)/2 is affine, gather raw x and map the mean.
    # TODO(synk): top-k selection + gather kept in plain JAX (lax.top_k).
    topNum = max(1, int(0.01 * H * W))
    dark_flat = dark1.reshape(N, H * W)
    _, top_idx = jax.lax.top_k(dark_flat, topNum)                # (N, topNum)
    gathered = jnp.take_along_axis(x.reshape(N, C, H * W),
                                   top_idx[:, None, :], axis=2)
    A = (jnp.mean(gathered, axis=2) + 1.0) * 0.5                 # (N, C)

    # Fused: trans_raw dark channel -> guided filter -> J and map_A.
    J_DCP, T_DCP, map_A = fused_trans_and_dehaze(x, A, win_size, r, eps, omega)
    return J_DCP, T_DCP, map_A


# ----------------------------------------------------------------------------
if __name__ == "__main__":
    key = jax.random.PRNGKey(0)
    # H, W >= 2*r + 1 (r = 15) so the guided-filter box windows are valid and
    # H*W >= 100 so the top-1% set is non-empty. W = 128 keeps vregs and
    # output stores lane-dense (the biggest small-kernel lever on TPU).
    N, C, H, W = 2, 3, 32, 128
    x = jax.random.uniform(key, (N, C, H, W), jnp.float32,
                           minval=-1.0, maxval=1.0)

    fwd = jax.jit(functools.partial(dcp_dehaze_forward,
                                    win_size=5, r=15, eps=1e-3, omega=0.95))
    J_DCP, T_DCP, map_A = fwd(x)
    (J_DCP, T_DCP, map_A) = jax.block_until_ready((J_DCP, T_DCP, map_A))

    assert J_DCP.shape == (N, C, H, W)
    assert T_DCP.shape == (N, 1, H, W)
    assert map_A.shape == (N, C, H, W)
    assert bool(jnp.all(jnp.isfinite(J_DCP)))
    assert bool(jnp.all(jnp.isfinite(T_DCP)))
    assert bool(jnp.all(jnp.isfinite(map_A)))
    print("KERNEL_OK")
</pallas_src>

<mosaic_0001>
module attributes {stable_mosaic.version = 11 : i64} {
  func.func @_dark_channel_kernel(%arg0: i32, %arg1: memref<1x3x32x128xf32, #tpu.memory_space<vmem>>, %arg2: memref<1x1x32x128xf32, #tpu.memory_space<vmem>>) attributes {dimension_semantics = [#tpu.dimension_semantics<parallel>], iteration_bounds = array<i64: 2>, scalar_prefetch = 0 : i64, scratch_operands = 0 : i64, tpu.core_type = #tpu.core_type<tc>, window_params = [{transform_indices = @transform_0, window_bounds = array<i64: 1, 3, 32, 128>}, {transform_indices = @transform_1, window_bounds = array<i64: 1, 1, 32, 128>}]} {
    %0 = tpu.iota {dimensions = array<i32: 0>} : vector<32x128xi32>
    %1 = tpu.iota {dimensions = array<i32: 1>} : vector<32x128xi32>
    %c0 = arith.constant 0 : index
    %c0_0 = arith.constant 0 : index
    %c0_1 = arith.constant 0 : index
    %c0_2 = arith.constant 0 : index
    %2 = vector.load %arg1[%c0, %c0_0, %c0_1, %c0_2] : memref<1x3x32x128xf32, #tpu.memory_space<vmem>>, vector<1x1x32x128xf32>
    %3 = vector.shape_cast %2 : vector<1x1x32x128xf32> to vector<32x128xf32>
    %c0_3 = arith.constant 0 : index
    %c1 = arith.constant 1 : index
    %c0_4 = arith.constant 0 : index
    %c0_5 = arith.constant 0 : index
    %4 = vector.load %arg1[%c0_3, %c1, %c0_4, %c0_5] : memref<1x3x32x128xf32, #tpu.memory_space<vmem>>, vector<1x1x32x128xf32>
    %5 = vector.shape_cast %4 : vector<1x1x32x128xf32> to vector<32x128xf32>
    %6 = arith.minimumf %3, %5 : vector<32x128xf32>
    %c0_6 = arith.constant 0 : index
    %c2 = arith.constant 2 : index
    %c0_7 = arith.constant 0 : index
    %c0_8 = arith.constant 0 : index
    %7 = vector.load %arg1[%c0_6, %c2, %c0_7, %c0_8] : memref<1x3x32x128xf32, #tpu.memory_space<vmem>>, vector<1x1x32x128xf32>
    %8 = vector.shape_cast %7 : vector<1x1x32x128xf32> to vector<32x128xf32>
    %9 = arith.minimumf %6, %8 : vector<32x128xf32>
    %cst = arith.constant 5.000000e-01 : f32
    %10 = vector.broadcast %cst : f32 to vector<32x128xf32>
    %11 = arith.mulf %9, %10 : vector<32x128xf32>
    %cst_9 = arith.constant 5.000000e-01 : f32
    %12 = vector.broadcast %cst_9 : f32 to vector<32x128xf32>
    %13 = arith.addf %11, %12 : vector<32x128xf32>
    %c2_i32 = arith.constant 2 : i32
    %14 = tpu.dynamic_rotate %13 by %c2_i32 dim 1 : vector<32x128xf32>, i32 -> vector<32x128xf32>
    %c2_i32_10 = arith.constant 2 : i32
    %15 = vector.broadcast %c2_i32_10 : i32 to vector<32x128xi32>
    %16 = arith.cmpi sge, %1, %15 : vector<32x128xi32>
    %cst_11 = arith.constant 1.000000e+00 : f32
    %17 = vector.broadcast %cst_11 : f32 to vector<32x128xf32>
    %18 = arith.select %16, %14, %17 : vector<32x128xi1>, vector<32x128xf32>
    %c1_i32 = arith.constant 1 : i32
    %19 = tpu.dynamic_rotate %13 by %c1_i32 dim 1 : vector<32x128xf32>, i32 -> vector<32x128xf32>
    %c1_i32_12 = arith.constant 1 : i32
    %20 = vector.broadcast %c1_i32_12 : i32 to vector<32x128xi32>
    %21 = arith.cmpi sge, %1, %20 : vector<32x128xi32>
    %cst_13 = arith.constant 1.000000e+00 : f32
    %22 = vector.broadcast %cst_13 : f32 to vector<32x128xf32>
    %23 = arith.select %21, %19, %22 : vector<32x128xi1>, vector<32x128xf32>
    %24 = arith.minimumf %18, %23 : vector<32x128xf32>
    %25 = arith.minimumf %24, %13 : vector<32x128xf32>
    %c127_i32 = arith.constant 127 : i32
    %26 = tpu.dynamic_rotate %13 by %c127_i32 dim 1 : vector<32x128xf32>, i32 -> vector<32x128xf32>
    %c127_i32_14 = arith.constant 127 : i32
    %27 = vector.broadcast %c127_i32_14 : i32 to vector<32x128xi32>
    %28 = arith.cmpi slt, %1, %27 : vector<32x128xi32>
    %cst_15 = arith.constant 1.000000e+00 : f32
    %29 = vector.broadcast %cst_15 : f32 to vector<32x128xf32>
    %30 = arith.select %28, %26, %29 : vector<32x128xi1>, vector<32x128xf32>
    %31 = arith.minimumf %25, %30 : vector<32x128xf32>
    %c126_i32 = arith.constant 126 : i32
    %32 = tpu.dynamic_rotate %13 by %c126_i32 dim 1 : vector<32x128xf32>, i32 -> vector<32x128xf32>
    %c126_i32_16 = arith.constant 126 : i32
    %33 = vector.broadcast %c126_i32_16 : i32 to vector<32x128xi32>
    %34 = arith.cmpi slt, %1, %33 : vector<32x128xi32>
    %cst_17 = arith.constant 1.000000e+00 : f32
    %35 = vector.broadcast %cst_17 : f32 to vector<32x128xf32>
    %36 = arith.select %34, %32, %35 : vector<32x128xi1>, vector<32x128xf32>
    %37 = arith.minimumf %31, %36 : vector<32x128xf32>
    %c2_i32_18 = arith.constant 2 : i32
    %38 = tpu.dynamic_rotate %37 by %c2_i32_18 dim 0 : vector<32x128xf32>, i32 -> vector<32x128xf32>
    %c2_i32_19 = arith.constant 2 : i32
    %39 = vector.broadcast %c2_i32_19 : i32 to vector<32x128xi32>
    %40 = arith.cmpi sge, %0, %39 : vector<32x128xi32>
    %cst_20 = arith.constant 1.000000e+00 : f32
    %41 = vector.broadcast %cst_20 : f32 to vector<32x128xf32>
    %42 = arith.select %40, %38, %41 : vector<32x128xi1>, vector<32x128xf32>
    %c1_i32_21 = arith.constant 1 : i32
    %43 = tpu.dynamic_rotate %37 by %c1_i32_21 dim 0 : vector<32x128xf32>, i32 -> vector<32x128xf32>
    %c1_i32_22 = arith.constant 1 : i32
    %44 = vector.broadcast %c1_i32_22 : i32 to vector<32x128xi32>
    %45 = arith.cmpi sge, %0, %44 : vector<32x128xi32>
    %cst_23 = arith.constant 1.000000e+00 : f32
    %46 = vector.broadcast %cst_23 : f32 to vector<32x128xf32>
    %47 = arith.select %45, %43, %46 : vector<32x128xi1>, vector<32x128xf32>
    %48 = arith.minimumf %42, %47 : vector<32x128xf32>
    %49 = arith.minimumf %48, %37 : vector<32x128xf32>
    %c31_i32 = arith.constant 31 : i32
    %50 = tpu.dynamic_rotate %37 by %c31_i32 dim 0 : vector<32x128xf32>, i32 -> vector<32x128xf32>
    %c31_i32_24 = arith.constant 31 : i32
    %51 = vector.broadcast %c31_i32_24 : i32 to vector<32x128xi32>
    %52 = arith.cmpi slt, %0, %51 : vector<32x128xi32>
    %cst_25 = arith.constant 1.000000e+00 : f32
    %53 = vector.broadcast %cst_25 : f32 to vector<32x128xf32>
    %54 = arith.select %52, %50, %53 : vector<32x128xi1>, vector<32x128xf32>
    %55 = arith.minimumf %49, %54 : vector<32x128xf32>
    %c30_i32 = arith.constant 30 : i32
    %56 = tpu.dynamic_rotate %37 by %c30_i32 dim 0 : vector<32x128xf32>, i32 -> vector<32x128xf32>
    %c30_i32_26 = arith.constant 30 : i32
    %57 = vector.broadcast %c30_i32_26 : i32 to vector<32x128xi32>
    %58 = arith.cmpi slt, %0, %57 : vector<32x128xi32>
    %cst_27 = arith.constant 1.000000e+00 : f32
    %59 = vector.broadcast %cst_27 : f32 to vector<32x128xf32>
    %60 = arith.select %58, %56, %59 : vector<32x128xi1>, vector<32x128xf32>
    %61 = arith.minimumf %55, %60 : vector<32x128xf32>
    %c0_28 = arith.constant 0 : index
    %c0_29 = arith.constant 0 : index
    %c0_30 = arith.constant 0 : index
    %c0_31 = arith.constant 0 : index
    %62 = vector.load %arg2[%c0_28, %c0_29, %c0_30, %c0_31] : memref<1x1x32x128xf32, #tpu.memory_space<vmem>>, vector<1x1x32x128xf32>
    %63 = vector.shape_cast %62 : vector<1x1x32x128xf32> to vector<32x128xf32>
    %64 = vector.shape_cast %61 : vector<32x128xf32> to vector<1x1x32x128xf32>
    tpu.vector_store %arg2[%c0_28, %c0_29, %c0_30, %c0_31], %64 {strides = array<i32>} : memref<1x1x32x128xf32, #tpu.memory_space<vmem>>, vector<1x1x32x128xf32>,
    return
  }
  func.func @transform_0(%arg0: i32) -> (i32, i32, i32, i32) {
    %c0_i32 = arith.constant 0 : i32
    %c0_i32_0 = arith.constant 0 : i32
    %c0_i32_1 = arith.constant 0 : i32
    %c0_i32_2 = arith.constant 0 : i32
    return %arg0, %c0_i32, %c0_i32_0, %c0_i32_1 : i32, i32, i32, i32
  }
  func.func @transform_1(%arg0: i32) -> (i32, i32, i32, i32) {
    %c0_i32 = arith.constant 0 : i32
    %c0_i32_0 = arith.constant 0 : i32
    %c0_i32_1 = arith.constant 0 : i32
    %c0_i32_2 = arith.constant 0 : i32
    return %arg0, %c0_i32, %c0_i32_0, %c0_i32_1 : i32, i32, i32, i32
  }
}

module attributes {stable_mosaic.version = 11 : i64} {
  func.func @_fused_dehaze_kernel(%arg0: i32, %arg1: memref<2x3xf32, #tpu.memory_space<smem>>, %arg2: memref<1x3x32x128xf32, #tpu.memory_space<vmem>>, %arg3: memref<1x3x32x128xf32, #tpu.memory_space<vmem>>, %arg4: memref<1x1x32x128xf32, #tpu.memory_space<vmem>>, %arg5: memref<1x3x32x128xf32, #tpu.memory_space<vmem>>) attributes {dimension_semantics = [#tpu.dimension_semantics<parallel>], iteration_bounds = array<i64: 2>, scalar_prefetch = 1 : i64, scratch_operands = 0 : i64, tpu.core_type = #tpu.core_type<tc>, window_params = [{transform_indices = @transform_0, window_bounds = array<i64: 1, 3, 32, 128>}, {transform_indices = @transform_1, window_bounds = array<i64: 1, 3, 32, 128>}, {transform_indices = @transform_2, window_bounds = array<i64: 1, 1, 32, 128>}, {transform_indices = @transform_3, window_bounds = array<i64: 1, 3, 32, 128>}]} {
    %0 = tpu.iota {dimensions = array<i32: 0>} : vector<32x128xi32>
    %1 = tpu.iota {dimensions = array<i32: 1>} : vector<32x128xi32>
    %2 = arith.sitofp %0 : vector<32x128xi32> to vector<32x128xf32>
    %3 = arith.sitofp %1 : vector<32x128xi32> to vector<32x128xf32>
    %cst = arith.constant 1.500000e+01 : f32
    %4 = vector.broadcast %cst : f32 to vector<32x128xf32>
    %5 = arith.minimumf %2, %4 : vector<32x128xf32>
    %cst_0 = arith.constant 3.100000e+01 : f32
    %6 = vector.broadcast %cst_0 : f32 to vector<32x128xf32>
    %7 = arith.subf %6, %2 : vector<32x128xf32>
    %cst_1 = arith.constant 1.500000e+01 : f32
    %8 = vector.broadcast %cst_1 : f32 to vector<32x128xf32>
    %9 = arith.minimumf %7, %8 : vector<32x128xf32>
    %10 = arith.addf %5, %9 : vector<32x128xf32>
    %cst_2 = arith.constant 1.000000e+00 : f32
    %11 = vector.broadcast %cst_2 : f32 to vector<32x128xf32>
    %12 = arith.addf %10, %11 : vector<32x128xf32>
    %cst_3 = arith.constant 1.500000e+01 : f32
    %13 = vector.broadcast %cst_3 : f32 to vector<32x128xf32>
    %14 = arith.minimumf %3, %13 : vector<32x128xf32>
    %cst_4 = arith.constant 1.270000e+02 : f32
    %15 = vector.broadcast %cst_4 : f32 to vector<32x128xf32>
    %16 = arith.subf %15, %3 : vector<32x128xf32>
    %cst_5 = arith.constant 1.500000e+01 : f32
    %17 = vector.broadcast %cst_5 : f32 to vector<32x128xf32>
    %18 = arith.minimumf %16, %17 : vector<32x128xf32>
    %19 = arith.addf %14, %18 : vector<32x128xf32>
    %cst_6 = arith.constant 1.000000e+00 : f32
    %20 = vector.broadcast %cst_6 : f32 to vector<32x128xf32>
    %21 = arith.addf %19, %20 : vector<32x128xf32>
    %22 = arith.mulf %12, %21 : vector<32x128xf32>
    %cst_7 = arith.constant 1.000000e+00 : f32
    %23 = vector.broadcast %cst_7 : f32 to vector<32x128xf32>
    %24 = arith.divf %23, %22 : vector<32x128xf32>
    %25 = arith.index_cast %arg0 : i32 to index
    %c0 = arith.constant 0 : index
    %26 = memref.load %arg1[%25, %c0] : memref<2x3xf32, #tpu.memory_space<smem>>
    %cst_8 = arith.constant 5.000000e-01 : f32
    %27 = arith.divf %cst_8, %26 : f32
    %c0_9 = arith.constant 0 : index
    %c0_10 = arith.constant 0 : index
    %c0_11 = arith.constant 0 : index
    %c0_12 = arith.constant 0 : index
    %28 = vector.load %arg2[%c0_9, %c0_10, %c0_11, %c0_12] : memref<1x3x32x128xf32, #tpu.memory_space<vmem>>, vector<1x1x32x128xf32>
    %29 = vector.shape_cast %28 : vector<1x1x32x128xf32> to vector<32x128xf32>
    %30 = vector.broadcast %27 : f32 to vector<32x128xf32>
    %31 = arith.mulf %29, %30 : vector<32x128xf32>
    %32 = vector.broadcast %27 : f32 to vector<32x128xf32>
    %33 = arith.addf %31, %32 : vector<32x128xf32>
    %34 = arith.index_cast %arg0 : i32 to index
    %c1 = arith.constant 1 : index
    %35 = memref.load %arg1[%34, %c1] : memref<2x3xf32, #tpu.memory_space<smem>>
    %cst_13 = arith.constant 5.000000e-01 : f32
    %36 = arith.divf %cst_13, %35 : f32
    %c0_14 = arith.constant 0 : index
    %c1_15 = arith.constant 1 : index
    %c0_16 = arith.constant 0 : index
    %c0_17 = arith.constant 0 : index
    %37 = vector.load %arg2[%c0_14, %c1_15, %c0_16, %c0_17] : memref<1x3x32x128xf32, #tpu.memory_space<vmem>>, vector<1x1x32x128xf32>
    %38 = vector.shape_cast %37 : vector<1x1x32x128xf32> to vector<32x128xf32>
    %39 = vector.broadcast %36 : f32 to vector<32x128xf32>
    %40 = arith.mulf %38, %39 : vector<32x128xf32>
    %41 = vector.broadcast %36 : f32 to vector<32x128xf32>
    %42 = arith.addf %40, %41 : vector<32x128xf32>
    %43 = arith.minimumf %33, %42 : vector<32x128xf32>
    %44 = arith.index_cast %arg0 : i32 to index
    %c2 = arith.constant 2 : index
    %45 = memref.load %arg1[%44, %c2] : memref<2x3xf32, #tpu.memory_space<smem>>
    %cst_18 = arith.constant 5.000000e-01 : f32
    %46 = arith.divf %cst_18, %45 : f32
    %c0_19 = arith.constant 0 : index
    %c2_20 = arith.constant 2 : index
    %c0_21 = arith.constant 0 : index
    %c0_22 = arith.constant 0 : index
    %47 = vector.load %arg2[%c0_19, %c2_20, %c0_21, %c0_22] : memref<1x3x32x128xf32, #tpu.memory_space<vmem>>, vector<1x1x32x128xf32>
    %48 = vector.shape_cast %47 : vector<1x1x32x128xf32> to vector<32x128xf32>
    %49 = vector.broadcast %46 : f32 to vector<32x128xf32>
    %50 = arith.mulf %48, %49 : vector<32x128xf32>
    %51 = vector.broadcast %46 : f32 to vector<32x128xf32>
    %52 = arith.addf %50, %51 : vector<32x128xf32>
    %53 = arith.minimumf %43, %52 : vector<32x128xf32>
    %c2_i32 = arith.constant 2 : i32
    %54 = tpu.dynamic_rotate %53 by %c2_i32 dim 1 : vector<32x128xf32>, i32 -> vector<32x128xf32>
    %c2_i32_23 = arith.constant 2 : i32
    %55 = vector.broadcast %c2_i32_23 : i32 to vector<32x128xi32>
    %56 = arith.cmpi sge, %1, %55 : vector<32x128xi32>
    %cst_24 = arith.constant 1.000000e+00 : f32
    %57 = vector.broadcast %cst_24 : f32 to vector<32x128xf32>
    %58 = arith.select %56, %54, %57 : vector<32x128xi1>, vector<32x128xf32>
    %c1_i32 = arith.constant 1 : i32
    %59 = tpu.dynamic_rotate %53 by %c1_i32 dim 1 : vector<32x128xf32>, i32 -> vector<32x128xf32>
    %c1_i32_25 = arith.constant 1 : i32
    %60 = vector.broadcast %c1_i32_25 : i32 to vector<32x128xi32>
    %61 = arith.cmpi sge, %1, %60 : vector<32x128xi32>
    %cst_26 = arith.constant 1.000000e+00 : f32
    %62 = vector.broadcast %cst_26 : f32 to vector<32x128xf32>
    %63 = arith.select %61, %59, %62 : vector<32x128xi1>, vector<32x128xf32>
    %64 = arith.minimumf %58, %63 : vector<32x128xf32>
    %65 = arith.minimumf %64, %53 : vector<32x128xf32>
    %c127_i32 = arith.constant 127 : i32
    %66 = tpu.dynamic_rotate %53 by %c127_i32 dim 1 : vector<32x128xf32>, i32 -> vector<32x128xf32>
    %c127_i32_27 = arith.constant 127 : i32
    %67 = vector.broadcast %c127_i32_27 : i32 to vector<32x128xi32>
    %68 = arith.cmpi slt, %1, %67 : vector<32x128xi32>
    %cst_28 = arith.constant 1.000000e+00 : f32
    %69 = vector.broadcast %cst_28 : f32 to vector<32x128xf32>
    %70 = arith.select %68, %66, %69 : vector<32x128xi1>, vector<32x128xf32>
    %71 = arith.minimumf %65, %70 : vector<32x128xf32>
    %c126_i32 = arith.constant 126 : i32
    %72 = tpu.dynamic_rotate %53 by %c126_i32 dim 1 : vector<32x128xf32>, i32 -> vector<32x128xf32>
    %c126_i32_29 = arith.constant 126 : i32
    %73 = vector.broadcast %c126_i32_29 : i32 to vector<32x128xi32>
    %74 = arith.cmpi slt, %1, %73 : vector<32x128xi32>
    %cst_30 = arith.constant 1.000000e+00 : f32
    %75 = vector.broadcast %cst_30 : f32 to vector<32x128xf32>
    %76 = arith.select %74, %72, %75 : vector<32x128xi1>, vector<32x128xf32>
    %77 = arith.minimumf %71, %76 : vector<32x128xf32>
    %c2_i32_31 = arith.constant 2 : i32
    %78 = tpu.dynamic_rotate %77 by %c2_i32_31 dim 0 : vector<32x128xf32>, i32 -> vector<32x128xf32>
    %c2_i32_32 = arith.constant 2 : i32
    %79 = vector.broadcast %c2_i32_32 : i32 to vector<32x128xi32>
    %80 = arith.cmpi sge, %0, %79 : vector<32x128xi32>
    %cst_33 = arith.constant 1.000000e+00 : f32
    %81 = vector.broadcast %cst_33 : f32 to vector<32x128xf32>
    %82 = arith.select %80, %78, %81 : vector<32x128xi1>, vector<32x128xf32>
    %c1_i32_34 = arith.constant 1 : i32
    %83 = tpu.dynamic_rotate %77 by %c1_i32_34 dim 0 : vector<32x128xf32>, i32 -> vector<32x128xf32>
    %c1_i32_35 = arith.constant 1 : i32
    %84 = vector.broadcast %c1_i32_35 : i32 to vector<32x128xi32>
    %85 = arith.cmpi sge, %0, %84 : vector<32x128xi32>
    %cst_36 = arith.constant 1.000000e+00 : f32
    %86 = vector.broadcast %cst_36 : f32 to vector<32x128xf32>
    %87 = arith.select %85, %83, %86 : vector<32x128xi1>, vector<32x128xf32>
    %88 = arith.minimumf %82, %87 : vector<32x128xf32>
    %89 = arith.minimumf %88, %77 : vector<32x128xf32>
    %c31_i32 = arith.constant 31 : i32
    %90 = tpu.dynamic_rotate %77 by %c31_i32 dim 0 : vector<32x128xf32>, i32 -> vector<32x128xf32>
    %c31_i32_37 = arith.constant 31 : i32
    %91 = vector.broadcast %c31_i32_37 : i32 to vector<32x128xi32>
    %92 = arith.cmpi slt, %0, %91 : vector<32x128xi32>
    %cst_38 = arith.constant 1.000000e+00 : f32
    %93 = vector.broadcast %cst_38 : f32 to vector<32x128xf32>
    %94 = arith.select %92, %90, %93 : vector<32x128xi1>, vector<32x128xf32>
    %95 = arith.minimumf %89, %94 : vector<32x128xf32>
    %c30_i32 = arith.constant 30 : i32
    %96 = tpu.dynamic_rotate %77 by %c30_i32 dim 0 : vector<32x128xf32>, i32 -> vector<32x128xf32>
    %c30_i32_39 = arith.constant 30 : i32
    %97 = vector.broadcast %c30_i32_39 : i32 to vector<32x128xi32>
    %98 = arith.cmpi slt, %0, %97 : vector<32x128xi32>
    %cst_40 = arith.constant 1.000000e+00 : f32
    %99 = vector.broadcast %cst_40 : f32 to vector<32x128xf32>
    %100 = arith.select %98, %96, %99 : vector<32x128xi1>, vector<32x128xf32>
    %101 = arith.minimumf %95, %100 : vector<32x128xf32>
    %cst_41 = arith.constant 0.949999988 : f32
    %102 = vector.broadcast %cst_41 : f32 to vector<32x128xf32>
    %103 = arith.mulf %102, %101 : vector<32x128xf32>
    %cst_42 = arith.constant 1.000000e+00 : f32
    %104 = vector.broadcast %cst_42 : f32 to vector<32x128xf32>
    %105 = arith.subf %104, %103 : vector<32x128xf32>
    %c0_43 = arith.constant 0 : index
    %c0_44 = arith.constant 0 : index
    %c0_45 = arith.constant 0 : index
    %c0_46 = arith.constant 0 : index
    %106 = vector.load %arg2[%c0_43, %c0_44, %c0_45, %c0_46] : memref<1x3x32x128xf32, #tpu.memory_space<vmem>>, vector<1x1x32x128xf32>
    %107 = vector.shape_cast %106 : vector<1x1x32x128xf32> to vector<32x128xf32>
    %cst_47 = arith.constant 2.989000e-01 : f32
    %108 = vector.broadcast %cst_47 : f32 to vector<32x128xf32>
    %109 = arith.mulf %108, %107 : vector<32x128xf32>
    %c0_48 = arith.constant 0 : index
    %c1_49 = arith.constant 1 : index
    %c0_50 = arith.constant 0 : index
    %c0_51 = arith.constant 0 : index
    %110 = vector.load %arg2[%c0_48, %c1_49, %c0_50, %c0_51] : memref<1x3x32x128xf32, #tpu.memory_space<vmem>>, vector<1x1x32x128xf32>
    %111 = vector.shape_cast %110 : vector<1x1x32x128xf32> to vector<32x128xf32>
    %cst_52 = arith.constant 5.870000e-01 : f32
    %112 = vector.broadcast %cst_52 : f32 to vector<32x128xf32>
    %113 = arith.mulf %112, %111 : vector<32x128xf32>
    %114 = arith.addf %109, %113 : vector<32x128xf32>
    %c0_53 = arith.constant 0 : index
    %c2_54 = arith.constant 2 : index
    %c0_55 = arith.constant 0 : index
    %c0_56 = arith.constant 0 : index
    %115 = vector.load %arg2[%c0_53, %c2_54, %c0_55, %c0_56] : memref<1x3x32x128xf32, #tpu.memory_space<vmem>>, vector<1x1x32x128xf32>
    %116 = vector.shape_cast %115 : vector<1x1x32x128xf32> to vector<32x128xf32>
    %cst_57 = arith.constant 1.140000e-01 : f32
    %117 = vector.broadcast %cst_57 : f32 to vector<32x128xf32>
    %118 = arith.mulf %117, %116 : vector<32x128xf32>
    %119 = arith.addf %114, %118 : vector<32x128xf32>
    %cst_58 = arith.constant 1.000000e+00 : f32
    %120 = vector.broadcast %cst_58 : f32 to vector<32x128xf32>
    %121 = arith.addf %119, %120 : vector<32x128xf32>
    %cst_59 = arith.constant 5.000000e-01 : f32
    %122 = vector.broadcast %cst_59 : f32 to vector<32x128xf32>
    %123 = arith.mulf %121, %122 : vector<32x128xf32>
    %c127_i32_60 = arith.constant 127 : i32
    %124 = tpu.dynamic_rotate %123 by %c127_i32_60 dim 1 : vector<32x128xf32>, i32 -> vector<32x128xf32>
    %c127_i32_61 = arith.constant 127 : i32
    %125 = vector.broadcast %c127_i32_61 : i32 to vector<32x128xi32>
    %126 = arith.cmpi slt, %1, %125 : vector<32x128xi32>
    %cst_62 = arith.constant 0.000000e+00 : f32
    %127 = vector.broadcast %cst_62 : f32 to vector<32x128xf32>
    %128 = arith.select %126, %124, %127 : vector<32x128xi1>, vector<32x128xf32>
    %129 = arith.addf %123, %128 : vector<32x128xf32>
    %c126_i32_63 = arith.constant 126 : i32
    %130 = tpu.dynamic_rotate %129 by %c126_i32_63 dim 1 : vector<32x128xf32>, i32 -> vector<32x128xf32>
    %c126_i32_64 = arith.constant 126 : i32
    %131 = vector.broadcast %c126_i32_64 : i32 to vector<32x128xi32>
    %132 = arith.cmpi slt, %1, %131 : vector<32x128xi32>
    %cst_65 = arith.constant 0.000000e+00 : f32
    %133 = vector.broadcast %cst_65 : f32 to vector<32x128xf32>
    %134 = arith.select %132, %130, %133 : vector<32x128xi1>, vector<32x128xf32>
    %135 = arith.addf %129, %134 : vector<32x128xf32>
    %c124_i32 = arith.constant 124 : i32
    %136 = tpu.dynamic_rotate %135 by %c124_i32 dim 1 : vector<32x128xf32>, i32 -> vector<32x128xf32>
    %c124_i32_66 = arith.constant 124 : i32
    %137 = vector.broadcast %c124_i32_66 : i32 to vector<32x128xi32>
    %138 = arith.cmpi slt, %1, %137 : vector<32x128xi32>
    %cst_67 = arith.constant 0.000000e+00 : f32
    %139 = vector.broadcast %cst_67 : f32 to vector<32x128xf32>
    %140 = arith.select %138, %136, %139 : vector<32x128xi1>, vector<32x128xf32>
    %141 = arith.addf %135, %140 : vector<32x128xf32>
    %c120_i32 = arith.constant 120 : i32
    %142 = tpu.dynamic_rotate %141 by %c120_i32 dim 1 : vector<32x128xf32>, i32 -> vector<32x128xf32>
    %c120_i32_68 = arith.constant 120 : i32
    %143 = vector.broadcast %c120_i32_68 : i32 to vector<32x128xi32>
    %144 = arith.cmpi slt, %1, %143 : vector<32x128xi32>
    %cst_69 = arith.constant 0.000000e+00 : f32
    %145 = vector.broadcast %cst_69 : f32 to vector<32x128xf32>
    %146 = arith.select %144, %142, %145 : vector<32x128xi1>, vector<32x128xf32>
    %147 = arith.addf %141, %146 : vector<32x128xf32>
    %c15_i32 = arith.constant 15 : i32
    %148 = tpu.dynamic_rotate %147 by %c15_i32 dim 1 : vector<32x128xf32>, i32 -> vector<32x128xf32>
    %c15_i32_70 = arith.constant 15 : i32
    %149 = vector.broadcast %c15_i32_70 : i32 to vector<32x128xi32>
    %150 = arith.cmpi sge, %1, %149 : vector<32x128xi32>
    %cst_71 = arith.constant 0.000000e+00 : f32
    %151 = vector.broadcast %cst_71 : f32 to vector<32x128xf32>
    %152 = arith.select %150, %148, %151 : vector<32x128xi1>, vector<32x128xf32>
    %c127_i32_72 = arith.constant 127 : i32
    %153 = tpu.dynamic_rotate %141 by %c127_i32_72 dim 1 : vector<32x128xf32>, i32 -> vector<32x128xf32>
    %c127_i32_73 = arith.constant 127 : i32
    %154 = vector.broadcast %c127_i32_73 : i32 to vector<32x128xi32>
    %155 = arith.cmpi slt, %1, %154 : vector<32x128xi32>
    %cst_74 = arith.constant 0.000000e+00 : f32
    %156 = vector.broadcast %cst_74 : f32 to vector<32x128xf32>
    %157 = arith.select %155, %153, %156 : vector<32x128xi1>, vector<32x128xf32>
    %158 = arith.addf %152, %157 : vector<32x128xf32>
    %c119_i32 = arith.constant 119 : i32
    %159 = tpu.dynamic_rotate %135 by %c119_i32 dim 1 : vector<32x128xf32>, i32 -> vector<32x128xf32>
    %c119_i32_75 = arith.constant 119 : i32
    %160 = vector.broadcast %c119_i32_75 : i32 to vector<32x128xi32>
    %161 = arith.cmpi slt, %1, %160 : vector<32x128xi32>
    %cst_76 = arith.constant 0.000000e+00 : f32
    %162 = vector.broadcast %cst_76 : f32 to vector<32x128xf32>
    %163 = arith.select %161, %159, %162 : vector<32x128xi1>, vector<32x128xf32>
    %164 = arith.addf %158, %163 : vector<32x128xf32>
    %c115_i32 = arith.constant 115 : i32
    %165 = tpu.dynamic_rotate %129 by %c115_i32 dim 1 : vector<32x128xf32>, i32 -> vector<32x128xf32>
    %c115_i32_77 = arith.constant 115 : i32
    %166 = vector.broadcast %c115_i32_77 : i32 to vector<32x128xi32>
    %167 = arith.cmpi slt, %1, %166 : vector<32x128xi32>
    %cst_78 = arith.constant 0.000000e+00 : f32
    %168 = vector.broadcast %cst_78 : f32 to vector<32x128xf32>
    %169 = arith.select %167, %165, %168 : vector<32x128xi1>, vector<32x128xf32>
    %170 = arith.addf %164, %169 : vector<32x128xf32>
    %c113_i32 = arith.constant 113 : i32
    %171 = tpu.dynamic_rotate %123 by %c113_i32 dim 1 : vector<32x128xf32>, i32 -> vector<32x128xf32>
    %c113_i32_79 = arith.constant 113 : i32
    %172 = vector.broadcast %c113_i32_79 : i32 to vector<32x128xi32>
    %173 = arith.cmpi slt, %1, %172 : vector<32x128xi32>
    %cst_80 = arith.constant 0.000000e+00 : f32
    %174 = vector.broadcast %cst_80 : f32 to vector<32x128xf32>
    %175 = arith.select %173, %171, %174 : vector<32x128xi1>, vector<32x128xf32>
    %176 = arith.addf %170, %175 : vector<32x128xf32>
    %c31_i32_81 = arith.constant 31 : i32
    %177 = tpu.dynamic_rotate %176 by %c31_i32_81 dim 0 : vector<32x128xf32>, i32 -> vector<32x128xf32>
    %c31_i32_82 = arith.constant 31 : i32
    %178 = vector.broadcast %c31_i32_82 : i32 to vector<32x128xi32>
    %179 = arith.cmpi slt, %0, %178 : vector<32x128xi32>
    %cst_83 = arith.constant 0.000000e+00 : f32
    %180 = vector.broadcast %cst_83 : f32 to vector<32x128xf32>
    %181 = arith.select %179, %177, %180 : vector<32x128xi1>, vector<32x128xf32>
    %182 = arith.addf %176, %181 : vector<32x128xf32>
    %c30_i32_84 = arith.constant 30 : i32
    %183 = tpu.dynamic_rotate %182 by %c30_i32_84 dim 0 : vector<32x128xf32>, i32 -> vector<32x128xf32>
    %c30_i32_85 = arith.constant 30 : i32
    %184 = vector.broadcast %c30_i32_85 : i32 to vector<32x128xi32>
    %185 = arith.cmpi slt, %0, %184 : vector<32x128xi32>
    %cst_86 = arith.constant 0.000000e+00 : f32
    %186 = vector.broadcast %cst_86 : f32 to vector<32x128xf32>
    %187 = arith.select %185, %183, %186 : vector<32x128xi1>, vector<32x128xf32>
    %188 = arith.addf %182, %187 : vector<32x128xf32>
    %c28_i32 = arith.constant 28 : i32
    %189 = tpu.dynamic_rotate %188 by %c28_i32 dim 0 : vector<32x128xf32>, i32 -> vector<32x128xf32>
    %c28_i32_87 = arith.constant 28 : i32
    %190 = vector.broadcast %c28_i32_87 : i32 to vector<32x128xi32>
    %191 = arith.cmpi slt, %0, %190 : vector<32x128xi32>
    %cst_88 = arith.constant 0.000000e+00 : f32
    %192 = vector.broadcast %cst_88 : f32 to vector<32x128xf32>
    %193 = arith.select %191, %189, %192 : vector<32x128xi1>, vector<32x128xf32>
    %194 = arith.addf %188, %193 : vector<32x128xf32>
    %c24_i32 = arith.constant 24 : i32
    %195 = tpu.dynamic_rotate %194 by %c24_i32 dim 0 : vector<32x128xf32>, i32 -> vector<32x128xf32>
    %c24_i32_89 = arith.constant 24 : i32
    %196 = vector.broadcast %c24_i32_89 : i32 to vector<32x128xi32>
    %197 = arith.cmpi slt, %0, %196 : vector<32x128xi32>
    %cst_90 = arith.constant 0.000000e+00 : f32
    %198 = vector.broadcast %cst_90 : f32 to vector<32x128xf32>
    %199 = arith.select %197, %195, %198 : vector<32x128xi1>, vector<32x128xf32>
    %200 = arith.addf %194, %199 : vector<32x128xf32>
    %c15_i32_91 = arith.constant 15 : i32
    %201 = tpu.dynamic_rotate %200 by %c15_i32_91 dim 0 : vector<32x128xf32>, i32 -> vector<32x128xf32>
    %c15_i32_92 = arith.constant 15 : i32
    %202 = vector.broadcast %c15_i32_92 : i32 to vector<32x128xi32>
    %203 = arith.cmpi sge, %0, %202 : vector<32x128xi32>
    %cst_93 = arith.constant 0.000000e+00 : f32
    %204 = vector.broadcast %cst_93 : f32 to vector<32x128xf32>
    %205 = arith.select %203, %201, %204 : vector<32x128xi1>, vector<32x128xf32>
    %c31_i32_94 = arith.constant 31 : i32
    %206 = tpu.dynamic_rotate %194 by %c31_i32_94 dim 0 : vector<32x128xf32>, i32 -> vector<32x128xf32>
    %c31_i32_95 = arith.constant 31 : i32
    %207 = vector.broadcast %c31_i32_95 : i32 to vector<32x128xi32>
    %208 = arith.cmpi slt, %0, %207 : vector<32x128xi32>
    %cst_96 = arith.constant 0.000000e+00 : f32
    %209 = vector.broadcast %cst_96 : f32 to vector<32x128xf32>
    %210 = arith.select %208, %206, %209 : vector<32x128xi1>, vector<32x128xf32>
    %211 = arith.addf %205, %210 : vector<32x128xf32>
    %c23_i32 = arith.constant 23 : i32
    %212 = tpu.dynamic_rotate %188 by %c23_i32 dim 0 : vector<32x128xf32>, i32 -> vector<32x128xf32>
    %c23_i32_97 = arith.constant 23 : i32
    %213 = vector.broadcast %c23_i32_97 : i32 to vector<32x128xi32>
    %214 = arith.cmpi slt, %0, %213 : vector<32x128xi32>
    %cst_98 = arith.constant 0.000000e+00 : f32
    %215 = vector.broadcast %cst_98 : f32 to vector<32x128xf32>
    %216 = arith.select %214, %212, %215 : vector<32x128xi1>, vector<32x128xf32>
    %217 = arith.addf %211, %216 : vector<32x128xf32>
    %c19_i32 = arith.constant 19 : i32
    %218 = tpu.dynamic_rotate %182 by %c19_i32 dim 0 : vector<32x128xf32>, i32 -> vector<32x128xf32>
    %c19_i32_99 = arith.constant 19 : i32
    %219 = vector.broadcast %c19_i32_99 : i32 to vector<32x128xi32>
    %220 = arith.cmpi slt, %0, %219 : vector<32x128xi32>
    %cst_100 = arith.constant 0.000000e+00 : f32
    %221 = vector.broadcast %cst_100 : f32 to vector<32x128xf32>
    %222 = arith.select %220, %218, %221 : vector<32x128xi1>, vector<32x128xf32>
    %223 = arith.addf %217, %222 : vector<32x128xf32>
    %c17_i32 = arith.constant 17 : i32
    %224 = tpu.dynamic_rotate %176 by %c17_i32 dim 0 : vector<32x128xf32>, i32 -> vector<32x128xf32>
    %c17_i32_101 = arith.constant 17 : i32
    %225 = vector.broadcast %c17_i32_101 : i32 to vector<32x128xi32>
    %226 = arith.cmpi slt, %0, %225 : vector<32x128xi32>
    %cst_102 = arith.constant 0.000000e+00 : f32
    %227 = vector.broadcast %cst_102 : f32 to vector<32x128xf32>
    %228 = arith.select %226, %224, %227 : vector<32x128xi1>, vector<32x128xf32>
    %229 = arith.addf %223, %228 : vector<32x128xf32>
    %230 = arith.mulf %229, %24 : vector<32x128xf32>
    %c127_i32_103 = arith.constant 127 : i32
    %231 = tpu.dynamic_rotate %105 by %c127_i32_103 dim 1 : vector<32x128xf32>, i32 -> vector<32x128xf32>
    %c127_i32_104 = arith.constant 127 : i32
    %232 = vector.broadcast %c127_i32_104 : i32 to vector<32x128xi32>
    %233 = arith.cmpi slt, %1, %232 : vector<32x128xi32>
    %cst_105 = arith.constant 0.000000e+00 : f32
    %234 = vector.broadcast %cst_105 : f32 to vector<32x128xf32>
    %235 = arith.select %233, %231, %234 : vector<32x128xi1>, vector<32x128xf32>
    %236 = arith.addf %105, %235 : vector<32x128xf32>
    %c126_i32_106 = arith.constant 126 : i32
    %237 = tpu.dynamic_rotate %236 by %c126_i32_106 dim 1 : vector<32x128xf32>, i32 -> vector<32x128xf32>
    %c126_i32_107 = arith.constant 126 : i32
    %238 = vector.broadcast %c126_i32_107 : i32 to vector<32x128xi32>
    %239 = arith.cmpi slt, %1, %238 : vector<32x128xi32>
    %cst_108 = arith.constant 0.000000e+00 : f32
    %240 = vector.broadcast %cst_108 : f32 to vector<32x128xf32>
    %241 = arith.select %239, %237, %240 : vector<32x128xi1>, vector<32x128xf32>
    %242 = arith.addf %236, %241 : vector<32x128xf32>
    %c124_i32_109 = arith.constant 124 : i32
    %243 = tpu.dynamic_rotate %242 by %c124_i32_109 dim 1 : vector<32x128xf32>, i32 -> vector<32x128xf32>
    %c124_i32_110 = arith.constant 124 : i32
    %244 = vector.broadcast %c124_i32_110 : i32 to vector<32x128xi32>
    %245 = arith.cmpi slt, %1, %244 : vector<32x128xi32>
    %cst_111 = arith.constant 0.000000e+00 : f32
    %246 = vector.broadcast %cst_111 : f32 to vector<32x128xf32>
    %247 = arith.select %245, %243, %246 : vector<32x128xi1>, vector<32x128xf32>
    %248 = arith.addf %242, %247 : vector<32x128xf32>
    %c120_i32_112 = arith.constant 120 : i32
    %249 = tpu.dynamic_rotate %248 by %c120_i32_112 dim 1 : vector<32x128xf32>, i32 -> vector<32x128xf32>
    %c120_i32_113 = arith.constant 120 : i32
    %250 = vector.broadcast %c120_i32_113 : i32 to vector<32x128xi32>
    %251 = arith.cmpi slt, %1, %250 : vector<32x128xi32>
    %cst_114 = arith.constant 0.000000e+00 : f32
    %252 = vector.broadcast %cst_114 : f32 to vector<32x128xf32>
    %253 = arith.select %251, %249, %252 : vector<32x128xi1>, vector<32x128xf32>
    %254 = arith.addf %248, %253 : vector<32x128xf32>
    %c15_i32_115 = arith.constant 15 : i32
    %255 = tpu.dynamic_rotate %254 by %c15_i32_115 dim 1 : vector<32x128xf32>, i32 -> vector<32x128xf32>
    %c15_i32_116 = arith.constant 15 : i32
    %256 = vector.broadcast %c15_i32_116 : i32 to vector<32x128xi32>
    %257 = arith.cmpi sge, %1, %256 : vector<32x128xi32>
    %cst_117 = arith.constant 0.000000e+00 : f32
    %258 = vector.broadcast %cst_117 : f32 to vector<32x128xf32>
    %259 = arith.select %257, %255, %258 : vector<32x128xi1>, vector<32x128xf32>
    %c127_i32_118 = arith.constant 127 : i32
    %260 = tpu.dynamic_rotate %248 by %c127_i32_118 dim 1 : vector<32x128xf32>, i32 -> vector<32x128xf32>
    %c127_i32_119 = arith.constant 127 : i32
    %261 = vector.broadcast %c127_i32_119 : i32 to vector<32x128xi32>
    %262 = arith.cmpi slt, %1, %261 : vector<32x128xi32>
    %cst_120 = arith.constant 0.000000e+00 : f32
    %263 = vector.broadcast %cst_120 : f32 to vector<32x128xf32>
    %264 = arith.select %262, %260, %263 : vector<32x128xi1>, vector<32x128xf32>
    %265 = arith.addf %259, %264 : vector<32x128xf32>
    %c119_i32_121 = arith.constant 119 : i32
    %266 = tpu.dynamic_rotate %242 by %c119_i32_121 dim 1 : vector<32x128xf32>, i32 -> vector<32x128xf32>
    %c119_i32_122 = arith.constant 119 : i32
    %267 = vector.broadcast %c119_i32_122 : i32 to vector<32x128xi32>
    %268 = arith.cmpi slt, %1, %267 : vector<32x128xi32>
    %cst_123 = arith.constant 0.000000e+00 : f32
    %269 = vector.broadcast %cst_123 : f32 to vector<32x128xf32>
    %270 = arith.select %268, %266, %269 : vector<32x128xi1>, vector<32x128xf32>
    %271 = arith.addf %265, %270 : vector<32x128xf32>
    %c115_i32_124 = arith.constant 115 : i32
    %272 = tpu.dynamic_rotate %236 by %c115_i32_124 dim 1 : vector<32x128xf32>, i32 -> vector<32x128xf32>
    %c115_i32_125 = arith.constant 115 : i32
    %273 = vector.broadcast %c115_i32_125 : i32 to vector<32x128xi32>
    %274 = arith.cmpi slt, %1, %273 : vector<32x128xi32>
    %cst_126 = arith.constant 0.000000e+00 : f32
    %275 = vector.broadcast %cst_126 : f32 to vector<32x128xf32>
    %276 = arith.select %274, %272, %275 : vector<32x128xi1>, vector<32x128xf32>
    %277 = arith.addf %271, %276 : vector<32x128xf32>
    %c113_i32_127 = arith.constant 113 : i32
    %278 = tpu.dynamic_rotate %105 by %c113_i32_127 dim 1 : vector<32x128xf32>, i32 -> vector<32x128xf32>
    %c113_i32_128 = arith.constant 113 : i32
    %279 = vector.broadcast %c113_i32_128 : i32 to vector<32x128xi32>
    %280 = arith.cmpi slt, %1, %279 : vector<32x128xi32>
    %cst_129 = arith.constant 0.000000e+00 : f32
    %281 = vector.broadcast %cst_129 : f32 to vector<32x128xf32>
    %282 = arith.select %280, %278, %281 : vector<32x128xi1>, vector<32x128xf32>
    %283 = arith.addf %277, %282 : vector<32x128xf32>
    %c31_i32_130 = arith.constant 31 : i32
    %284 = tpu.dynamic_rotate %283 by %c31_i32_130 dim 0 : vector<32x128xf32>, i32 -> vector<32x128xf32>
    %c31_i32_131 = arith.constant 31 : i32
    %285 = vector.broadcast %c31_i32_131 : i32 to vector<32x128xi32>
    %286 = arith.cmpi slt, %0, %285 : vector<32x128xi32>
    %cst_132 = arith.constant 0.000000e+00 : f32
    %287 = vector.broadcast %cst_132 : f32 to vector<32x128xf32>
    %288 = arith.select %286, %284, %287 : vector<32x128xi1>, vector<32x128xf32>
    %289 = arith.addf %283, %288 : vector<32x128xf32>
    %c30_i32_133 = arith.constant 30 : i32
    %290 = tpu.dynamic_rotate %289 by %c30_i32_133 dim 0 : vector<32x128xf32>, i32 -> vector<32x128xf32>
    %c30_i32_134 = arith.constant 30 : i32
    %291 = vector.broadcast %c30_i32_134 : i32 to vector<32x128xi32>
    %292 = arith.cmpi slt, %0, %291 : vector<32x128xi32>
    %cst_135 = arith.constant 0.000000e+00 : f32
    %293 = vector.broadcast %cst_135 : f32 to vector<32x128xf32>
    %294 = arith.select %292, %290, %293 : vector<32x128xi1>, vector<32x128xf32>
    %295 = arith.addf %289, %294 : vector<32x128xf32>
    %c28_i32_136 = arith.constant 28 : i32
    %296 = tpu.dynamic_rotate %295 by %c28_i32_136 dim 0 : vector<32x128xf32>, i32 -> vector<32x128xf32>
    %c28_i32_137 = arith.constant 28 : i32
    %297 = vector.broadcast %c28_i32_137 : i32 to vector<32x128xi32>
    %298 = arith.cmpi slt, %0, %297 : vector<32x128xi32>
    %cst_138 = arith.constant 0.000000e+00 : f32
    %299 = vector.broadcast %cst_138 : f32 to vector<32x128xf32>
    %300 = arith.select %298, %296, %299 : vector<32x128xi1>, vector<32x128xf32>
    %301 = arith.addf %295, %300 : vector<32x128xf32>
    %c24_i32_139 = arith.constant 24 : i32
    %302 = tpu.dynamic_rotate %301 by %c24_i32_139 dim 0 : vector<32x128xf32>, i32 -> vector<32x128xf32>
    %c24_i32_140 = arith.constant 24 : i32
    %303 = vector.broadcast %c24_i32_140 : i32 to vector<32x128xi32>
    %304 = arith.cmpi slt, %0, %303 : vector<32x128xi32>
    %cst_141 = arith.constant 0.000000e+00 : f32
    %305 = vector.broadcast %cst_141 : f32 to vector<32x128xf32>
    %306 = arith.select %304, %302, %305 : vector<32x128xi1>, vector<32x128xf32>
    %307 = arith.addf %301, %306 : vector<32x128xf32>
    %c15_i32_142 = arith.constant 15 : i32
    %308 = tpu.dynamic_rotate %307 by %c15_i32_142 dim 0 : vector<32x128xf32>, i32 -> vector<32x128xf32>
    %c15_i32_143 = arith.constant 15 : i32
    %309 = vector.broadcast %c15_i32_143 : i32 to vector<32x128xi32>
    %310 = arith.cmpi sge, %0, %309 : vector<32x128xi32>
    %cst_144 = arith.constant 0.000000e+00 : f32
    %311 = vector.broadcast %cst_144 : f32 to vector<32x128xf32>
    %312 = arith.select %310, %308, %311 : vector<32x128xi1>, vector<32x128xf32>
    %c31_i32_145 = arith.constant 31 : i32
    %313 = tpu.dynamic_rotate %301 by %c31_i32_145 dim 0 : vector<32x128xf32>, i32 -> vector<32x128xf32>
    %c31_i32_146 = arith.constant 31 : i32
    %314 = vector.broadcast %c31_i32_146 : i32 to vector<32x128xi32>
    %315 = arith.cmpi slt, %0, %314 : vector<32x128xi32>
    %cst_147 = arith.constant 0.000000e+00 : f32
    %316 = vector.broadcast %cst_147 : f32 to vector<32x128xf32>
    %317 = arith.select %315, %313, %316 : vector<32x128xi1>, vector<32x128xf32>
    %318 = arith.addf %312, %317 : vector<32x128xf32>
    %c23_i32_148 = arith.constant 23 : i32
    %319 = tpu.dynamic_rotate %295 by %c23_i32_148 dim 0 : vector<32x128xf32>, i32 -> vector<32x128xf32>
    %c23_i32_149 = arith.constant 23 : i32
    %320 = vector.broadcast %c23_i32_149 : i32 to vector<32x128xi32>
    %321 = arith.cmpi slt, %0, %320 : vector<32x128xi32>
    %cst_150 = arith.constant 0.000000e+00 : f32
    %322 = vector.broadcast %cst_150 : f32 to vector<32x128xf32>
    %323 = arith.select %321, %319, %322 : vector<32x128xi1>, vector<32x128xf32>
    %324 = arith.addf %318, %323 : vector<32x128xf32>
    %c19_i32_151 = arith.constant 19 : i32
    %325 = tpu.dynamic_rotate %289 by %c19_i32_151 dim 0 : vector<32x128xf32>, i32 -> vector<32x128xf32>
    %c19_i32_152 = arith.constant 19 : i32
    %326 = vector.broadcast %c19_i32_152 : i32 to vector<32x128xi32>
    %327 = arith.cmpi slt, %0, %326 : vector<32x128xi32>
    %cst_153 = arith.constant 0.000000e+00 : f32
    %328 = vector.broadcast %cst_153 : f32 to vector<32x128xf32>
    %329 = arith.select %327, %325, %328 : vector<32x128xi1>, vector<32x128xf32>
    %330 = arith.addf %324, %329 : vector<32x128xf32>
    %c17_i32_154 = arith.constant 17 : i32
    %331 = tpu.dynamic_rotate %283 by %c17_i32_154 dim 0 : vector<32x128xf32>, i32 -> vector<32x128xf32>
    %c17_i32_155 = arith.constant 17 : i32
    %332 = vector.broadcast %c17_i32_155 : i32 to vector<32x128xi32>
    %333 = arith.cmpi slt, %0, %332 : vector<32x128xi32>
    %cst_156 = arith.constant 0.000000e+00 : f32
    %334 = vector.broadcast %cst_156 : f32 to vector<32x128xf32>
    %335 = arith.select %333, %331, %334 : vector<32x128xi1>, vector<32x128xf32>
    %336 = arith.addf %330, %335 : vector<32x128xf32>
    %337 = arith.mulf %336, %24 : vector<32x128xf32>
    %338 = arith.mulf %123, %105 : vector<32x128xf32>
    %c127_i32_157 = arith.constant 127 : i32
    %339 = tpu.dynamic_rotate %338 by %c127_i32_157 dim 1 : vector<32x128xf32>, i32 -> vector<32x128xf32>
    %c127_i32_158 = arith.constant 127 : i32
    %340 = vector.broadcast %c127_i32_158 : i32 to vector<32x128xi32>
    %341 = arith.cmpi slt, %1, %340 : vector<32x128xi32>
    %cst_159 = arith.constant 0.000000e+00 : f32
    %342 = vector.broadcast %cst_159 : f32 to vector<32x128xf32>
    %343 = arith.select %341, %339, %342 : vector<32x128xi1>, vector<32x128xf32>
    %344 = arith.addf %338, %343 : vector<32x128xf32>
    %c126_i32_160 = arith.constant 126 : i32
    %345 = tpu.dynamic_rotate %344 by %c126_i32_160 dim 1 : vector<32x128xf32>, i32 -> vector<32x128xf32>
    %c126_i32_161 = arith.constant 126 : i32
    %346 = vector.broadcast %c126_i32_161 : i32 to vector<32x128xi32>
    %347 = arith.cmpi slt, %1, %346 : vector<32x128xi32>
    %cst_162 = arith.constant 0.000000e+00 : f32
    %348 = vector.broadcast %cst_162 : f32 to vector<32x128xf32>
    %349 = arith.select %347, %345, %348 : vector<32x128xi1>, vector<32x128xf32>
    %350 = arith.addf %344, %349 : vector<32x128xf32>
    %c124_i32_163 = arith.constant 124 : i32
    %351 = tpu.dynamic_rotate %350 by %c124_i32_163 dim 1 : vector<32x128xf32>, i32 -> vector<32x128xf32>
    %c124_i32_164 = arith.constant 124 : i32
    %352 = vector.broadcast %c124_i32_164 : i32 to vector<32x128xi32>
    %353 = arith.cmpi slt, %1, %352 : vector<32x128xi32>
    %cst_165 = arith.constant 0.000000e+00 : f32
    %354 = vector.broadcast %cst_165 : f32 to vector<32x128xf32>
    %355 = arith.select %353, %351, %354 : vector<32x128xi1>, vector<32x128xf32>
    %356 = arith.addf %350, %355 : vector<32x128xf32>
    %c120_i32_166 = arith.constant 120 : i32
    %357 = tpu.dynamic_rotate %356 by %c120_i32_166 dim 1 : vector<32x128xf32>, i32 -> vector<32x128xf32>
    %c120_i32_167 = arith.constant 120 : i32
    %358 = vector.broadcast %c120_i32_167 : i32 to vector<32x128xi32>
    %359 = arith.cmpi slt, %1, %358 : vector<32x128xi32>
    %cst_168 = arith.constant 0.000000e+00 : f32
    %360 = vector.broadcast %cst_168 : f32 to vector<32x128xf32>
    %361 = arith.select %359, %357, %360 : vector<32x128xi1>, vector<32x128xf32>
    %362 = arith.addf %356, %361 : vector<32x128xf32>
    %c15_i32_169 = arith.constant 15 : i32
    %363 = tpu.dynamic_rotate %362 by %c15_i32_169 dim 1 : vector<32x128xf32>, i32 -> vector<32x128xf32>
    %c15_i32_170 = arith.constant 15 : i32
    %364 = vector.broadcast %c15_i32_170 : i32 to vector<32x128xi32>
    %365 = arith.cmpi sge, %1, %364 : vector<32x128xi32>
    %cst_171 = arith.constant 0.000000e+00 : f32
    %366 = vector.broadcast %cst_171 : f32 to vector<32x128xf32>
    %367 = arith.select %365, %363, %366 : vector<32x128xi1>, vector<32x128xf32>
    %c127_i32_172 = arith.constant 127 : i32
    %368 = tpu.dynamic_rotate %356 by %c127_i32_172 dim 1 : vector<32x128xf32>, i32 -> vector<32x128xf32>
    %c127_i32_173 = arith.constant 127 : i32
    %369 = vector.broadcast %c127_i32_173 : i32 to vector<32x128xi32>
    %370 = arith.cmpi slt, %1, %369 : vector<32x128xi32>
    %cst_174 = arith.constant 0.000000e+00 : f32
    %371 = vector.broadcast %cst_174 : f32 to vector<32x128xf32>
    %372 = arith.select %370, %368, %371 : vector<32x128xi1>, vector<32x128xf32>
    %373 = arith.addf %367, %372 : vector<32x128xf32>
    %c119_i32_175 = arith.constant 119 : i32
    %374 = tpu.dynamic_rotate %350 by %c119_i32_175 dim 1 : vector<32x128xf32>, i32 -> vector<32x128xf32>
    %c119_i32_176 = arith.constant 119 : i32
    %375 = vector.broadcast %c119_i32_176 : i32 to vector<32x128xi32>
    %376 = arith.cmpi slt, %1, %375 : vector<32x128xi32>
    %cst_177 = arith.constant 0.000000e+00 : f32
    %377 = vector.broadcast %cst_177 : f32 to vector<32x128xf32>
    %378 = arith.select %376, %374, %377 : vector<32x128xi1>, vector<32x128xf32>
    %379 = arith.addf %373, %378 : vector<32x128xf32>
    %c115_i32_178 = arith.constant 115 : i32
    %380 = tpu.dynamic_rotate %344 by %c115_i32_178 dim 1 : vector<32x128xf32>, i32 -> vector<32x128xf32>
    %c115_i32_179 = arith.constant 115 : i32
    %381 = vector.broadcast %c115_i32_179 : i32 to vector<32x128xi32>
    %382 = arith.cmpi slt, %1, %381 : vector<32x128xi32>
    %cst_180 = arith.constant 0.000000e+00 : f32
    %383 = vector.broadcast %cst_180 : f32 to vector<32x128xf32>
    %384 = arith.select %382, %380, %383 : vector<32x128xi1>, vector<32x128xf32>
    %385 = arith.addf %379, %384 : vector<32x128xf32>
    %c113_i32_181 = arith.constant 113 : i32
    %386 = tpu.dynamic_rotate %338 by %c113_i32_181 dim 1 : vector<32x128xf32>, i32 -> vector<32x128xf32>
    %c113_i32_182 = arith.constant 113 : i32
    %387 = vector.broadcast %c113_i32_182 : i32 to vector<32x128xi32>
    %388 = arith.cmpi slt, %1, %387 : vector<32x128xi32>
    %cst_183 = arith.constant 0.000000e+00 : f32
    %389 = vector.broadcast %cst_183 : f32 to vector<32x128xf32>
    %390 = arith.select %388, %386, %389 : vector<32x128xi1>, vector<32x128xf32>
    %391 = arith.addf %385, %390 : vector<32x128xf32>
    %c31_i32_184 = arith.constant 31 : i32
    %392 = tpu.dynamic_rotate %391 by %c31_i32_184 dim 0 : vector<32x128xf32>, i32 -> vector<32x128xf32>
    %c31_i32_185 = arith.constant 31 : i32
    %393 = vector.broadcast %c31_i32_185 : i32 to vector<32x128xi32>
    %394 = arith.cmpi slt, %0, %393 : vector<32x128xi32>
    %cst_186 = arith.constant 0.000000e+00 : f32
    %395 = vector.broadcast %cst_186 : f32 to vector<32x128xf32>
    %396 = arith.select %394, %392, %395 : vector<32x128xi1>, vector<32x128xf32>
    %397 = arith.addf %391, %396 : vector<32x128xf32>
    %c30_i32_187 = arith.constant 30 : i32
    %398 = tpu.dynamic_rotate %397 by %c30_i32_187 dim 0 : vector<32x128xf32>, i32 -> vector<32x128xf32>
    %c30_i32_188 = arith.constant 30 : i32
    %399 = vector.broadcast %c30_i32_188 : i32 to vector<32x128xi32>
    %400 = arith.cmpi slt, %0, %399 : vector<32x128xi32>
    %cst_189 = arith.constant 0.000000e+00 : f32
    %401 = vector.broadcast %cst_189 : f32 to vector<32x128xf32>
    %402 = arith.select %400, %398, %401 : vector<32x128xi1>, vector<32x128xf32>
    %403 = arith.addf %397, %402 : vector<32x128xf32>
    %c28_i32_190 = arith.constant 28 : i32
    %404 = tpu.dynamic_rotate %403 by %c28_i32_190 dim 0 : vector<32x128xf32>, i32 -> vector<32x128xf32>
    %c28_i32_191 = arith.constant 28 : i32
    %405 = vector.broadcast %c28_i32_191 : i32 to vector<32x128xi32>
    %406 = arith.cmpi slt, %0, %405 : vector<32x128xi32>
    %cst_192 = arith.constant 0.000000e+00 : f32
    %407 = vector.broadcast %cst_192 : f32 to vector<32x128xf32>
    %408 = arith.select %406, %404, %407 : vector<32x128xi1>, vector<32x128xf32>
    %409 = arith.addf %403, %408 : vector<32x128xf32>
    %c24_i32_193 = arith.constant 24 : i32
    %410 = tpu.dynamic_rotate %409 by %c24_i32_193 dim 0 : vector<32x128xf32>, i32 -> vector<32x128xf32>
    %c24_i32_194 = arith.constant 24 : i32
    %411 = vector.broadcast %c24_i32_194 : i32 to vector<32x128xi32>
    %412 = arith.cmpi slt, %0, %411 : vector<32x128xi32>
    %cst_195 = arith.constant 0.000000e+00 : f32
    %413 = vector.broadcast %cst_195 : f32 to vector<32x128xf32>
    %414 = arith.select %412, %410, %413 : vector<32x128xi1>, vector<32x128xf32>
    %415 = arith.addf %409, %414 : vector<32x128xf32>
    %c15_i32_196 = arith.constant 15 : i32
    %416 = tpu.dynamic_rotate %415 by %c15_i32_196 dim 0 : vector<32x128xf32>, i32 -> vector<32x128xf32>
    %c15_i32_197 = arith.constant 15 : i32
    %417 = vector.broadcast %c15_i32_197 : i32 to vector<32x128xi32>
    %418 = arith.cmpi sge, %0, %417 : vector<32x128xi32>
    %cst_198 = arith.constant 0.000000e+00 : f32
    %419 = vector.broadcast %cst_198 : f32 to vector<32x128xf32>
    %420 = arith.select %418, %416, %419 : vector<32x128xi1>, vector<32x128xf32>
    %c31_i32_199 = arith.constant 31 : i32
    %421 = tpu.dynamic_rotate %409 by %c31_i32_199 dim 0 : vector<32x128xf32>, i32 -> vector<32x128xf32>
    %c31_i32_200 = arith.constant 31 : i32
    %422 = vector.broadcast %c31_i32_200 : i32 to vector<32x128xi32>
    %423 = arith.cmpi slt, %0, %422 : vector<32x128xi32>
    %cst_201 = arith.constant 0.000000e+00 : f32
    %424 = vector.broadcast %cst_201 : f32 to vector<32x128xf32>
    %425 = arith.select %423, %421, %424 : vector<32x128xi1>, vector<32x128xf32>
    %426 = arith.addf %420, %425 : vector<32x128xf32>
    %c23_i32_202 = arith.constant 23 : i32
    %427 = tpu.dynamic_rotate %403 by %c23_i32_202 dim 0 : vector<32x128xf32>, i32 -> vector<32x128xf32>
    %c23_i32_203 = arith.constant 23 : i32
    %428 = vector.broadcast %c23_i32_203 : i32 to vector<32x128xi32>
    %429 = arith.cmpi slt, %0, %428 : vector<32x128xi32>
    %cst_204 = arith.constant 0.000000e+00 : f32
    %430 = vector.broadcast %cst_204 : f32 to vector<32x128xf32>
    %431 = arith.select %429, %427, %430 : vector<32x128xi1>, vector<32x128xf32>
    %432 = arith.addf %426, %431 : vector<32x128xf32>
    %c19_i32_205 = arith.constant 19 : i32
    %433 = tpu.dynamic_rotate %397 by %c19_i32_205 dim 0 : vector<32x128xf32>, i32 -> vector<32x128xf32>
    %c19_i32_206 = arith.constant 19 : i32
    %434 = vector.broadcast %c19_i32_206 : i32 to vector<32x128xi32>
    %435 = arith.cmpi slt, %0, %434 : vector<32x128xi32>
    %cst_207 = arith.constant 0.000000e+00 : f32
    %436 = vector.broadcast %cst_207 : f32 to vector<32x128xf32>
    %437 = arith.select %435, %433, %436 : vector<32x128xi1>, vector<32x128xf32>
    %438 = arith.addf %432, %437 : vector<32x128xf32>
    %c17_i32_208 = arith.constant 17 : i32
    %439 = tpu.dynamic_rotate %391 by %c17_i32_208 dim 0 : vector<32x128xf32>, i32 -> vector<32x128xf32>
    %c17_i32_209 = arith.constant 17 : i32
    %440 = vector.broadcast %c17_i32_209 : i32 to vector<32x128xi32>
    %441 = arith.cmpi slt, %0, %440 : vector<32x128xi32>
    %cst_210 = arith.constant 0.000000e+00 : f32
    %442 = vector.broadcast %cst_210 : f32 to vector<32x128xf32>
    %443 = arith.select %441, %439, %442 : vector<32x128xi1>, vector<32x128xf32>
    %444 = arith.addf %438, %443 : vector<32x128xf32>
    %445 = arith.mulf %444, %24 : vector<32x128xf32>
    %446 = arith.mulf %230, %337 : vector<32x128xf32>
    %447 = arith.subf %445, %446 : vector<32x128xf32>
    %448 = arith.mulf %123, %123 : vector<32x128xf32>
    %c127_i32_211 = arith.constant 127 : i32
    %449 = tpu.dynamic_rotate %448 by %c127_i32_211 dim 1 : vector<32x128xf32>, i32 -> vector<32x128xf32>
    %c127_i32_212 = arith.constant 127 : i32
    %450 = vector.broadcast %c127_i32_212 : i32 to vector<32x128xi32>
    %451 = arith.cmpi slt, %1, %450 : vector<32x128xi32>
    %cst_213 = arith.constant 0.000000e+00 : f32
    %452 = vector.broadcast %cst_213 : f32 to vector<32x128xf32>
    %453 = arith.select %451, %449, %452 : vector<32x128xi1>, vector<32x128xf32>
    %454 = arith.addf %448, %453 : vector<32x128xf32>
    %c126_i32_214 = arith.constant 126 : i32
    %455 = tpu.dynamic_rotate %454 by %c126_i32_214 dim 1 : vector<32x128xf32>, i32 -> vector<32x128xf32>
    %c126_i32_215 = arith.constant 126 : i32
    %456 = vector.broadcast %c126_i32_215 : i32 to vector<32x128xi32>
    %457 = arith.cmpi slt, %1, %456 : vector<32x128xi32>
    %cst_216 = arith.constant 0.000000e+00 : f32
    %458 = vector.broadcast %cst_216 : f32 to vector<32x128xf32>
    %459 = arith.select %457, %455, %458 : vector<32x128xi1>, vector<32x128xf32>
    %460 = arith.addf %454, %459 : vector<32x128xf32>
    %c124_i32_217 = arith.constant 124 : i32
    %461 = tpu.dynamic_rotate %460 by %c124_i32_217 dim 1 : vector<32x128xf32>, i32 -> vector<32x128xf32>
    %c124_i32_218 = arith.constant 124 : i32
    %462 = vector.broadcast %c124_i32_218 : i32 to vector<32x128xi32>
    %463 = arith.cmpi slt, %1, %462 : vector<32x128xi32>
    %cst_219 = arith.constant 0.000000e+00 : f32
    %464 = vector.broadcast %cst_219 : f32 to vector<32x128xf32>
    %465 = arith.select %463, %461, %464 : vector<32x128xi1>, vector<32x128xf32>
    %466 = arith.addf %460, %465 : vector<32x128xf32>
    %c120_i32_220 = arith.constant 120 : i32
    %467 = tpu.dynamic_rotate %466 by %c120_i32_220 dim 1 : vector<32x128xf32>, i32 -> vector<32x128xf32>
    %c120_i32_221 = arith.constant 120 : i32
    %468 = vector.broadcast %c120_i32_221 : i32 to vector<32x128xi32>
    %469 = arith.cmpi slt, %1, %468 : vector<32x128xi32>
    %cst_222 = arith.constant 0.000000e+00 : f32
    %470 = vector.broadcast %cst_222 : f32 to vector<32x128xf32>
    %471 = arith.select %469, %467, %470 : vector<32x128xi1>, vector<32x128xf32>
    %472 = arith.addf %466, %471 : vector<32x128xf32>
    %c15_i32_223 = arith.constant 15 : i32
    %473 = tpu.dynamic_rotate %472 by %c15_i32_223 dim 1 : vector<32x128xf32>, i32 -> vector<32x128xf32>
    %c15_i32_224 = arith.constant 15 : i32
    %474 = vector.broadcast %c15_i32_224 : i32 to vector<32x128xi32>
    %475 = arith.cmpi sge, %1, %474 : vector<32x128xi32>
    %cst_225 = arith.constant 0.000000e+00 : f32
    %476 = vector.broadcast %cst_225 : f32 to vector<32x128xf32>
    %477 = arith.select %475, %473, %476 : vector<32x128xi1>, vector<32x128xf32>
    %c127_i32_226 = arith.constant 127 : i32
    %478 = tpu.dynamic_rotate %466 by %c127_i32_226 dim 1 : vector<32x128xf32>, i32 -> vector<32x128xf32>
    %c127_i32_227 = arith.constant 127 : i32
    %479 = vector.broadcast %c127_i32_227 : i32 to vector<32x128xi32>
    %480 = arith.cmpi slt, %1, %479 : vector<32x128xi32>
    %cst_228 = arith.constant 0.000000e+00 : f32
    %481 = vector.broadcast %cst_228 : f32 to vector<32x128xf32>
    %482 = arith.select %480, %478, %481 : vector<32x128xi1>, vector<32x128xf32>
    %483 = arith.addf %477, %482 : vector<32x128xf32>
    %c119_i32_229 = arith.constant 119 : i32
    %484 = tpu.dynamic_rotate %460 by %c119_i32_229 dim 1 : vector<32x128xf32>, i32 -> vector<32x128xf32>
    %c119_i32_230 = arith.constant 119 : i32
    %485 = vector.broadcast %c119_i32_230 : i32 to vector<32x128xi32>
    %486 = arith.cmpi slt, %1, %485 : vector<32x128xi32>
    %cst_231 = arith.constant 0.000000e+00 : f32
    %487 = vector.broadcast %cst_231 : f32 to vector<32x128xf32>
    %488 = arith.select %486, %484, %487 : vector<32x128xi1>, vector<32x128xf32>
    %489 = arith.addf %483, %488 : vector<32x128xf32>
    %c115_i32_232 = arith.constant 115 : i32
    %490 = tpu.dynamic_rotate %454 by %c115_i32_232 dim 1 : vector<32x128xf32>, i32 -> vector<32x128xf32>
    %c115_i32_233 = arith.constant 115 : i32
    %491 = vector.broadcast %c115_i32_233 : i32 to vector<32x128xi32>
    %492 = arith.cmpi slt, %1, %491 : vector<32x128xi32>
    %cst_234 = arith.constant 0.000000e+00 : f32
    %493 = vector.broadcast %cst_234 : f32 to vector<32x128xf32>
    %494 = arith.select %492, %490, %493 : vector<32x128xi1>, vector<32x128xf32>
    %495 = arith.addf %489, %494 : vector<32x128xf32>
    %c113_i32_235 = arith.constant 113 : i32
    %496 = tpu.dynamic_rotate %448 by %c113_i32_235 dim 1 : vector<32x128xf32>, i32 -> vector<32x128xf32>
    %c113_i32_236 = arith.constant 113 : i32
    %497 = vector.broadcast %c113_i32_236 : i32 to vector<32x128xi32>
    %498 = arith.cmpi slt, %1, %497 : vector<32x128xi32>
    %cst_237 = arith.constant 0.000000e+00 : f32
    %499 = vector.broadcast %cst_237 : f32 to vector<32x128xf32>
    %500 = arith.select %498, %496, %499 : vector<32x128xi1>, vector<32x128xf32>
    %501 = arith.addf %495, %500 : vector<32x128xf32>
    %c31_i32_238 = arith.constant 31 : i32
    %502 = tpu.dynamic_rotate %501 by %c31_i32_238 dim 0 : vector<32x128xf32>, i32 -> vector<32x128xf32>
    %c31_i32_239 = arith.constant 31 : i32
    %503 = vector.broadcast %c31_i32_239 : i32 to vector<32x128xi32>
    %504 = arith.cmpi slt, %0, %503 : vector<32x128xi32>
    %cst_240 = arith.constant 0.000000e+00 : f32
    %505 = vector.broadcast %cst_240 : f32 to vector<32x128xf32>
    %506 = arith.select %504, %502, %505 : vector<32x128xi1>, vector<32x128xf32>
    %507 = arith.addf %501, %506 : vector<32x128xf32>
    %c30_i32_241 = arith.constant 30 : i32
    %508 = tpu.dynamic_rotate %507 by %c30_i32_241 dim 0 : vector<32x128xf32>, i32 -> vector<32x128xf32>
    %c30_i32_242 = arith.constant 30 : i32
    %509 = vector.broadcast %c30_i32_242 : i32 to vector<32x128xi32>
    %510 = arith.cmpi slt, %0, %509 : vector<32x128xi32>
    %cst_243 = arith.constant 0.000000e+00 : f32
    %511 = vector.broadcast %cst_243 : f32 to vector<32x128xf32>
    %512 = arith.select %510, %508, %511 : vector<32x128xi1>, vector<32x128xf32>
    %513 = arith.addf %507, %512 : vector<32x128xf32>
    %c28_i32_244 = arith.constant 28 : i32
    %514 = tpu.dynamic_rotate %513 by %c28_i32_244 dim 0 : vector<32x128xf32>, i32 -> vector<32x128xf32>
    %c28_i32_245 = arith.constant 28 : i32
    %515 = vector.broadcast %c28_i32_245 : i32 to vector<32x128xi32>
    %516 = arith.cmpi slt, %0, %515 : vector<32x128xi32>
    %cst_246 = arith.constant 0.000000e+00 : f32
    %517 = vector.broadcast %cst_246 : f32 to vector<32x128xf32>
    %518 = arith.select %516, %514, %517 : vector<32x128xi1>, vector<32x128xf32>
    %519 = arith.addf %513, %518 : vector<32x128xf32>
    %c24_i32_247 = arith.constant 24 : i32
    %520 = tpu.dynamic_rotate %519 by %c24_i32_247 dim 0 : vector<32x128xf32>, i32 -> vector<32x128xf32>
    %c24_i32_248 = arith.constant 24 : i32
    %521 = vector.broadcast %c24_i32_248 : i32 to vector<32x128xi32>
    %522 = arith.cmpi slt, %0, %521 : vector<32x128xi32>
    %cst_249 = arith.constant 0.000000e+00 : f32
    %523 = vector.broadcast %cst_249 : f32 to vector<32x128xf32>
    %524 = arith.select %522, %520, %523 : vector<32x128xi1>, vector<32x128xf32>
    %525 = arith.addf %519, %524 : vector<32x128xf32>
    %c15_i32_250 = arith.constant 15 : i32
    %526 = tpu.dynamic_rotate %525 by %c15_i32_250 dim 0 : vector<32x128xf32>, i32 -> vector<32x128xf32>
    %c15_i32_251 = arith.constant 15 : i32
    %527 = vector.broadcast %c15_i32_251 : i32 to vector<32x128xi32>
    %528 = arith.cmpi sge, %0, %527 : vector<32x128xi32>
    %cst_252 = arith.constant 0.000000e+00 : f32
    %529 = vector.broadcast %cst_252 : f32 to vector<32x128xf32>
    %530 = arith.select %528, %526, %529 : vector<32x128xi1>, vector<32x128xf32>
    %c31_i32_253 = arith.constant 31 : i32
    %531 = tpu.dynamic_rotate %519 by %c31_i32_253 dim 0 : vector<32x128xf32>, i32 -> vector<32x128xf32>
    %c31_i32_254 = arith.constant 31 : i32
    %532 = vector.broadcast %c31_i32_254 : i32 to vector<32x128xi32>
    %533 = arith.cmpi slt, %0, %532 : vector<32x128xi32>
    %cst_255 = arith.constant 0.000000e+00 : f32
    %534 = vector.broadcast %cst_255 : f32 to vector<32x128xf32>
    %535 = arith.select %533, %531, %534 : vector<32x128xi1>, vector<32x128xf32>
    %536 = arith.addf %530, %535 : vector<32x128xf32>
    %c23_i32_256 = arith.constant 23 : i32
    %537 = tpu.dynamic_rotate %513 by %c23_i32_256 dim 0 : vector<32x128xf32>, i32 -> vector<32x128xf32>
    %c23_i32_257 = arith.constant 23 : i32
    %538 = vector.broadcast %c23_i32_257 : i32 to vector<32x128xi32>
    %539 = arith.cmpi slt, %0, %538 : vector<32x128xi32>
    %cst_258 = arith.constant 0.000000e+00 : f32
    %540 = vector.broadcast %cst_258 : f32 to vector<32x128xf32>
    %541 = arith.select %539, %537, %540 : vector<32x128xi1>, vector<32x128xf32>
    %542 = arith.addf %536, %541 : vector<32x128xf32>
    %c19_i32_259 = arith.constant 19 : i32
    %543 = tpu.dynamic_rotate %507 by %c19_i32_259 dim 0 : vector<32x128xf32>, i32 -> vector<32x128xf32>
    %c19_i32_260 = arith.constant 19 : i32
    %544 = vector.broadcast %c19_i32_260 : i32 to vector<32x128xi32>
    %545 = arith.cmpi slt, %0, %544 : vector<32x128xi32>
    %cst_261 = arith.constant 0.000000e+00 : f32
    %546 = vector.broadcast %cst_261 : f32 to vector<32x128xf32>
    %547 = arith.select %545, %543, %546 : vector<32x128xi1>, vector<32x128xf32>
    %548 = arith.addf %542, %547 : vector<32x128xf32>
    %c17_i32_262 = arith.constant 17 : i32
    %549 = tpu.dynamic_rotate %501 by %c17_i32_262 dim 0 : vector<32x128xf32>, i32 -> vector<32x128xf32>
    %c17_i32_263 = arith.constant 17 : i32
    %550 = vector.broadcast %c17_i32_263 : i32 to vector<32x128xi32>
    %551 = arith.cmpi slt, %0, %550 : vector<32x128xi32>
    %cst_264 = arith.constant 0.000000e+00 : f32
    %552 = vector.broadcast %cst_264 : f32 to vector<32x128xf32>
    %553 = arith.select %551, %549, %552 : vector<32x128xi1>, vector<32x128xf32>
    %554 = arith.addf %548, %553 : vector<32x128xf32>
    %555 = arith.mulf %554, %24 : vector<32x128xf32>
    %556 = arith.mulf %230, %230 : vector<32x128xf32>
    %557 = arith.subf %555, %556 : vector<32x128xf32>
    %cst_265 = arith.constant 1.000000e-03 : f32
    %558 = vector.broadcast %cst_265 : f32 to vector<32x128xf32>
    %559 = arith.addf %557, %558 : vector<32x128xf32>
    %560 = arith.divf %447, %559 : vector<32x128xf32>
    %561 = arith.mulf %560, %230 : vector<32x128xf32>
    %562 = arith.subf %337, %561 : vector<32x128xf32>
    %c127_i32_266 = arith.constant 127 : i32
    %563 = tpu.dynamic_rotate %560 by %c127_i32_266 dim 1 : vector<32x128xf32>, i32 -> vector<32x128xf32>
    %c127_i32_267 = arith.constant 127 : i32
    %564 = vector.broadcast %c127_i32_267 : i32 to vector<32x128xi32>
    %565 = arith.cmpi slt, %1, %564 : vector<32x128xi32>
    %cst_268 = arith.constant 0.000000e+00 : f32
    %566 = vector.broadcast %cst_268 : f32 to vector<32x128xf32>
    %567 = arith.select %565, %563, %566 : vector<32x128xi1>, vector<32x128xf32>
    %568 = arith.addf %560, %567 : vector<32x128xf32>
    %c126_i32_269 = arith.constant 126 : i32
    %569 = tpu.dynamic_rotate %568 by %c126_i32_269 dim 1 : vector<32x128xf32>, i32 -> vector<32x128xf32>
    %c126_i32_270 = arith.constant 126 : i32
    %570 = vector.broadcast %c126_i32_270 : i32 to vector<32x128xi32>
    %571 = arith.cmpi slt, %1, %570 : vector<32x128xi32>
    %cst_271 = arith.constant 0.000000e+00 : f32
    %572 = vector.broadcast %cst_271 : f32 to vector<32x128xf32>
    %573 = arith.select %571, %569, %572 : vector<32x128xi1>, vector<32x128xf32>
    %574 = arith.addf %568, %573 : vector<32x128xf32>
    %c124_i32_272 = arith.constant 124 : i32
    %575 = tpu.dynamic_rotate %574 by %c124_i32_272 dim 1 : vector<32x128xf32>, i32 -> vector<32x128xf32>
    %c124_i32_273 = arith.constant 124 : i32
    %576 = vector.broadcast %c124_i32_273 : i32 to vector<32x128xi32>
    %577 = arith.cmpi slt, %1, %576 : vector<32x128xi32>
    %cst_274 = arith.constant 0.000000e+00 : f32
    %578 = vector.broadcast %cst_274 : f32 to vector<32x128xf32>
    %579 = arith.select %577, %575, %578 : vector<32x128xi1>, vector<32x128xf32>
    %580 = arith.addf %574, %579 : vector<32x128xf32>
    %c120_i32_275 = arith.constant 120 : i32
    %581 = tpu.dynamic_rotate %580 by %c120_i32_275 dim 1 : vector<32x128xf32>, i32 -> vector<32x128xf32>
    %c120_i32_276 = arith.constant 120 : i32
    %582 = vector.broadcast %c120_i32_276 : i32 to vector<32x128xi32>
    %583 = arith.cmpi slt, %1, %582 : vector<32x128xi32>
    %cst_277 = arith.constant 0.000000e+00 : f32
    %584 = vector.broadcast %cst_277 : f32 to vector<32x128xf32>
    %585 = arith.select %583, %581, %584 : vector<32x128xi1>, vector<32x128xf32>
    %586 = arith.addf %580, %585 : vector<32x128xf32>
    %c15_i32_278 = arith.constant 15 : i32
    %587 = tpu.dynamic_rotate %586 by %c15_i32_278 dim 1 : vector<32x128xf32>, i32 -> vector<32x128xf32>
    %c15_i32_279 = arith.constant 15 : i32
    %588 = vector.broadcast %c15_i32_279 : i32 to vector<32x128xi32>
    %589 = arith.cmpi sge, %1, %588 : vector<32x128xi32>
    %cst_280 = arith.constant 0.000000e+00 : f32
    %590 = vector.broadcast %cst_280 : f32 to vector<32x128xf32>
    %591 = arith.select %589, %587, %590 : vector<32x128xi1>, vector<32x128xf32>
    %c127_i32_281 = arith.constant 127 : i32
    %592 = tpu.dynamic_rotate %580 by %c127_i32_281 dim 1 : vector<32x128xf32>, i32 -> vector<32x128xf32>
    %c127_i32_282 = arith.constant 127 : i32
    %593 = vector.broadcast %c127_i32_282 : i32 to vector<32x128xi32>
    %594 = arith.cmpi slt, %1, %593 : vector<32x128xi32>
    %cst_283 = arith.constant 0.000000e+00 : f32
    %595 = vector.broadcast %cst_283 : f32 to vector<32x128xf32>
    %596 = arith.select %594, %592, %595 : vector<32x128xi1>, vector<32x128xf32>
    %597 = arith.addf %591, %596 : vector<32x128xf32>
    %c119_i32_284 = arith.constant 119 : i32
    %598 = tpu.dynamic_rotate %574 by %c119_i32_284 dim 1 : vector<32x128xf32>, i32 -> vector<32x128xf32>
    %c119_i32_285 = arith.constant 119 : i32
    %599 = vector.broadcast %c119_i32_285 : i32 to vector<32x128xi32>
    %600 = arith.cmpi slt, %1, %599 : vector<32x128xi32>
    %cst_286 = arith.constant 0.000000e+00 : f32
    %601 = vector.broadcast %cst_286 : f32 to vector<32x128xf32>
    %602 = arith.select %600, %598, %601 : vector<32x128xi1>, vector<32x128xf32>
    %603 = arith.addf %597, %602 : vector<32x128xf32>
    %c115_i32_287 = arith.constant 115 : i32
    %604 = tpu.dynamic_rotate %568 by %c115_i32_287 dim 1 : vector<32x128xf32>, i32 -> vector<32x128xf32>
    %c115_i32_288 = arith.constant 115 : i32
    %605 = vector.broadcast %c115_i32_288 : i32 to vector<32x128xi32>
    %606 = arith.cmpi slt, %1, %605 : vector<32x128xi32>
    %cst_289 = arith.constant 0.000000e+00 : f32
    %607 = vector.broadcast %cst_289 : f32 to vector<32x128xf32>
    %608 = arith.select %606, %604, %607 : vector<32x128xi1>, vector<32x128xf32>
    %609 = arith.addf %603, %608 : vector<32x128xf32>
    %c113_i32_290 = arith.constant 113 : i32
    %610 = tpu.dynamic_rotate %560 by %c113_i32_290 dim 1 : vector<32x128xf32>, i32 -> vector<32x128xf32>
    %c113_i32_291 = arith.constant 113 : i32
    %611 = vector.broadcast %c113_i32_291 : i32 to vector<32x128xi32>
    %612 = arith.cmpi slt, %1, %611 : vector<32x128xi32>
    %cst_292 = arith.constant 0.000000e+00 : f32
    %613 = vector.broadcast %cst_292 : f32 to vector<32x128xf32>
    %614 = arith.select %612, %610, %613 : vector<32x128xi1>, vector<32x128xf32>
    %615 = arith.addf %609, %614 : vector<32x128xf32>
    %c31_i32_293 = arith.constant 31 : i32
    %616 = tpu.dynamic_rotate %615 by %c31_i32_293 dim 0 : vector<32x128xf32>, i32 -> vector<32x128xf32>
    %c31_i32_294 = arith.constant 31 : i32
    %617 = vector.broadcast %c31_i32_294 : i32 to vector<32x128xi32>
    %618 = arith.cmpi slt, %0, %617 : vector<32x128xi32>
    %cst_295 = arith.constant 0.000000e+00 : f32
    %619 = vector.broadcast %cst_295 : f32 to vector<32x128xf32>
    %620 = arith.select %618, %616, %619 : vector<32x128xi1>, vector<32x128xf32>
    %621 = arith.addf %615, %620 : vector<32x128xf32>
    %c30_i32_296 = arith.constant 30 : i32
    %622 = tpu.dynamic_rotate %621 by %c30_i32_296 dim 0 : vector<32x128xf32>, i32 -> vector<32x128xf32>
    %c30_i32_297 = arith.constant 30 : i32
    %623 = vector.broadcast %c30_i32_297 : i32 to vector<32x128xi32>
    %624 = arith.cmpi slt, %0, %623 : vector<32x128xi32>
    %cst_298 = arith.constant 0.000000e+00 : f32
    %625 = vector.broadcast %cst_298 : f32 to vector<32x128xf32>
    %626 = arith.select %624, %622, %625 : vector<32x128xi1>, vector<32x128xf32>
    %627 = arith.addf %621, %626 : vector<32x128xf32>
    %c28_i32_299 = arith.constant 28 : i32
    %628 = tpu.dynamic_rotate %627 by %c28_i32_299 dim 0 : vector<32x128xf32>, i32 -> vector<32x128xf32>
    %c28_i32_300 = arith.constant 28 : i32
    %629 = vector.broadcast %c28_i32_300 : i32 to vector<32x128xi32>
    %630 = arith.cmpi slt, %0, %629 : vector<32x128xi32>
    %cst_301 = arith.constant 0.000000e+00 : f32
    %631 = vector.broadcast %cst_301 : f32 to vector<32x128xf32>
    %632 = arith.select %630, %628, %631 : vector<32x128xi1>, vector<32x128xf32>
    %633 = arith.addf %627, %632 : vector<32x128xf32>
    %c24_i32_302 = arith.constant 24 : i32
    %634 = tpu.dynamic_rotate %633 by %c24_i32_302 dim 0 : vector<32x128xf32>, i32 -> vector<32x128xf32>
    %c24_i32_303 = arith.constant 24 : i32
    %635 = vector.broadcast %c24_i32_303 : i32 to vector<32x128xi32>
    %636 = arith.cmpi slt, %0, %635 : vector<32x128xi32>
    %cst_304 = arith.constant 0.000000e+00 : f32
    %637 = vector.broadcast %cst_304 : f32 to vector<32x128xf32>
    %638 = arith.select %636, %634, %637 : vector<32x128xi1>, vector<32x128xf32>
    %639 = arith.addf %633, %638 : vector<32x128xf32>
    %c15_i32_305 = arith.constant 15 : i32
    %640 = tpu.dynamic_rotate %639 by %c15_i32_305 dim 0 : vector<32x128xf32>, i32 -> vector<32x128xf32>
    %c15_i32_306 = arith.constant 15 : i32
    %641 = vector.broadcast %c15_i32_306 : i32 to vector<32x128xi32>
    %642 = arith.cmpi sge, %0, %641 : vector<32x128xi32>
    %cst_307 = arith.constant 0.000000e+00 : f32
    %643 = vector.broadcast %cst_307 : f32 to vector<32x128xf32>
    %644 = arith.select %642, %640, %643 : vector<32x128xi1>, vector<32x128xf32>
    %c31_i32_308 = arith.constant 31 : i32
    %645 = tpu.dynamic_rotate %633 by %c31_i32_308 dim 0 : vector<32x128xf32>, i32 -> vector<32x128xf32>
    %c31_i32_309 = arith.constant 31 : i32
    %646 = vector.broadcast %c31_i32_309 : i32 to vector<32x128xi32>
    %647 = arith.cmpi slt, %0, %646 : vector<32x128xi32>
    %cst_310 = arith.constant 0.000000e+00 : f32
    %648 = vector.broadcast %cst_310 : f32 to vector<32x128xf32>
    %649 = arith.select %647, %645, %648 : vector<32x128xi1>, vector<32x128xf32>
    %650 = arith.addf %644, %649 : vector<32x128xf32>
    %c23_i32_311 = arith.constant 23 : i32
    %651 = tpu.dynamic_rotate %627 by %c23_i32_311 dim 0 : vector<32x128xf32>, i32 -> vector<32x128xf32>
    %c23_i32_312 = arith.constant 23 : i32
    %652 = vector.broadcast %c23_i32_312 : i32 to vector<32x128xi32>
    %653 = arith.cmpi slt, %0, %652 : vector<32x128xi32>
    %cst_313 = arith.constant 0.000000e+00 : f32
    %654 = vector.broadcast %cst_313 : f32 to vector<32x128xf32>
    %655 = arith.select %653, %651, %654 : vector<32x128xi1>, vector<32x128xf32>
    %656 = arith.addf %650, %655 : vector<32x128xf32>
    %c19_i32_314 = arith.constant 19 : i32
    %657 = tpu.dynamic_rotate %621 by %c19_i32_314 dim 0 : vector<32x128xf32>, i32 -> vector<32x128xf32>
    %c19_i32_315 = arith.constant 19 : i32
    %658 = vector.broadcast %c19_i32_315 : i32 to vector<32x128xi32>
    %659 = arith.cmpi slt, %0, %658 : vector<32x128xi32>
    %cst_316 = arith.constant 0.000000e+00 : f32
    %660 = vector.broadcast %cst_316 : f32 to vector<32x128xf32>
    %661 = arith.select %659, %657, %660 : vector<32x128xi1>, vector<32x128xf32>
    %662 = arith.addf %656, %661 : vector<32x128xf32>
    %c17_i32_317 = arith.constant 17 : i32
    %663 = tpu.dynamic_rotate %615 by %c17_i32_317 dim 0 : vector<32x128xf32>, i32 -> vector<32x128xf32>
    %c17_i32_318 = arith.constant 17 : i32
    %664 = vector.broadcast %c17_i32_318 : i32 to vector<32x128xi32>
    %665 = arith.cmpi slt, %0, %664 : vector<32x128xi32>
    %cst_319 = arith.constant 0.000000e+00 : f32
    %666 = vector.broadcast %cst_319 : f32 to vector<32x128xf32>
    %667 = arith.select %665, %663, %666 : vector<32x128xi1>, vector<32x128xf32>
    %668 = arith.addf %662, %667 : vector<32x128xf32>
    %669 = arith.mulf %668, %24 : vector<32x128xf32>
    %670 = arith.mulf %669, %123 : vector<32x128xf32>
    %c127_i32_320 = arith.constant 127 : i32
    %671 = tpu.dynamic_rotate %562 by %c127_i32_320 dim 1 : vector<32x128xf32>, i32 -> vector<32x128xf32>
    %c127_i32_321 = arith.constant 127 : i32
    %672 = vector.broadcast %c127_i32_321 : i32 to vector<32x128xi32>
    %673 = arith.cmpi slt, %1, %672 : vector<32x128xi32>
    %cst_322 = arith.constant 0.000000e+00 : f32
    %674 = vector.broadcast %cst_322 : f32 to vector<32x128xf32>
    %675 = arith.select %673, %671, %674 : vector<32x128xi1>, vector<32x128xf32>
    %676 = arith.addf %562, %675 : vector<32x128xf32>
    %c126_i32_323 = arith.constant 126 : i32
    %677 = tpu.dynamic_rotate %676 by %c126_i32_323 dim 1 : vector<32x128xf32>, i32 -> vector<32x128xf32>
    %c126_i32_324 = arith.constant 126 : i32
    %678 = vector.broadcast %c126_i32_324 : i32 to vector<32x128xi32>
    %679 = arith.cmpi slt, %1, %678 : vector<32x128xi32>
    %cst_325 = arith.constant 0.000000e+00 : f32
    %680 = vector.broadcast %cst_325 : f32 to vector<32x128xf32>
    %681 = arith.select %679, %677, %680 : vector<32x128xi1>, vector<32x128xf32>
    %682 = arith.addf %676, %681 : vector<32x128xf32>
    %c124_i32_326 = arith.constant 124 : i32
    %683 = tpu.dynamic_rotate %682 by %c124_i32_326 dim 1 : vector<32x128xf32>, i32 -> vector<32x128xf32>
    %c124_i32_327 = arith.constant 124 : i32
    %684 = vector.broadcast %c124_i32_327 : i32 to vector<32x128xi32>
    %685 = arith.cmpi slt, %1, %684 : vector<32x128xi32>
    %cst_328 = arith.constant 0.000000e+00 : f32
    %686 = vector.broadcast %cst_328 : f32 to vector<32x128xf32>
    %687 = arith.select %685, %683, %686 : vector<32x128xi1>, vector<32x128xf32>
    %688 = arith.addf %682, %687 : vector<32x128xf32>
    %c120_i32_329 = arith.constant 120 : i32
    %689 = tpu.dynamic_rotate %688 by %c120_i32_329 dim 1 : vector<32x128xf32>, i32 -> vector<32x128xf32>
    %c120_i32_330 = arith.constant 120 : i32
    %690 = vector.broadcast %c120_i32_330 : i32 to vector<32x128xi32>
    %691 = arith.cmpi slt, %1, %690 : vector<32x128xi32>
    %cst_331 = arith.constant 0.000000e+00 : f32
    %692 = vector.broadcast %cst_331 : f32 to vector<32x128xf32>
    %693 = arith.select %691, %689, %692 : vector<32x128xi1>, vector<32x128xf32>
    %694 = arith.addf %688, %693 : vector<32x128xf32>
    %c15_i32_332 = arith.constant 15 : i32
    %695 = tpu.dynamic_rotate %694 by %c15_i32_332 dim 1 : vector<32x128xf32>, i32 -> vector<32x128xf32>
    %c15_i32_333 = arith.constant 15 : i32
    %696 = vector.broadcast %c15_i32_333 : i32 to vector<32x128xi32>
    %697 = arith.cmpi sge, %1, %696 : vector<32x128xi32>
    %cst_334 = arith.constant 0.000000e+00 : f32
    %698 = vector.broadcast %cst_334 : f32 to vector<32x128xf32>
    %699 = arith.select %697, %695, %698 : vector<32x128xi1>, vector<32x128xf32>
    %c127_i32_335 = arith.constant 127 : i32
    %700 = tpu.dynamic_rotate %688 by %c127_i32_335 dim 1 : vector<32x128xf32>, i32 -> vector<32x128xf32>
    %c127_i32_336 = arith.constant 127 : i32
    %701 = vector.broadcast %c127_i32_336 : i32 to vector<32x128xi32>
    %702 = arith.cmpi slt, %1, %701 : vector<32x128xi32>
    %cst_337 = arith.constant 0.000000e+00 : f32
    %703 = vector.broadcast %cst_337 : f32 to vector<32x128xf32>
    %704 = arith.select %702, %700, %703 : vector<32x128xi1>, vector<32x128xf32>
    %705 = arith.addf %699, %704 : vector<32x128xf32>
    %c119_i32_338 = arith.constant 119 : i32
    %706 = tpu.dynamic_rotate %682 by %c119_i32_338 dim 1 : vector<32x128xf32>, i32 -> vector<32x128xf32>
    %c119_i32_339 = arith.constant 119 : i32
    %707 = vector.broadcast %c119_i32_339 : i32 to vector<32x128xi32>
    %708 = arith.cmpi slt, %1, %707 : vector<32x128xi32>
    %cst_340 = arith.constant 0.000000e+00 : f32
    %709 = vector.broadcast %cst_340 : f32 to vector<32x128xf32>
    %710 = arith.select %708, %706, %709 : vector<32x128xi1>, vector<32x128xf32>
    %711 = arith.addf %705, %710 : vector<32x128xf32>
    %c115_i32_341 = arith.constant 115 : i32
    %712 = tpu.dynamic_rotate %676 by %c115_i32_341 dim 1 : vector<32x128xf32>, i32 -> vector<32x128xf32>
    %c115_i32_342 = arith.constant 115 : i32
    %713 = vector.broadcast %c115_i32_342 : i32 to vector<32x128xi32>
    %714 = arith.cmpi slt, %1, %713 : vector<32x128xi32>
    %cst_343 = arith.constant 0.000000e+00 : f32
    %715 = vector.broadcast %cst_343 : f32 to vector<32x128xf32>
    %716 = arith.select %714, %712, %715 : vector<32x128xi1>, vector<32x128xf32>
    %717 = arith.addf %711, %716 : vector<32x128xf32>
    %c113_i32_344 = arith.constant 113 : i32
    %718 = tpu.dynamic_rotate %562 by %c113_i32_344 dim 1 : vector<32x128xf32>, i32 -> vector<32x128xf32>
    %c113_i32_345 = arith.constant 113 : i32
    %719 = vector.broadcast %c113_i32_345 : i32 to vector<32x128xi32>
    %720 = arith.cmpi slt, %1, %719 : vector<32x128xi32>
    %cst_346 = arith.constant 0.000000e+00 : f32
    %721 = vector.broadcast %cst_346 : f32 to vector<32x128xf32>
    %722 = arith.select %720, %718, %721 : vector<32x128xi1>, vector<32x128xf32>
    %723 = arith.addf %717, %722 : vector<32x128xf32>
    %c31_i32_347 = arith.constant 31 : i32
    %724 = tpu.dynamic_rotate %723 by %c31_i32_347 dim 0 : vector<32x128xf32>, i32 -> vector<32x128xf32>
    %c31_i32_348 = arith.constant 31 : i32
    %725 = vector.broadcast %c31_i32_348 : i32 to vector<32x128xi32>
    %726 = arith.cmpi slt, %0, %725 : vector<32x128xi32>
    %cst_349 = arith.constant 0.000000e+00 : f32
    %727 = vector.broadcast %cst_349 : f32 to vector<32x128xf32>
    %728 = arith.select %726, %724, %727 : vector<32x128xi1>, vector<32x128xf32>
    %729 = arith.addf %723, %728 : vector<32x128xf32>
    %c30_i32_350 = arith.constant 30 : i32
    %730 = tpu.dynamic_rotate %729 by %c30_i32_350 dim 0 : vector<32x128xf32>, i32 -> vector<32x128xf32>
    %c30_i32_351 = arith.constant 30 : i32
    %731 = vector.broadcast %c30_i32_351 : i32 to vector<32x128xi32>
    %732 = arith.cmpi slt, %0, %731 : vector<32x128xi32>
    %cst_352 = arith.constant 0.000000e+00 : f32
    %733 = vector.broadcast %cst_352 : f32 to vector<32x128xf32>
    %734 = arith.select %732, %730, %733 : vector<32x128xi1>, vector<32x128xf32>
    %735 = arith.addf %729, %734 : vector<32x128xf32>
    %c28_i32_353 = arith.constant 28 : i32
    %736 = tpu.dynamic_rotate %735 by %c28_i32_353 dim 0 : vector<32x128xf32>, i32 -> vector<32x128xf32>
    %c28_i32_354 = arith.constant 28 : i32
    %737 = vector.broadcast %c28_i32_354 : i32 to vector<32x128xi32>
    %738 = arith.cmpi slt, %0, %737 : vector<32x128xi32>
    %cst_355 = arith.constant 0.000000e+00 : f32
    %739 = vector.broadcast %cst_355 : f32 to vector<32x128xf32>
    %740 = arith.select %738, %736, %739 : vector<32x128xi1>, vector<32x128xf32>
    %741 = arith.addf %735, %740 : vector<32x128xf32>
    %c24_i32_356 = arith.constant 24 : i32
    %742 = tpu.dynamic_rotate %741 by %c24_i32_356 dim 0 : vector<32x128xf32>, i32 -> vector<32x128xf32>
    %c24_i32_357 = arith.constant 24 : i32
    %743 = vector.broadcast %c24_i32_357 : i32 to vector<32x128xi32>
    %744 = arith.cmpi slt, %0, %743 : vector<32x128xi32>
    %cst_358 = arith.constant 0.000000e+00 : f32
    %745 = vector.broadcast %cst_358 : f32 to vector<32x128xf32>
    %746 = arith.select %744, %742, %745 : vector<32x128xi1>, vector<32x128xf32>
    %747 = arith.addf %741, %746 : vector<32x128xf32>
    %c15_i32_359 = arith.constant 15 : i32
    %748 = tpu.dynamic_rotate %747 by %c15_i32_359 dim 0 : vector<32x128xf32>, i32 -> vector<32x128xf32>
    %c15_i32_360 = arith.constant 15 : i32
    %749 = vector.broadcast %c15_i32_360 : i32 to vector<32x128xi32>
    %750 = arith.cmpi sge, %0, %749 : vector<32x128xi32>
    %cst_361 = arith.constant 0.000000e+00 : f32
    %751 = vector.broadcast %cst_361 : f32 to vector<32x128xf32>
    %752 = arith.select %750, %748, %751 : vector<32x128xi1>, vector<32x128xf32>
    %c31_i32_362 = arith.constant 31 : i32
    %753 = tpu.dynamic_rotate %741 by %c31_i32_362 dim 0 : vector<32x128xf32>, i32 -> vector<32x128xf32>
    %c31_i32_363 = arith.constant 31 : i32
    %754 = vector.broadcast %c31_i32_363 : i32 to vector<32x128xi32>
    %755 = arith.cmpi slt, %0, %754 : vector<32x128xi32>
    %cst_364 = arith.constant 0.000000e+00 : f32
    %756 = vector.broadcast %cst_364 : f32 to vector<32x128xf32>
    %757 = arith.select %755, %753, %756 : vector<32x128xi1>, vector<32x128xf32>
    %758 = arith.addf %752, %757 : vector<32x128xf32>
    %c23_i32_365 = arith.constant 23 : i32
    %759 = tpu.dynamic_rotate %735 by %c23_i32_365 dim 0 : vector<32x128xf32>, i32 -> vector<32x128xf32>
    %c23_i32_366 = arith.constant 23 : i32
    %760 = vector.broadcast %c23_i32_366 : i32 to vector<32x128xi32>
    %761 = arith.cmpi slt, %0, %760 : vector<32x128xi32>
    %cst_367 = arith.constant 0.000000e+00 : f32
    %762 = vector.broadcast %cst_367 : f32 to vector<32x128xf32>
    %763 = arith.select %761, %759, %762 : vector<32x128xi1>, vector<32x128xf32>
    %764 = arith.addf %758, %763 : vector<32x128xf32>
    %c19_i32_368 = arith.constant 19 : i32
    %765 = tpu.dynamic_rotate %729 by %c19_i32_368 dim 0 : vector<32x128xf32>, i32 -> vector<32x128xf32>
    %c19_i32_369 = arith.constant 19 : i32
    %766 = vector.broadcast %c19_i32_369 : i32 to vector<32x128xi32>
    %767 = arith.cmpi slt, %0, %766 : vector<32x128xi32>
    %cst_370 = arith.constant 0.000000e+00 : f32
    %768 = vector.broadcast %cst_370 : f32 to vector<32x128xf32>
    %769 = arith.select %767, %765, %768 : vector<32x128xi1>, vector<32x128xf32>
    %770 = arith.addf %764, %769 : vector<32x128xf32>
    %c17_i32_371 = arith.constant 17 : i32
    %771 = tpu.dynamic_rotate %723 by %c17_i32_371 dim 0 : vector<32x128xf32>, i32 -> vector<32x128xf32>
    %c17_i32_372 = arith.constant 17 : i32
    %772 = vector.broadcast %c17_i32_372 : i32 to vector<32x128xi32>
    %773 = arith.cmpi slt, %0, %772 : vector<32x128xi32>
    %cst_373 = arith.constant 0.000000e+00 : f32
    %774 = vector.broadcast %cst_373 : f32 to vector<32x128xf32>
    %775 = arith.select %773, %771, %774 : vector<32x128xi1>, vector<32x128xf32>
    %776 = arith.addf %770, %775 : vector<32x128xf32>
    %777 = arith.mulf %776, %24 : vector<32x128xf32>
    %778 = arith.addf %670, %777 : vector<32x128xf32>
    %c0_374 = arith.constant 0 : index
    %c0_375 = arith.constant 0 : index
    %c0_376 = arith.constant 0 : index
    %c0_377 = arith.constant 0 : index
    %779 = vector.load %arg4[%c0_374, %c0_375, %c0_376, %c0_377] : memref<1x1x32x128xf32, #tpu.memory_space<vmem>>, vector<1x1x32x128xf32>
    %780 = vector.shape_cast %779 : vector<1x1x32x128xf32> to vector<32x128xf32>
    %781 = vector.shape_cast %778 : vector<32x128xf32> to vector<1x1x32x128xf32>
    tpu.vector_store %arg4[%c0_374, %c0_375, %c0_376, %c0_377], %781 {strides = array<i32>} : memref<1x1x32x128xf32, #tpu.memory_space<vmem>>, vector<1x1x32x128xf32>,
    %782 = tpu.reciprocal %778 : vector<32x128xf32> -> vector<32x128xf32>
    %cst_378 = arith.constant 0.000000e+00 : f32
    %783 = vector.broadcast %cst_378 : f32 to vector<32x128xf32>
    %784 = arith.index_cast %arg0 : i32 to index
    %c0_379 = arith.constant 0 : index
    %785 = memref.load %arg1[%784, %c0_379] : memref<2x3xf32, #tpu.memory_space<smem>>
    %c0_380 = arith.constant 0 : index
    %c0_381 = arith.constant 0 : index
    %c0_382 = arith.constant 0 : index
    %c0_383 = arith.constant 0 : index
    %786 = vector.load %arg2[%c0_380, %c0_381, %c0_382, %c0_383] : memref<1x3x32x128xf32, #tpu.memory_space<vmem>>, vector<1x1x32x128xf32>
    %787 = vector.shape_cast %786 : vector<1x1x32x128xf32> to vector<32x128xf32>
    %cst_384 = arith.constant 5.000000e-01 : f32
    %788 = vector.broadcast %cst_384 : f32 to vector<32x128xf32>
    %789 = arith.mulf %787, %788 : vector<32x128xf32>
    %cst_385 = arith.constant 5.000000e-01 : f32
    %790 = arith.subf %cst_385, %785 : f32
    %791 = vector.broadcast %790 : f32 to vector<32x128xf32>
    %792 = arith.addf %789, %791 : vector<32x128xf32>
    %793 = arith.mulf %792, %782 : vector<32x128xf32>
    %794 = vector.broadcast %785 : f32 to vector<32x128xf32>
    %795 = arith.addf %793, %794 : vector<32x128xf32>
    %c0_386 = arith.constant 0 : index
    %c0_387 = arith.constant 0 : index
    %c0_388 = arith.constant 0 : index
    %c0_389 = arith.constant 0 : index
    %796 = vector.load %arg3[%c0_386, %c0_387, %c0_388, %c0_389] : memref<1x3x32x128xf32, #tpu.memory_space<vmem>>, vector<1x1x32x128xf32>
    %797 = vector.shape_cast %796 : vector<1x1x32x128xf32> to vector<32x128xf32>
    %798 = vector.shape_cast %795 : vector<32x128xf32> to vector<1x1x32x128xf32>
    tpu.vector_store %arg3[%c0_386, %c0_387, %c0_388, %c0_389], %798 {strides = array<i32>} : memref<1x3x32x128xf32, #tpu.memory_space<vmem>>, vector<1x1x32x128xf32>,
    %799 = vector.broadcast %785 : f32 to vector<32x128xf32>
    %800 = arith.addf %783, %799 : vector<32x128xf32>
    %c0_390 = arith.constant 0 : index
    %c0_391 = arith.constant 0 : index
    %c0_392 = arith.constant 0 : index
    %c0_393 = arith.constant 0 : index
    %801 = vector.load %arg5[%c0_390, %c0_391, %c0_392, %c0_393] : memref<1x3x32x128xf32, #tpu.memory_space<vmem>>, vector<1x1x32x128xf32>
    %802 = vector.shape_cast %801 : vector<1x1x32x128xf32> to vector<32x128xf32>
    %803 = vector.shape_cast %800 : vector<32x128xf32> to vector<1x1x32x128xf32>
    tpu.vector_store %arg5[%c0_390, %c0_391, %c0_392, %c0_393], %803 {strides = array<i32>} : memref<1x3x32x128xf32, #tpu.memory_space<vmem>>, vector<1x1x32x128xf32>,
    %804 = arith.index_cast %arg0 : i32 to index
    %c1_394 = arith.constant 1 : index
    %805 = memref.load %arg1[%804, %c1_394] : memref<2x3xf32, #tpu.memory_space<smem>>
    %c0_395 = arith.constant 0 : index
    %c1_396 = arith.constant 1 : index
    %c0_397 = arith.constant 0 : index
    %c0_398 = arith.constant 0 : index
    %806 = vector.load %arg2[%c0_395, %c1_396, %c0_397, %c0_398] : memref<1x3x32x128xf32, #tpu.memory_space<vmem>>, vector<1x1x32x128xf32>
    %807 = vector.shape_cast %806 : vector<1x1x32x128xf32> to vector<32x128xf32>
    %cst_399 = arith.constant 5.000000e-01 : f32
    %808 = vector.broadcast %cst_399 : f32 to vector<32x128xf32>
    %809 = arith.mulf %807, %808 : vector<32x128xf32>
    %cst_400 = arith.constant 5.000000e-01 : f32
    %810 = arith.subf %cst_400, %805 : f32
    %811 = vector.broadcast %810 : f32 to vector<32x128xf32>
    %812 = arith.addf %809, %811 : vector<32x128xf32>
    %813 = arith.mulf %812, %782 : vector<32x128xf32>
    %814 = vector.broadcast %805 : f32 to vector<32x128xf32>
    %815 = arith.addf %813, %814 : vector<32x128xf32>
    %c0_401 = arith.constant 0 : index
    %c1_402 = arith.constant 1 : index
    %c0_403 = arith.constant 0 : index
    %c0_404 = arith.constant 0 : index
    %816 = vector.load %arg3[%c0_401, %c1_402, %c0_403, %c0_404] : memref<1x3x32x128xf32, #tpu.memory_space<vmem>>, vector<1x1x32x128xf32>
    %817 = vector.shape_cast %816 : vector<1x1x32x128xf32> to vector<32x128xf32>
    %818 = vector.shape_cast %815 : vector<32x128xf32> to vector<1x1x32x128xf32>
    tpu.vector_store %arg3[%c0_401, %c1_402, %c0_403, %c0_404], %818 {strides = array<i32>} : memref<1x3x32x128xf32, #tpu.memory_space<vmem>>, vector<1x1x32x128xf32>,
    %819 = vector.broadcast %805 : f32 to vector<32x128xf32>
    %820 = arith.addf %783, %819 : vector<32x128xf32>
    %c0_405 = arith.constant 0 : index
    %c1_406 = arith.constant 1 : index
    %c0_407 = arith.constant 0 : index
    %c0_408 = arith.constant 0 : index
    %821 = vector.load %arg5[%c0_405, %c1_406, %c0_407, %c0_408] : memref<1x3x32x128xf32, #tpu.memory_space<vmem>>, vector<1x1x32x128xf32>
    %822 = vector.shape_cast %821 : vector<1x1x32x128xf32> to vector<32x128xf32>
    %823 = vector.shape_cast %820 : vector<32x128xf32> to vector<1x1x32x128xf32>
    tpu.vector_store %arg5[%c0_405, %c1_406, %c0_407, %c0_408], %823 {strides = array<i32>} : memref<1x3x32x128xf32, #tpu.memory_space<vmem>>, vector<1x1x32x128xf32>,
    %824 = arith.index_cast %arg0 : i32 to index
    %c2_409 = arith.constant 2 : index
    %825 = memref.load %arg1[%824, %c2_409] : memref<2x3xf32, #tpu.memory_space<smem>>
    %c0_410 = arith.constant 0 : index
    %c2_411 = arith.constant 2 : index
    %c0_412 = arith.constant 0 : index
    %c0_413 = arith.constant 0 : index
    %826 = vector.load %arg2[%c0_410, %c2_411, %c0_412, %c0_413] : memref<1x3x32x128xf32, #tpu.memory_space<vmem>>, vector<1x1x32x128xf32>
    %827 = vector.shape_cast %826 : vector<1x1x32x128xf32> to vector<32x128xf32>
    %cst_414 = arith.constant 5.000000e-01 : f32
    %828 = vector.broadcast %cst_414 : f32 to vector<32x128xf32>
    %829 = arith.mulf %827, %828 : vector<32x128xf32>
    %cst_415 = arith.constant 5.000000e-01 : f32
    %830 = arith.subf %cst_415, %825 : f32
    %831 = vector.broadcast %830 : f32 to vector<32x128xf32>
    %832 = arith.addf %829, %831 : vector<32x128xf32>
    %833 = arith.mulf %832, %782 : vector<32x128xf32>
    %834 = vector.broadcast %825 : f32 to vector<32x128xf32>
    %835 = arith.addf %833, %834 : vector<32x128xf32>
    %c0_416 = arith.constant 0 : index
    %c2_417 = arith.constant 2 : index
    %c0_418 = arith.constant 0 : index
    %c0_419 = arith.constant 0 : index
    %836 = vector.load %arg3[%c0_416, %c2_417, %c0_418, %c0_419] : memref<1x3x32x128xf32, #tpu.memory_space<vmem>>, vector<1x1x32x128xf32>
    %837 = vector.shape_cast %836 : vector<1x1x32x128xf32> to vector<32x128xf32>
    %838 = vector.shape_cast %835 : vector<32x128xf32> to vector<1x1x32x128xf32>
    tpu.vector_store %arg3[%c0_416, %c2_417, %c0_418, %c0_419], %838 {strides = array<i32>} : memref<1x3x32x128xf32, #tpu.memory_space<vmem>>, vector<1x1x32x128xf32>,
    %839 = vector.broadcast %825 : f32 to vector<32x128xf32>
    %840 = arith.addf %783, %839 : vector<32x128xf32>
    %c0_420 = arith.constant 0 : index
    %c2_421 = arith.constant 2 : index
    %c0_422 = arith.constant 0 : index
    %c0_423 = arith.constant 0 : index
    %841 = vector.load %arg5[%c0_420, %c2_421, %c0_422, %c0_423] : memref<1x3x32x128xf32, #tpu.memory_space<vmem>>, vector<1x1x32x128xf32>
    %842 = vector.shape_cast %841 : vector<1x1x32x128xf32> to vector<32x128xf32>
    %843 = vector.shape_cast %840 : vector<32x128xf32> to vector<1x1x32x128xf32>
    tpu.vector_store %arg5[%c0_420, %c2_421, %c0_422, %c0_423], %843 {strides = array<i32>} : memref<1x3x32x128xf32, #tpu.memory_space<vmem>>, vector<1x1x32x128xf32>,
    return
  }
  func.func @transform_0(%arg0: i32, %arg1: memref<2x3xf32, #tpu.memory_space<smem>>) -> (i32, i32, i32, i32) {
    %c0_i32 = arith.constant 0 : i32
    %c0_i32_0 = arith.constant 0 : i32
    %c0_i32_1 = arith.constant 0 : i32
    %c0_i32_2 = arith.constant 0 : i32
    return %arg0, %c0_i32, %c0_i32_0, %c0_i32_1 : i32, i32, i32, i32
  }
  func.func @transform_1(%arg0: i32, %arg1: memref<2x3xf32, #tpu.memory_space<smem>>) -> (i32, i32, i32, i32) {
    %c0_i32 = arith.constant 0 : i32
    %c0_i32_0 = arith.constant 0 : i32
    %c0_i32_1 = arith.constant 0 : i32
    %c0_i32_2 = arith.constant 0 : i32
    return %arg0, %c0_i32, %c0_i32_0, %c0_i32_1 : i32, i32, i32, i32
  }
  func.func @transform_2(%arg0: i32, %arg1: memref<2x3xf32, #tpu.memory_space<smem>>) -> (i32, i32, i32, i32) {
    %c0_i32 = arith.constant 0 : i32
    %c0_i32_0 = arith.constant 0 : i32
    %c0_i32_1 = arith.constant 0 : i32
    %c0_i32_2 = arith.constant 0 : i32
    return %arg0, %c0_i32, %c0_i32_0, %c0_i32_1 : i32, i32, i32, i32
  }
  func.func @transform_3(%arg0: i32, %arg1: memref<2x3xf32, #tpu.memory_space<smem>>) -> (i32, i32, i32, i32) {
    %c0_i32 = arith.constant 0 : i32
    %c0_i32_0 = arith.constant 0 : i32
    %c0_i32_1 = arith.constant 0 : i32
    %c0_i32_2 = arith.constant 0 : i32
    return %arg0, %c0_i32, %c0_i32_0, %c0_i32_1 : i32, i32, i32, i32
  }
}

</mosaic_0001>

<llo_original>
// kernel: dcp_dehaze_forward.2
$region0: #{dcp_dehaze_forward.2}
  #allocation0 [shape = 'u32[]', space=smem, size = 0x4, offset = 0x4, fixed_abs, tag = 'smem constant byte address 0x4 - core index']
  #allocation1 [shape = 'u32[144,128]{1,0:T(1,128)}', space=vmem, size = 0x12000, scoped, tag = 'internal scratch']
  %s0 = inlined_call_operand.hbm [shape: f32[2,3,32,128], index: 0, kind: input, shape index: {}]
  %s1 = inlined_call_operand.vmem [shape: f32[2,1,32,128], index: 1, kind: output, shape index: {}]
  %s2 = sld [smem:[#allocation0]]
  $region41: #{dcp_dehaze_forward.2} parent=0
    _
  %s4 = ssub.s32 1, %s2
  %s5 = scalar_select 0, %s4, %s2
  $region1: #{dcp_dehaze_forward.2} parent=0
    #allocation2 [shape = 'u8[98304]{0}', space=vmem, size = 0x18000, scoped, tag = 'input window, operand 0']
    #allocation3 [shape = 's32[2]{0}', space=sflag, size = 0x8, scoped, tag = 'scoped memory for dcp_dehaze_forward.2']
    %6 = vsyncpa [#allocation3], 0
    %s7 = scalar_lea.sflag [#allocation3], 1
    %8 = vsyncpa %s7, 0
    loop: start=0, step=1, limit=4
    $region2: #{dcp_dehaze_forward.2} parent=1 // loop_pre_header
      _
    $region3: #{dcp_dehaze_forward.2} parent=1 // loop_header
      %s10 = sphi 0, %s14
      %p11 = scmp.ge.s32.totalorder %s10, 4
      %s20 = sphi 0, %s22
      %s23 = sphi 0, %s20
      %s24 = sphi 0, %s23
      %s40 = sphi 0, %s24
      %s46 = sphi 0, %s48
      %s49 = sphi 0, %s46
      %s50 = sphi 0, %s49
      %s66 = sphi 0, %s50
    $region4: #{dcp_dehaze_forward.2} parent=1 // loop_header_branch
      %13 = sbr.rel (%p11) target = $region8
    $region5: #{dcp_dehaze_forward.2} parent=1 // loop_body
      %s15 = ssub.s32 %s10, 1
      %s16 = ssub.s32 %s10, 2
      %s17 = sadd.s32 %s10, 1
      %s18 = ssub.s32 %s10, %s17
      %p19 = scmp.eq.s32.totalorder %s18, 0
      %s21 = sadd.s32 %s20, 1
      %s22 = scalar_select %p19, %s20, %s21
      %p25 = pneg %p19
      %p26 = scmp.eq.s32.totalorder %s10, 1
      %p27 = por %p25, %p26
      %p28 = scmp.ne.s32.totalorder %s20, %s23
      %p29 = scmp.eq.s32.totalorder %s10, 0
      %p30 = por %p28, %p29
      %p31 = scmp.ne.s32.totalorder %s20, %s23
      %p32 = scmp.eq.s32.totalorder %s15, 1
      %p33 = por %p31, %p32
      %p34 = scmp.ne.s32.totalorder %s23, %s24
      %p35 = scmp.eq.s32.totalorder %s15, 0
      %p36 = por %p34, %p35
      %p37 = scmp.ne.s32.totalorder %s23, %s24
      %p38 = scmp.eq.s32.totalorder %s16, 1
      %p39 = por %p37, %p38
      %p41 = scmp.ne.s32.totalorder %s24, %s40
      %p42 = scmp.eq.s32.totalorder %s16, 0
      %p43 = por %p41, %p42
      %s44 = ssub.s32 %s10, %s17
      %p45 = scmp.eq.s32.totalorder %s44, 0
      %s47 = sadd.s32 %s46, 1
      %s48 = scalar_select %p45, %s46, %s47
      %p51 = pneg %p45
      %p52 = scmp.eq.s32.totalorder %s10, 1
      %p53 = por %p51, %p52
      %p54 = scmp.ne.s32.totalorder %s46, %s49
      %p55 = scmp.eq.s32.totalorder %s10, 0
      %p56 = por %p54, %p55
      %p57 = scmp.ne.s32.totalorder %s46, %s49
      %p58 = scmp.eq.s32.totalorder %s15, 1
      %p59 = por %p57, %p58
      %p60 = scmp.ne.s32.totalorder %s49, %s50
      %p61 = scmp.eq.s32.totalorder %s15, 0
      %p62 = por %p60, %p61
      %p63 = scmp.ne.s32.totalorder %s49, %s50
      %p64 = scmp.eq.s32.totalorder %s16, 1
      %p65 = por %p63, %p64
      %p67 = scmp.ne.s32.totalorder %s50, %s66
      %p68 = scmp.eq.s32.totalorder %s16, 0
      %p69 = por %p67, %p68
      %p70 = scmp.le.s32.totalorder 1, %s10
      %p71 = scmp.lt.s32.totalorder %s10, 3
      %p72 = pnand %p70, %p71
      %p73 = pneg %p72
      // Predicated region
      $region9: #{dcp_dehaze_forward.2} parent=5 // pred_check
        _
      $region10: #{dcp_dehaze_forward.2} parent=5 // pred_check_branch
        %75 = sbr.rel (%p72) target = $region12
      $region11: #{dcp_dehaze_forward.2} parent=5 // pred_region
        %s76 = ssub.s32 %s10, 1
      $region12: #{dcp_dehaze_forward.2} parent=5 // pred_fallthru
        _
      %p77 = scmp.lt.s32.totalorder %s10, 2
      // Predicated region
      $region13: #{dcp_dehaze_forward.2} parent=5 // pred_check
        %p78 = pneg %p77
      $region14: #{dcp_dehaze_forward.2} parent=5 // pred_check_branch
        %80 = sbr.rel (%p78) target = $region16
      $region15: #{dcp_dehaze_forward.2} parent=5 // pred_region
        // Predicated region
        $region17: #{dcp_dehaze_forward.2} parent=15 // pred_check
          %p81 = pneg %p30
        $region18: #{dcp_dehaze_forward.2} parent=15 // pred_check_branch
          %83 = sbr.rel (%p81) target = $region20
        $region19: #{dcp_dehaze_forward.2} parent=15 // pred_region
          %s84 = sand.u32 %s20, 1
          %s85 = scalar_lea.sflag [#allocation3], %s84
          %s86 = sand.u32 %s20, 1
          %s87 = smul.addr %s86, 96
          %s88 = scalar_lea.vmem [#allocation2], %s87
          %s90 = ssub.s32 1536, 1536
          %91 = vsyncadd %s85, %s90
          %s92 = smul.addr %s10, 12
          %s93 = smul.addr %s92, 128
          %s94 = scalar_lea.hbm %s0, %s93
          %s95 = sshll.u32 %s88, 4
          %s96 = int_to_ptr.vmem [resolvable:$true] %s95
          %101 = dma.hbm_to_vmem [thread:$0]  %s94, 1536, %s96, %s85, 128, 128, 8
        $region20: #{dcp_dehaze_forward.2} parent=15 // pred_fallthru
          _
      $region16: #{dcp_dehaze_forward.2} parent=5 // pred_fallthru
        _
      %p102 = scmp.le.s32.totalorder 1, %s10
      %p103 = scmp.lt.s32.totalorder %s10, 3
      %p104 = pnand %p102, %p103
      %p105 = pneg %p104
      // Predicated region
      $region21: #{dcp_dehaze_forward.2} parent=5 // pred_check
        _
      $region22: #{dcp_dehaze_forward.2} parent=5 // pred_check_branch
        %107 = sbr.rel (%p104) target = $region24
      $region23: #{dcp_dehaze_forward.2} parent=5 // pred_region
        %s108 = ssub.s32 %s10, 1
        %s109 = sand.u32 %s23, 1
        %s110 = scalar_lea.sflag [#allocation3], %s109
        %s111 = sand.u32 %s23, 1
        %s112 = smul.addr %s111, 96
        %s113 = scalar_lea.vmem [#allocation2], %s112
        // Predicated region
        $region25: #{dcp_dehaze_forward.2} parent=23 // pred_check
          %p114 = pneg %p36
        $region26: #{dcp_dehaze_forward.2} parent=23 // pred_check_branch
          %116 = sbr.rel (%p114) target = $region28
        $region27: #{dcp_dehaze_forward.2} parent=23 // pred_region
          %117 = dma.done %s110, 1536
        $region28: #{dcp_dehaze_forward.2} parent=23 // pred_fallthru
          _
        %s118 = sand.u32 %s23, 1
        %s119 = scalar_lea.sflag [#allocation3], %s118
        %s120 = sand.u32 %s23, 1
        %s121 = smul.addr %s120, 96
        %s122 = scalar_lea.vmem [#allocation2], %s121
        %p123 = pneg %p36
        %p124 = pneg %p33
        %p125 = pneg %p62
        %p126 = pneg %p59
        %p127 = scmp.lt.s32.totalorder %s15, 1
        %s128 = scalar_select %p127, %s15, 1
        %s129 = smul.addr %s128, 4
        %s130 = smul.addr %s129, 8
        %s131 = scalar_lea.vmem %s1, %s130
        %p132 = scmp.lt.s32.totalorder %s15, 1
        %s133 = scalar_select %p132, %s15, 1
        %s134 = smul.addr %s133, 4
        %s135 = smul.addr %s134, 8
        %s136 = scalar_lea.vmem %s1, %s135
        %v137 = vlaneseq
        %v138 = vshrl.u32 %v137, 7
        %v139 = vadd.s32 %v138, 8
        %v140 = vadd.s32 %v138, 16
        %v141 = vadd.s32 %v138, 24
        %v142 = vlaneseq
        %v143 = vand.u32 %v142, 127
        %v144 = vld [vmem:[%s113] sm:$0xff]
        %v145 = vld [vmem:[%s113 + $0x8] sm:$0xff]
        %v146 = vld [vmem:[%s113 + $0x10] sm:$0xff]
        %v147 = vld [vmem:[%s113 + $0x18] sm:$0xff]
        %s148 = scalar_lea.vmem %s113, 32 [#allocation2]
        %v149 = vld [vmem:[%s148] sm:$0xff]
        %v150 = vld [vmem:[%s148 + $0x8] sm:$0xff]
        %v151 = vld [vmem:[%s148 + $0x10] sm:$0xff]
        %v152 = vld [vmem:[%s148 + $0x18] sm:$0xff]
        %v153 = vmin.f32 %v144, %v149
        %v154 = vmin.f32 %v145, %v150
        %v155 = vmin.f32 %v146, %v151
        %v156 = vmin.f32 %v147, %v152
        %s157 = scalar_lea.vmem %s113, 64 [#allocation2]
        %v158 = vld [vmem:[%s157] sm:$0xff]
        %v159 = vld [vmem:[%s157 + $0x8] sm:$0xff]
        %v160 = vld [vmem:[%s157 + $0x10] sm:$0xff]
        %v161 = vld [vmem:[%s157 + $0x18] sm:$0xff]
        %v162 = vmin.f32 %v153, %v158
        %v163 = vmin.f32 %v154, %v159
        %v164 = vmin.f32 %v155, %v160
        %v165 = vmin.f32 %v156, %v161
        %v166 = vmul.f32 %v162, 0.5
        %v167 = vmul.f32 %v163, 0.5
        %v168 = vmul.f32 %v164, 0.5
        %v169 = vmul.f32 %v165, 0.5
        %v170 = vadd.f32 %v166, 0.5
        %v171 = vadd.f32 %v167, 0.5
        %v172 = vadd.f32 %v168, 0.5
        %v173 = vadd.f32 %v169, 0.5
        %174 = vrot.lane.b32.xlu0 %v170, 2
        %v175 = vpop.permute.xlu0 %174
        %176 = vrot.lane.b32.xlu0 %v171, 2
        %v177 = vpop.permute.xlu0 %176
        %178 = vrot.lane.b32.xlu0 %v172, 2
        %v179 = vpop.permute.xlu0 %178
        %180 = vrot.lane.b32.xlu0 %v173, 2
        %v181 = vpop.permute.xlu0 %180
        %vm182 = vcmp.ge.s32.totalorder %v143, 2
        %v183 = vsel %vm182, %v175, 1.0
        %v184 = vsel %vm182, %v177, 1.0
        %v185 = vsel %vm182, %v179, 1.0
        %v186 = vsel %vm182, %v181, 1.0
        %187 = vrot.lane.b32.xlu0 %v170, 1
        %v188 = vpop.permute.xlu0 %187
        %189 = vrot.lane.b32.xlu0 %v171, 1
        %v190 = vpop.permute.xlu0 %189
        %191 = vrot.lane.b32.xlu0 %v172, 1
        %v192 = vpop.permute.xlu0 %191
        %193 = vrot.lane.b32.xlu0 %v173, 1
        %v194 = vpop.permute.xlu0 %193
        %vm195 = vcmp.ge.s32.totalorder %v143, 1
        %v196 = vsel %vm195, %v188, 1.0
        %v197 = vsel %vm195, %v190, 1.0
        %v198 = vsel %vm195, %v192, 1.0
        %v199 = vsel %vm195, %v194, 1.0
        %v200 = vmin.f32 %v183, %v196
        %v201 = vmin.f32 %v184, %v197
        %v202 = vmin.f32 %v185, %v198
        %v203 = vmin.f32 %v186, %v199
        %v204 = vmin.f32 %v200, %v170
        %v205 = vmin.f32 %v201, %v171
        %v206 = vmin.f32 %v202, %v172
        %v207 = vmin.f32 %v203, %v173
        %208 = vrot.lane.b32.xlu0 %v170, 127
        %v209 = vpop.permute.xlu0 %208
        %210 = vrot.lane.b32.xlu0 %v171, 127
        %v211 = vpop.permute.xlu0 %210
        %212 = vrot.lane.b32.xlu0 %v172, 127
        %v213 = vpop.permute.xlu0 %212
        %214 = vrot.lane.b32.xlu0 %v173, 127
        %v215 = vpop.permute.xlu0 %214
        %vm216 = vcmp.lt.s32.totalorder %v143, 127
        %v217 = vsel %vm216, %v209, 1.0
        %v218 = vsel %vm216, %v211, 1.0
        %v219 = vsel %vm216, %v213, 1.0
        %v220 = vsel %vm216, %v215, 1.0
        %v221 = vmin.f32 %v204, %v217
        %v222 = vmin.f32 %v205, %v218
        %v223 = vmin.f32 %v206, %v219
        %v224 = vmin.f32 %v207, %v220
        %225 = vrot.lane.b32.xlu0 %v170, 126
        %v226 = vpop.permute.xlu0 %225
        %227 = vrot.lane.b32.xlu0 %v171, 126
        %v228 = vpop.permute.xlu0 %227
        %229 = vrot.lane.b32.xlu0 %v172, 126
        %v230 = vpop.permute.xlu0 %229
        %231 = vrot.lane.b32.xlu0 %v173, 126
        %v232 = vpop.permute.xlu0 %231
        %vm233 = vcmp.lt.s32.totalorder %v143, 126
        %v234 = vsel %vm233, %v226, 1.0
        %v235 = vsel %vm233, %v228, 1.0
        %v236 = vsel %vm233, %v230, 1.0
        %v237 = vsel %vm233, %v232, 1.0
        %v238 = vmin.f32 %v221, %v234
        %v239 = vmin.f32 %v222, %v235
        %v240 = vmin.f32 %v223, %v236
        %v241 = vmin.f32 %v224, %v237
        %v242 = vrot.slane %v238, 6
        %v243 = vrot.slane %v239, 6
        %v244 = vrot.slane %v240, 6
        %v245 = vrot.slane %v241, 6
        %vm246 = vcmp.lt.s32.totalorder %v138, 2
        %v247 = vsel %vm246, %v244, %v245
        %v248 = vsel %vm246, %v243, %v244
        %v249 = vsel %vm246, %v242, %v243
        %v250 = vsel %vm246, %v245, %v242
        %vm251 = vcmp.ge.s32.totalorder %v138, 2
        %vm252 = vcmp.ge.s32.totalorder %v139, 2
        %vm253 = vcmp.ge.s32.totalorder %v140, 2
        %vm254 = vcmp.ge.s32.totalorder %v141, 2
        %v255 = vsel %vm251, %v250, 1.0
        %v256 = vsel %vm252, %v249, 1.0
        %v257 = vsel %vm253, %v248, 1.0
        %v258 = vsel %vm254, %v247, 1.0
        %v259 = vrot.slane %v238, 7
        %v260 = vrot.slane %v239, 7
        %v261 = vrot.slane %v240, 7
        %v262 = vrot.slane %v241, 7
        %vm263 = vcmp.lt.s32.totalorder %v138, 1
        %v264 = vsel %vm263, %v261, %v262
        %v265 = vsel %vm263, %v260, %v261
        %v266 = vsel %vm263, %v259, %v260
        %v267 = vsel %vm263, %v262, %v259
        %vm268 = vcmp.ge.s32.totalorder %v138, 1
        %vm269 = vcmp.ge.s32.totalorder %v139, 1
        %vm270 = vcmp.ge.s32.totalorder %v140, 1
        %vm271 = vcmp.ge.s32.totalorder %v141, 1
        %v272 = vsel %vm268, %v267, 1.0
        %v273 = vsel %vm269, %v266, 1.0
        %v274 = vsel %vm270, %v265, 1.0
        %v275 = vsel %vm271, %v264, 1.0
        %v276 = vmin.f32 %v255, %v272
        %v277 = vmin.f32 %v256, %v273
        %v278 = vmin.f32 %v257, %v274
        %v279 = vmin.f32 %v258, %v275
        %v280 = vmin.f32 %v276, %v238
        %v281 = vmin.f32 %v277, %v239
        %v282 = vmin.f32 %v278, %v240
        %v283 = vmin.f32 %v279, %v241
        %v284 = vrot.slane %v238, 1
        %v285 = vrot.slane %v239, 1
        %v286 = vrot.slane %v240, 1
        %v287 = vrot.slane %v241, 1
        %vm288 = vcmp.lt.s32.totalorder %v138, 7
        %v289 = vsel %vm288, %v286, %v287
        %v290 = vsel %vm288, %v285, %v286
        %v291 = vsel %vm288, %v284, %v285
        %v292 = vsel %vm288, %v287, %v284
        %vm293 = vcmp.lt.s32.totalorder %v138, 31
        %vm294 = vcmp.lt.s32.totalorder %v139, 31
        %vm295 = vcmp.lt.s32.totalorder %v140, 31
        %vm296 = vcmp.lt.s32.totalorder %v141, 31
        %v297 = vsel %vm293, %v291, 1.0
        %v298 = vsel %vm294, %v290, 1.0
        %v299 = vsel %vm295, %v289, 1.0
        %v300 = vsel %vm296, %v292, 1.0
        %v301 = vmin.f32 %v280, %v297
        %v302 = vmin.f32 %v281, %v298
        %v303 = vmin.f32 %v282, %v299
        %v304 = vmin.f32 %v283, %v300
        %v305 = vrot.slane %v238, 2
        %v306 = vrot.slane %v239, 2
        %v307 = vrot.slane %v240, 2
        %v308 = vrot.slane %v241, 2
        %vm309 = vcmp.lt.s32.totalorder %v138, 6
        %v310 = vsel %vm309, %v307, %v308
        %v311 = vsel %vm309, %v306, %v307
        %v312 = vsel %vm309, %v305, %v306
        %v313 = vsel %vm309, %v308, %v305
        %vm314 = vcmp.lt.s32.totalorder %v138, 30
        %vm315 = vcmp.lt.s32.totalorder %v139, 30
        %vm316 = vcmp.lt.s32.totalorder %v140, 30
        %vm317 = vcmp.lt.s32.totalorder %v141, 30
        %v318 = vsel %vm314, %v312, 1.0
        %v319 = vsel %vm315, %v311, 1.0
        %v320 = vsel %vm316, %v310, 1.0
        %v321 = vsel %vm317, %v313, 1.0
        %v322 = vmin.f32 %v301, %v318
        %v323 = vmin.f32 %v302, %v319
        %v324 = vmin.f32 %v303, %v320
        %v325 = vmin.f32 %v304, %v321
        %326 = vst [vmem:[%s136] sm:$0xff] %v322
        %327 = vst [vmem:[%s136 + $0x8] sm:$0xff] %v323
        %328 = vst [vmem:[%s136 + $0x10] sm:$0xff] %v324
        %329 = vst [vmem:[%s136 + $0x18] sm:$0xff] %v325
        %p330 = scmp.lt.s32.totalorder %s15, 1
        %s331 = scalar_select %p330, %s15, 1
        %s332 = smul.addr %s331, 4
        %s333 = smul.addr %s332, 8
        %s334 = scalar_lea.vmem %s1, %s333
        // Predicated region
        $region29: #{dcp_dehaze_forward.2} parent=23 // pred_check
          %p335 = pneg %p59
        $region30: #{dcp_dehaze_forward.2} parent=23 // pred_check_branch
          %337 = sbr.rel (%p335) target = $region32
        $region31: #{dcp_dehaze_forward.2} parent=23 // pred_region
          _
        $region32: #{dcp_dehaze_forward.2} parent=23 // pred_fallthru
          _
      $region24: #{dcp_dehaze_forward.2} parent=5 // pred_fallthru
        _
      %p338 = scmp.le.s32.totalorder 2, %s10
      // Predicated region
      $region33: #{dcp_dehaze_forward.2} parent=5 // pred_check
        %p339 = pneg %p338
      $region34: #{dcp_dehaze_forward.2} parent=5 // pred_check_branch
        %341 = sbr.rel (%p339) target = $region36
      $region35: #{dcp_dehaze_forward.2} parent=5 // pred_region
        %s342 = ssub.s32 %s10, 2
        // Predicated region
        $region37: #{dcp_dehaze_forward.2} parent=35 // pred_check
          %p343 = pneg %p65
        $region38: #{dcp_dehaze_forward.2} parent=35 // pred_check_branch
          %345 = sbr.rel (%p343) target = $region40
        $region39: #{dcp_dehaze_forward.2} parent=35 // pred_region
          %p346 = scmp.lt.s32.totalorder %s16, 1
          %s347 = scalar_select %p346, %s16, 1
          %s348 = smul.addr %s347, 4
          %s349 = smul.addr %s348, 8
          %s350 = scalar_lea.vmem %s1, %s349
        $region40: #{dcp_dehaze_forward.2} parent=35 // pred_fallthru
          _
      $region36: #{dcp_dehaze_forward.2} parent=5 // pred_fallthru
        _
    $region6: #{dcp_dehaze_forward.2} parent=1 // loop_footer
      %s14 = sadd.s32 1, %s10
    $region7: #{dcp_dehaze_forward.2} parent=1 // loop_footer_branch
      %9 = sbr.rel target = $region3
    $region8: #{dcp_dehaze_forward.2} parent=1 // loop_exit
      _
    %351 = vsyncpa [#allocation3], 1
    %s352 = scalar_lea.sflag [#allocation3], 1
    %353 = vsyncpa %s352, 1

// kernel: dcp_dehaze_forward.3
$region0: #{dcp_dehaze_forward.3}
  #allocation0 [shape = 'u32[]', space=smem, size = 0x4, offset = 0x4, fixed_abs, tag = 'smem constant byte address 0x4 - core index']
  #allocation1 [shape = 'u32[144,128]{1,0:T(1,128)}', space=vmem, size = 0x12000, scoped, tag = 'internal scratch']
  #allocation2 [shape = 's32[1]{0}', space=sflag, size = 0x4, scoped, tag = 'scoped memory for dcp_dehaze_forward.3']
  #allocation3 [shape = 'u8[1024]{0}', space=smem, size = 0x400, scoped, tag = 'prefetched SMEM operand 0']
  %s0 = inlined_call_operand.vmem [shape: f32[2,3], index: 0, kind: input, shape index: {}]
  %s1 = inlined_call_operand.vmem [shape: f32[2,3,32,128], index: 1, kind: input, shape index: {}]
  %s2 = inlined_call_operand.hbm [shape: f32[2,3,32,128], index: 2, kind: output, shape index: {0}]
  %s3 = inlined_call_operand.hbm [shape: f32[2,1,32,128], index: 3, kind: output, shape index: {1}]
  %s4 = inlined_call_operand.hbm [shape: f32[2,3,32,128], index: 4, kind: output, shape index: {2}]
  %5 = xla_tuple %s2, %s3, %s4
  %s6 = sld [smem:[#allocation0]]
  $region53: #{dcp_dehaze_forward.3} parent=0
    _
  %s8 = ssub.s32 1, %s6
  %s9 = scalar_select 0, %s8, %s6
  %s10 = sshll.u32 %s0, 4
  %s11 = int_to_ptr.vmem [resolvable:$true] %s10
  %13 = dma.vmem_to_smem %s11, 32, [#allocation3], [#allocation2]
  %14 = dma.done [#allocation2], 32
  %15 = sfence
  $region1: #{dcp_dehaze_forward.3} parent=0
    #allocation4 [shape = 'u8[98304]{0}', space=vmem, size = 0x18000, scoped, tag = 'output window, operand 0']
    #allocation5 [shape = 's32[2]{0}', space=sflag, size = 0x8, scoped, tag = 'scoped memory for dcp_dehaze_forward.3']
    #allocation6 [shape = 'u8[32768]{0}', space=vmem, size = 0x8000, scoped, tag = 'output window, operand 1']
    #allocation7 [shape = 's32[2]{0}', space=sflag, size = 0x8, scoped, tag = 'scoped memory for dcp_dehaze_forward.3']
    #allocation8 [shape = 'u8[98304]{0}', space=vmem, size = 0x18000, scoped, tag = 'output window, operand 2']
    %16 = vsyncpa [#allocation5], 0
    %s17 = scalar_lea.sflag [#allocation5], 1
    %18 = vsyncpa %s17, 0
    %19 = vsyncpa [#allocation7], 0
    %s20 = scalar_lea.sflag [#allocation7], 1
    %21 = vsyncpa %s20, 0
    loop: start=0, step=1, limit=4
    $region2: #{dcp_dehaze_forward.3} parent=1 // loop_pre_header
      _
    $region3: #{dcp_dehaze_forward.3} parent=1 // loop_header
      %s23 = sphi 0, %s27
      %p24 = scmp.ge.s32.totalorder %s23, 4
      %s33 = sphi 0, %s35
      %s36 = sphi 0, %s33
      %s37 = sphi 0, %s36
      %s53 = sphi 0, %s37
      %s59 = sphi 0, %s61
      %s62 = sphi 0, %s59
      %s63 = sphi 0, %s62
      %s79 = sphi 0, %s63
      %s85 = sphi 0, %s87
      %s88 = sphi 0, %s85
      %s89 = sphi 0, %s88
      %s105 = sphi 0, %s89
      %s111 = sphi 0, %s113
      %s114 = sphi 0, %s111
      %s115 = sphi 0, %s114
      %s131 = sphi 0, %s115
    $region4: #{dcp_dehaze_forward.3} parent=1 // loop_header_branch
      %26 = sbr.rel (%p24) target = $region8
    $region5: #{dcp_dehaze_forward.3} parent=1 // loop_body
      %s28 = ssub.s32 %s23, 1
      %s29 = ssub.s32 %s23, 2
      %s30 = sadd.s32 %s23, 1
      %s31 = ssub.s32 %s23, %s30
      %p32 = scmp.eq.s32.totalorder %s31, 0
      %s34 = sadd.s32 %s33, 1
      %s35 = scalar_select %p32, %s33, %s34
      %p38 = pneg %p32
      %p39 = scmp.eq.s32.totalorder %s23, 1
      %p40 = por %p38, %p39
      %p41 = scmp.ne.s32.totalorder %s33, %s36
      %p42 = scmp.eq.s32.totalorder %s23, 0
      %p43 = por %p41, %p42
      %p44 = scmp.ne.s32.totalorder %s33, %s36
      %p45 = scmp.eq.s32.totalorder %s28, 1
      %p46 = por %p44, %p45
      %p47 = scmp.ne.s32.totalorder %s36, %s37
      %p48 = scmp.eq.s32.totalorder %s28, 0
      %p49 = por %p47, %p48
      %p50 = scmp.ne.s32.totalorder %s36, %s37
      %p51 = scmp.eq.s32.totalorder %s29, 1
      %p52 = por %p50, %p51
      %p54 = scmp.ne.s32.totalorder %s37, %s53
      %p55 = scmp.eq.s32.totalorder %s29, 0
      %p56 = por %p54, %p55
      %s57 = ssub.s32 %s23, %s30
      %p58 = scmp.eq.s32.totalorder %s57, 0
      %s60 = sadd.s32 %s59, 1
      %s61 = scalar_select %p58, %s59, %s60
      %p64 = pneg %p58
      %p65 = scmp.eq.s32.totalorder %s23, 1
      %p66 = por %p64, %p65
      %p67 = scmp.ne.s32.totalorder %s59, %s62
      %p68 = scmp.eq.s32.totalorder %s23, 0
      %p69 = por %p67, %p68
      %p70 = scmp.ne.s32.totalorder %s59, %s62
      %p71 = scmp.eq.s32.totalorder %s28, 1
      %p72 = por %p70, %p71
      %p73 = scmp.ne.s32.totalorder %s62, %s63
      %p74 = scmp.eq.s32.totalorder %s28, 0
      %p75 = por %p73, %p74
      %p76 = scmp.ne.s32.totalorder %s62, %s63
      %p77 = scmp.eq.s32.totalorder %s29, 1
      %p78 = por %p76, %p77
      %p80 = scmp.ne.s32.totalorder %s63, %s79
      %p81 = scmp.eq.s32.totalorder %s29, 0
      %p82 = por %p80, %p81
      %s83 = ssub.s32 %s23, %s30
      %p84 = scmp.eq.s32.totalorder %s83, 0
      %s86 = sadd.s32 %s85, 1
      %s87 = scalar_select %p84, %s85, %s86
      %p90 = pneg %p84
      %p91 = scmp.eq.s32.totalorder %s23, 1
      %p92 = por %p90, %p91
      %p93 = scmp.ne.s32.totalorder %s85, %s88
      %p94 = scmp.eq.s32.totalorder %s23, 0
      %p95 = por %p93, %p94
      %p96 = scmp.ne.s32.totalorder %s85, %s88
      %p97 = scmp.eq.s32.totalorder %s28, 1
      %p98 = por %p96, %p97
      %p99 = scmp.ne.s32.totalorder %s88, %s89
      %p100 = scmp.eq.s32.totalorder %s28, 0
      %p101 = por %p99, %p100
      %p102 = scmp.ne.s32.totalorder %s88, %s89
      %p103 = scmp.eq.s32.totalorder %s29, 1
      %p104 = por %p102, %p103
      %p106 = scmp.ne.s32.totalorder %s89, %s105
      %p107 = scmp.eq.s32.totalorder %s29, 0
      %p108 = por %p106, %p107
      %s109 = ssub.s32 %s23, %s30
      %p110 = scmp.eq.s32.totalorder %s109, 0
      %s112 = sadd.s32 %s111, 1
      %s113 = scalar_select %p110, %s111, %s112
      %p116 = pneg %p110
      %p117 = scmp.eq.s32.totalorder %s23, 1
      %p118 = por %p116, %p117
      %p119 = scmp.ne.s32.totalorder %s111, %s114
      %p120 = scmp.eq.s32.totalorder %s23, 0
      %p121 = por %p119, %p120
      %p122 = scmp.ne.s32.totalorder %s111, %s114
      %p123 = scmp.eq.s32.totalorder %s28, 1
      %p124 = por %p122, %p123
      %p125 = scmp.ne.s32.totalorder %s114, %s115
      %p126 = scmp.eq.s32.totalorder %s28, 0
      %p127 = por %p125, %p126
      %p128 = scmp.ne.s32.totalorder %s114, %s115
      %p129 = scmp.eq.s32.totalorder %s29, 1
      %p130 = por %p128, %p129
      %p132 = scmp.ne.s32.totalorder %s115, %s131
      %p133 = scmp.eq.s32.totalorder %s29, 0
      %p134 = por %p132, %p133
      %p135 = scmp.le.s32.totalorder 1, %s23
      %p136 = scmp.lt.s32.totalorder %s23, 3
      %p137 = pnand %p135, %p136
      %p138 = pneg %p137
      // Predicated region
      $region9: #{dcp_dehaze_forward.3} parent=5 // pred_check
        _
      $region10: #{dcp_dehaze_forward.3} parent=5 // pred_check_branch
        %140 = sbr.rel (%p137) target = $region12
      $region11: #{dcp_dehaze_forward.3} parent=5 // pred_region
        %s141 = ssub.s32 %s23, 1
      $region12: #{dcp_dehaze_forward.3} parent=5 // pred_fallthru
        _
      %p142 = scmp.lt.s32.totalorder %s23, 2
      // Predicated region
      $region13: #{dcp_dehaze_forward.3} parent=5 // pred_check
        %p143 = pneg %p142
      $region14: #{dcp_dehaze_forward.3} parent=5 // pred_check_branch
        %145 = sbr.rel (%p143) target = $region16
      $region15: #{dcp_dehaze_forward.3} parent=5 // pred_region
        // Predicated region
        $region17: #{dcp_dehaze_forward.3} parent=15 // pred_check
          %p146 = pneg %p43
        $region18: #{dcp_dehaze_forward.3} parent=15 // pred_check_branch
          %148 = sbr.rel (%p146) target = $region20
        $region19: #{dcp_dehaze_forward.3} parent=15 // pred_region
          %p149 = scmp.lt.s32.totalorder %s23, 1
          %s150 = scalar_select %p149, %s23, 1
          %s151 = smul.addr %s150, 12
          %s152 = smul.addr %s151, 8
          %s153 = scalar_lea.vmem %s1, %s152
        $region20: #{dcp_dehaze_forward.3} parent=15 // pred_fallthru
          _
      $region16: #{dcp_dehaze_forward.3} parent=5 // pred_fallthru
        _
      %p154 = scmp.le.s32.totalorder 1, %s23
      %p155 = scmp.lt.s32.totalorder %s23, 3
      %p156 = pnand %p154, %p155
      %p157 = pneg %p156
      // Predicated region
      $region21: #{dcp_dehaze_forward.3} parent=5 // pred_check
        _
      $region22: #{dcp_dehaze_forward.3} parent=5 // pred_check_branch
        %159 = sbr.rel (%p156) target = $region24
      $region23: #{dcp_dehaze_forward.3} parent=5 // pred_region
        %s160 = ssub.s32 %s23, 1
        %p161 = scmp.lt.s32.totalorder %s28, 1
        %s162 = scalar_select %p161, %s28, 1
        %s163 = smul.addr %s162, 12
        %s164 = smul.addr %s163, 8
        %s165 = scalar_lea.vmem %s1, %s164
        %p166 = pneg %p49
        %p167 = pneg %p46
        %p168 = pneg %p75
        %p169 = pneg %p72
        %s170 = sand.u32 %s62, 1
        %s171 = scalar_lea.sflag [#allocation5], %s170
        %s172 = sand.u32 %s62, 1
        %s173 = smul.addr %s172, 96
        %s174 = scalar_lea.vmem [#allocation4], %s173
        %p175 = pneg %p101
        %p176 = pneg %p98
        %s177 = sand.u32 %s28, 1
        %s178 = scalar_lea.sflag [#allocation7], %s177
        %s179 = sand.u32 %s88, 1
        %s180 = smul.addr %s179, 32
        %s181 = scalar_lea.vmem [#allocation6], %s180
        %p182 = pneg %p127
        %p183 = pneg %p124
        %s184 = sand.u32 %s28, 1
        %s185 = scalar_lea.sflag [#allocation7], %s184
        %s186 = sand.u32 %s114, 1
        %s187 = smul.addr %s186, 96
        %s188 = scalar_lea.vmem [#allocation8], %s187
        %p189 = scmp.lt.s32.totalorder %s28, 1
        %s190 = scalar_select %p189, %s28, 1
        %s191 = smul.addr %s190, 12
        %s192 = smul.addr %s191, 8
        %s193 = scalar_lea.vmem %s1, %s192
        %v194 = vlaneseq
        %v195 = vshrl.u32 %v194, 7
        %v196 = vadd.s32 %v195, 8
        %v197 = vadd.s32 %v195, 16
        %v198 = vadd.s32 %v195, 24
        %v199 = vlaneseq
        %v200 = vand.u32 %v199, 127
        %v201 = vcvt.s32.f32 %v195
        %v202 = vcvt.s32.f32 %v196
        %v203 = vcvt.s32.f32 %v197
        %v204 = vcvt.s32.f32 %v198
        %v205 = vcvt.s32.f32 %v200
        %v206 = vmin.f32 %v201, 15.0
        %v207 = vmin.f32 %v202, 15.0
        %v208 = vmin.f32 %v203, 15.0
        %v209 = vmin.f32 %v204, 15.0
        %v210 = vsub.f32 31.0, %v201
        %v211 = vsub.f32 31.0, %v202
        %v212 = vsub.f32 31.0, %v203
        %v213 = vsub.f32 31.0, %v204
        %v214 = vmin.f32 %v210, 15.0
        %v215 = vmin.f32 %v211, 15.0
        %v216 = vmin.f32 %v212, 15.0
        %v217 = vmin.f32 %v213, 15.0
        %v218 = vadd.f32 %v206, %v214
        %v219 = vadd.f32 %v207, %v215
        %v220 = vadd.f32 %v208, %v216
        %v221 = vadd.f32 %v209, %v217
        %v222 = vadd.f32 %v218, 1.0
        %v223 = vadd.f32 %v219, 1.0
        %v224 = vadd.f32 %v220, 1.0
        %v225 = vadd.f32 %v221, 1.0
        %v226 = vmin.f32 %v205, 15.0
        %v227 = vsub.f32 127.0, %v205
        %v228 = vmin.f32 %v227, 15.0
        %v229 = vadd.f32 %v226, %v228
        %v230 = vadd.f32 %v229, 1.0
        %v231 = vmul.f32 %v222, %v230
        %v232 = vmul.f32 %v223, %v230
        %v233 = vmul.f32 %v224, %v230
        %v234 = vmul.f32 %v225, %v230
        %v235 = vrcp.pop %v231
        %v236 = vmul.f32 1.0, %v235
        %v237 = vrcp.pop %v232
        %v238 = vmul.f32 1.0, %v237
        %v239 = vrcp.pop %v233
        %v240 = vmul.f32 1.0, %v239
        %v241 = vrcp.pop %v234
        %v242 = vmul.f32 1.0, %v241
        %s243 = smul.u32 %s28, 128
        %s244 = sld [smem:[#allocation3 + %s243]]
        %v245 = vstv %s244
        %v246 = vrcp.pop %v245
        %s247 = vtos %v246
        %s248 = smul.f32 0.5, %s247
        %v249 = vld [vmem:[%s193] sm:$0xff]
        %v250 = vld [vmem:[%s193 + $0x8] sm:$0xff]
        %v251 = vld [vmem:[%s193 + $0x10] sm:$0xff]
        %v252 = vld [vmem:[%s193 + $0x18] sm:$0xff]
        %v253 = vstv %s248
        %v254 = vmul.f32 %v249, %v253
        %v255 = vmul.f32 %v250, %v253
        %v256 = vmul.f32 %v251, %v253
        %v257 = vmul.f32 %v252, %v253
        %v258 = vadd.f32 %v254, %v253
        %v259 = vadd.f32 %v255, %v253
        %v260 = vadd.f32 %v256, %v253
        %v261 = vadd.f32 %v257, %v253
        %s262 = sadd.s32 %s243, 1
        %s263 = sld [smem:[#allocation3 + %s262]]
        %v264 = vstv %s263
        %v265 = vrcp.pop %v264
        %s266 = vtos %v265
        %s267 = smul.f32 0.5, %s266
        %s268 = scalar_lea.vmem %s193, 32
        %v269 = vld [vmem:[%s268] sm:$0xff]
        %v270 = vld [vmem:[%s268 + $0x8] sm:$0xff]
        %v271 = vld [vmem:[%s268 + $0x10] sm:$0xff]
        %v272 = vld [vmem:[%s268 + $0x18] sm:$0xff]
        %v273 = vstv %s267
        %v274 = vmul.f32 %v269, %v273
        %v275 = vmul.f32 %v270, %v273
        %v276 = vmul.f32 %v271, %v273
        %v277 = vmul.f32 %v272, %v273
        %v278 = vadd.f32 %v274, %v273
        %v279 = vadd.f32 %v275, %v273
        %v280 = vadd.f32 %v276, %v273
        %v281 = vadd.f32 %v277, %v273
        %v282 = vmin.f32 %v258, %v278
        %v283 = vmin.f32 %v259, %v279
        %v284 = vmin.f32 %v260, %v280
        %v285 = vmin.f32 %v261, %v281
        %s286 = sadd.s32 %s243, 2
        %s287 = sld [smem:[#allocation3 + %s286]]
        %v288 = vstv %s287
        %v289 = vrcp.pop %v288
        %s290 = vtos %v289
        %s291 = smul.f32 0.5, %s290
        %s292 = scalar_lea.vmem %s193, 64
        %v293 = vld [vmem:[%s292] sm:$0xff]
        %v294 = vld [vmem:[%s292 + $0x8] sm:$0xff]
        %v295 = vld [vmem:[%s292 + $0x10] sm:$0xff]
        %v296 = vld [vmem:[%s292 + $0x18] sm:$0xff]
        %v297 = vstv %s291
        %v298 = vmul.f32 %v293, %v297
        %v299 = vmul.f32 %v294, %v297
        %v300 = vmul.f32 %v295, %v297
        %v301 = vmul.f32 %v296, %v297
        %v302 = vadd.f32 %v298, %v297
        %v303 = vadd.f32 %v299, %v297
        %v304 = vadd.f32 %v300, %v297
        %v305 = vadd.f32 %v301, %v297
        %v306 = vmin.f32 %v282, %v302
        %v307 = vmin.f32 %v283, %v303
        %v308 = vmin.f32 %v284, %v304
        %v309 = vmin.f32 %v285, %v305
        %310 = vrot.lane.b32.xlu0 %v306, 2
        %v311 = vpop.permute.xlu0 %310
        %312 = vrot.lane.b32.xlu0 %v307, 2
        %v313 = vpop.permute.xlu0 %312
        %314 = vrot.lane.b32.xlu0 %v308, 2
        %v315 = vpop.permute.xlu0 %314
        %316 = vrot.lane.b32.xlu0 %v309, 2
        %v317 = vpop.permute.xlu0 %316
        %vm318 = vcmp.ge.s32.totalorder %v200, 2
        %v319 = vsel %vm318, %v311, 1.0
        %v320 = vsel %vm318, %v313, 1.0
        %v321 = vsel %vm318, %v315, 1.0
        %v322 = vsel %vm318, %v317, 1.0
        %323 = vrot.lane.b32.xlu0 %v306, 1
        %v324 = vpop.permute.xlu0 %323
        %325 = vrot.lane.b32.xlu0 %v307, 1
        %v326 = vpop.permute.xlu0 %325
        %327 = vrot.lane.b32.xlu0 %v308, 1
        %v328 = vpop.permute.xlu0 %327
        %329 = vrot.lane.b32.xlu0 %v309, 1
        %v330 = vpop.permute.xlu0 %329
        %vm331 = vcmp.ge.s32.totalorder %v200, 1
        %v332 = vsel %vm331, %v324, 1.0
        %v333 = vsel %vm331, %v326, 1.0
        %v334 = vsel %vm331, %v328, 1.0
        %v335 = vsel %vm331, %v330, 1.0
        %v336 = vmin.f32 %v319, %v332
        %v337 = vmin.f32 %v320, %v333
        %v338 = vmin.f32 %v321, %v334
        %v339 = vmin.f32 %v322, %v335
        %v340 = vmin.f32 %v336, %v306
        %v341 = vmin.f32 %v337, %v307
        %v342 = vmin.f32 %v338, %v308
        %v343 = vmin.f32 %v339, %v309
        %344 = vrot.lane.b32.xlu0 %v306, 127
        %v345 = vpop.permute.xlu0 %344
        %346 = vrot.lane.b32.xlu0 %v307, 127
        %v347 = vpop.permute.xlu0 %346
        %348 = vrot.lane.b32.xlu0 %v308, 127
        %v349 = vpop.permute.xlu0 %348
        %350 = vrot.lane.b32.xlu0 %v309, 127
        %v351 = vpop.permute.xlu0 %350
        %vm352 = vcmp.lt.s32.totalorder %v200, 127
        %v353 = vsel %vm352, %v345, 1.0
        %v354 = vsel %vm352, %v347, 1.0
        %v355 = vsel %vm352, %v349, 1.0
        %v356 = vsel %vm352, %v351, 1.0
        %v357 = vmin.f32 %v340, %v353
        %v358 = vmin.f32 %v341, %v354
        %v359 = vmin.f32 %v342, %v355
        %v360 = vmin.f32 %v343, %v356
        %361 = vrot.lane.b32.xlu0 %v306, 126
        %v362 = vpop.permute.xlu0 %361
        %363 = vrot.lane.b32.xlu0 %v307, 126
        %v364 = vpop.permute.xlu0 %363
        %365 = vrot.lane.b32.xlu0 %v308, 126
        %v366 = vpop.permute.xlu0 %365
        %367 = vrot.lane.b32.xlu0 %v309, 126
        %v368 = vpop.permute.xlu0 %367
        %vm369 = vcmp.lt.s32.totalorder %v200, 126
        %v370 = vsel %vm369, %v362, 1.0
        %v371 = vsel %vm369, %v364, 1.0
        %v372 = vsel %vm369, %v366, 1.0
        %v373 = vsel %vm369, %v368, 1.0
        %v374 = vmin.f32 %v357, %v370
        %v375 = vmin.f32 %v358, %v371
        %v376 = vmin.f32 %v359, %v372
        %v377 = vmin.f32 %v360, %v373
        %v378 = vrot.slane %v374, 6
        %v379 = vrot.slane %v375, 6
        %v380 = vrot.slane %v376, 6
        %v381 = vrot.slane %v377, 6
        %vm382 = vcmp.lt.s32.totalorder %v195, 2
        %v383 = vsel %vm382, %v380, %v381
        %v384 = vsel %vm382, %v379, %v380
        %v385 = vsel %vm382, %v378, %v379
        %v386 = vsel %vm382, %v381, %v378
        %vm387 = vcmp.ge.s32.totalorder %v195, 2
        %vm388 = vcmp.ge.s32.totalorder %v196, 2
        %vm389 = vcmp.ge.s32.totalorder %v197, 2
        %vm390 = vcmp.ge.s32.totalorder %v198, 2
        %v391 = vsel %vm387, %v386, 1.0
        %v392 = vsel %vm388, %v385, 1.0
        %v393 = vsel %vm389, %v384, 1.0
        %v394 = vsel %vm390, %v383, 1.0
        %v395 = vrot.slane %v374, 7
        %v396 = vrot.slane %v375, 7
        %v397 = vrot.slane %v376, 7
        %v398 = vrot.slane %v377, 7
        %vm399 = vcmp.lt.s32.totalorder %v195, 1
        %v400 = vsel %vm399, %v397, %v398
        %v401 = vsel %vm399, %v396, %v397
        %v402 = vsel %vm399, %v395, %v396
        %v403 = vsel %vm399, %v398, %v395
        %vm404 = vcmp.ge.s32.totalorder %v195, 1
        %vm405 = vcmp.ge.s32.totalorder %v196, 1
        %vm406 = vcmp.ge.s32.totalorder %v197, 1
        %vm407 = vcmp.ge.s32.totalorder %v198, 1
        %v408 = vsel %vm404, %v403, 1.0
        %v409 = vsel %vm405, %v402, 1.0
        %v410 = vsel %vm406, %v401, 1.0
        %v411 = vsel %vm407, %v400, 1.0
        %v412 = vmin.f32 %v391, %v408
        %v413 = vmin.f32 %v392, %v409
        %v414 = vmin.f32 %v393, %v410
        %v415 = vmin.f32 %v394, %v411
        %v416 = vmin.f32 %v412, %v374
        %v417 = vmin.f32 %v413, %v375
        %v418 = vmin.f32 %v414, %v376
        %v419 = vmin.f32 %v415, %v377
        %v420 = vrot.slane %v374, 1
        %v421 = vrot.slane %v375, 1
        %v422 = vrot.slane %v376, 1
        %v423 = vrot.slane %v377, 1
        %vm424 = vcmp.lt.s32.totalorder %v195, 7
        %v425 = vsel %vm424, %v422, %v423
        %v426 = vsel %vm424, %v421, %v422
        %v427 = vsel %vm424, %v420, %v421
        %v428 = vsel %vm424, %v423, %v420
        %vm429 = vcmp.lt.s32.totalorder %v195, 31
        %vm430 = vcmp.lt.s32.totalorder %v196, 31
        %vm431 = vcmp.lt.s32.totalorder %v197, 31
        %vm432 = vcmp.lt.s32.totalorder %v198, 31
        %v433 = vsel %vm429, %v427, 1.0
        %v434 = vsel %vm430, %v426, 1.0
        %v435 = vsel %vm431, %v425, 1.0
        %v436 = vsel %vm432, %v428, 1.0
        %v437 = vmin.f32 %v416, %v433
        %v438 = vmin.f32 %v417, %v434
        %v439 = vmin.f32 %v418, %v435
        %v440 = vmin.f32 %v419, %v436
        %v441 = vrot.slane %v374, 2
        %v442 = vrot.slane %v375, 2
        %v443 = vrot.slane %v376, 2
        %v444 = vrot.slane %v377, 2
        %vm445 = vcmp.lt.s32.totalorder %v195, 6
        %v446 = vsel %vm445, %v443, %v444
        %v447 = vsel %vm445, %v442, %v443
        %v448 = vsel %vm445, %v441, %v442
        %v449 = vsel %vm445, %v444, %v441
        %vm450 = vcmp.lt.s32.totalorder %v195, 30
        %vm451 = vcmp.lt.s32.totalorder %v196, 30
        %vm452 = vcmp.lt.s32.totalorder %v197, 30
        %vm453 = vcmp.lt.s32.totalorder %v198, 30
        %v454 = vsel %vm450, %v448, 1.0
        %v455 = vsel %vm451, %v447, 1.0
        %v456 = vsel %vm452, %v446, 1.0
        %v457 = vsel %vm453, %v449, 1.0
        %v458 = vmin.f32 %v437, %v454
        %v459 = vmin.f32 %v438, %v455
        %v460 = vmin.f32 %v439, %v456
        %v461 = vmin.f32 %v440, %v457
        %v462 = vmul.f32 %v458, 0.95
        %v463 = vmul.f32 %v459, 0.95
        %v464 = vmul.f32 %v460, 0.95
        %v465 = vmul.f32 %v461, 0.95
        %v466 = vsub.f32 1.0, %v462
        %v467 = vsub.f32 1.0, %v463
        %v468 = vsub.f32 1.0, %v464
        %v469 = vsub.f32 1.0, %v465
        %v470 = vmul.f32 %v249, 0.2989
        %v471 = vmul.f32 %v250, 0.2989
        %v472 = vmul.f32 %v251, 0.2989
        %v473 = vmul.f32 %v252, 0.2989
        %v474 = vmul.f32 %v269, 0.587
        %v475 = vmul.f32 %v270, 0.587
        %v476 = vmul.f32 %v271, 0.587
        %v477 = vmul.f32 %v272, 0.587
        %v478 = vadd.f32 %v470, %v474
        %v479 = vadd.f32 %v471, %v475
        %v480 = vadd.f32 %v472, %v476
        %v481 = vadd.f32 %v473, %v477
        %v482 = vmul.f32 %v293, 0.114
        %v483 = vmul.f32 %v294, 0.114
        %v484 = vmul.f32 %v295, 0.114
        %v485 = vmul.f32 %v296, 0.114
        %v486 = vadd.f32 %v478, %v482
        %v487 = vadd.f32 %v479, %v483
        %v488 = vadd.f32 %v480, %v484
        %v489 = vadd.f32 %v481, %v485
        %v490 = vadd.f32 %v486, 1.0
        %v491 = vadd.f32 %v487, 1.0
        %v492 = vadd.f32 %v488, 1.0
        %v493 = vadd.f32 %v489, 1.0
        %v494 = vmul.f32 %v490, 0.5
        %v495 = vmul.f32 %v491, 0.5
        %v496 = vmul.f32 %v492, 0.5
        %v497 = vmul.f32 %v493, 0.5
        %498 = vrot.lane.b32.xlu0 %v494, 127
        %v499 = vpop.permute.xlu0 %498
        %500 = vrot.lane.b32.xlu0 %v495, 127
        %v501 = vpop.permute.xlu0 %500
        %502 = vrot.lane.b32.xlu0 %v496, 127
        %v503 = vpop.permute.xlu0 %502
        %504 = vrot.lane.b32.xlu0 %v497, 127
        %v505 = vpop.permute.xlu0 %504
        %v506 = vsel %vm352, %v499, 0.0
        %v507 = vsel %vm352, %v501, 0.0
        %v508 = vsel %vm352, %v503, 0.0
        %v509 = vsel %vm352, %v505, 0.0
        %v510 = vadd.f32 %v494, %v506
        %v511 = vadd.f32 %v495, %v507
        %v512 = vadd.f32 %v496, %v508
        %v513 = vadd.f32 %v497, %v509
        %514 = vrot.lane.b32.xlu0 %v510, 126
        %v515 = vpop.permute.xlu0 %514
        %516 = vrot.lane.b32.xlu0 %v511, 126
        %v517 = vpop.permute.xlu0 %516
        %518 = vrot.lane.b32.xlu0 %v512, 126
        %v519 = vpop.permute.xlu0 %518
        %520 = vrot.lane.b32.xlu0 %v513, 126
        %v521 = vpop.permute.xlu0 %520
        %v522 = vsel %vm369, %v515, 0.0
        %v523 = vsel %vm369, %v517, 0.0
        %v524 = vsel %vm369, %v519, 0.0
        %v525 = vsel %vm369, %v521, 0.0
        %v526 = vadd.f32 %v510, %v522
        %v527 = vadd.f32 %v511, %v523
        %v528 = vadd.f32 %v512, %v524
        %v529 = vadd.f32 %v513, %v525
        %530 = vrot.lane.b32.xlu0 %v526, 124
        %v531 = vpop.permute.xlu0 %530
        %532 = vrot.lane.b32.xlu0 %v527, 124
        %v533 = vpop.permute.xlu0 %532
        %534 = vrot.lane.b32.xlu0 %v528, 124
        %v535 = vpop.permute.xlu0 %534
        %536 = vrot.lane.b32.xlu0 %v529, 124
        %v537 = vpop.permute.xlu0 %536
        %vm538 = vcmp.lt.s32.totalorder %v200, 124
        %v539 = vsel %vm538, %v531, 0.0
        %v540 = vsel %vm538, %v533, 0.0
        %v541 = vsel %vm538, %v535, 0.0
        %v542 = vsel %vm538, %v537, 0.0
        %v543 = vadd.f32 %v526, %v539
        %v544 = vadd.f32 %v527, %v540
        %v545 = vadd.f32 %v528, %v541
        %v546 = vadd.f32 %v529, %v542
        %547 = vrot.lane.b32.xlu0 %v543, 120
        %v548 = vpop.permute.xlu0 %547
        %549 = vrot.lane.b32.xlu0 %v544, 120
        %v550 = vpop.permute.xlu0 %549
        %551 = vrot.lane.b32.xlu0 %v545, 120
        %v552 = vpop.permute.xlu0 %551
        %553 = vrot.lane.b32.xlu0 %v546, 120
        %v554 = vpop.permute.xlu0 %553
        %vm555 = vcmp.lt.s32.totalorder %v200, 120
        %v556 = vsel %vm555, %v548, 0.0
        %v557 = vsel %vm555, %v550, 0.0
        %v558 = vsel %vm555, %v552, 0.0
        %v559 = vsel %vm555, %v554, 0.0
        %v560 = vadd.f32 %v543, %v556
        %v561 = vadd.f32 %v544, %v557
        %v562 = vadd.f32 %v545, %v558
        %v563 = vadd.f32 %v546, %v559
        %564 = vrot.lane.b32.xlu0 %v560, 15
        %v565 = vpop.permute.xlu0 %564
        %566 = vrot.lane.b32.xlu0 %v561, 15
        %v567 = vpop.permute.xlu0 %566
        %568 = vrot.lane.b32.xlu0 %v562, 15
        %v569 = vpop.permute.xlu0 %568
        %570 = vrot.lane.b32.xlu0 %v563, 15
        %v571 = vpop.permute.xlu0 %570
        %vm572 = vcmp.ge.s32.totalorder %v200, 15
        %v573 = vsel %vm572, %v565, 0.0
        %v574 = vsel %vm572, %v567, 0.0
        %v575 = vsel %vm572, %v569, 0.0
        %v576 = vsel %vm572, %v571, 0.0
        %577 = vrot.lane.b32.xlu0 %v543, 127
        %v578 = vpop.permute.xlu0 %577
        %579 = vrot.lane.b32.xlu0 %v544, 127
        %v580 = vpop.permute.xlu0 %579
        %581 = vrot.lane.b32.xlu0 %v545, 127
        %v582 = vpop.permute.xlu0 %581
        %583 = vrot.lane.b32.xlu0 %v546, 127
        %v584 = vpop.permute.xlu0 %583
        %v585 = vsel %vm352, %v578, 0.0
        %v586 = vsel %vm352, %v580, 0.0
        %v587 = vsel %vm352, %v582, 0.0
        %v588 = vsel %vm352, %v584, 0.0
        %v589 = vadd.f32 %v573, %v585
        %v590 = vadd.f32 %v574, %v586
        %v591 = vadd.f32 %v575, %v587
        %v592 = vadd.f32 %v576, %v588
        %593 = vrot.lane.b32.xlu0 %v526, 119
        %v594 = vpop.permute.xlu0 %593
        %595 = vrot.lane.b32.xlu0 %v527, 119
        %v596 = vpop.permute.xlu0 %595
        %597 = vrot.lane.b32.xlu0 %v528, 119
        %v598 = vpop.permute.xlu0 %597
        %599 = vrot.lane.b32.xlu0 %v529, 119
        %v600 = vpop.permute.xlu0 %599
        %vm601 = vcmp.lt.s32.totalorder %v200, 119
        %v602 = vsel %vm601, %v594, 0.0
        %v603 = vsel %vm601, %v596, 0.0
        %v604 = vsel %vm601, %v598, 0.0
        %v605 = vsel %vm601, %v600, 0.0
        %v606 = vadd.f32 %v589, %v602
        %v607 = vadd.f32 %v590, %v603
        %v608 = vadd.f32 %v591, %v604
        %v609 = vadd.f32 %v592, %v605
        %610 = vrot.lane.b32.xlu0 %v510, 115
        %v611 = vpop.permute.xlu0 %610
        %612 = vrot.lane.b32.xlu0 %v511, 115
        %v613 = vpop.permute.xlu0 %612
        %614 = vrot.lane.b32.xlu0 %v512, 115
        %v615 = vpop.permute.xlu0 %614
        %616 = vrot.lane.b32.xlu0 %v513, 115
        %v617 = vpop.permute.xlu0 %616
        %vm618 = vcmp.lt.s32.totalorder %v200, 115
        %v619 = vsel %vm618, %v611, 0.0
        %v620 = vsel %vm618, %v613, 0.0
        %v621 = vsel %vm618, %v615, 0.0
        %v622 = vsel %vm618, %v617, 0.0
        %v623 = vadd.f32 %v606, %v619
        %v624 = vadd.f32 %v607, %v620
        %v625 = vadd.f32 %v608, %v621
        %v626 = vadd.f32 %v609, %v622
        %627 = vrot.lane.b32.xlu0 %v494, 113
        %v628 = vpop.permute.xlu0 %627
        %629 = vrot.lane.b32.xlu0 %v495, 113
        %v630 = vpop.permute.xlu0 %629
        %631 = vrot.lane.b32.xlu0 %v496, 113
        %v632 = vpop.permute.xlu0 %631
        %633 = vrot.lane.b32.xlu0 %v497, 113
        %v634 = vpop.permute.xlu0 %633
        %vm635 = vcmp.lt.s32.totalorder %v200, 113
        %v636 = vsel %vm635, %v628, 0.0
        %v637 = vsel %vm635, %v630, 0.0
        %v638 = vsel %vm635, %v632, 0.0
        %v639 = vsel %vm635, %v634, 0.0
        %v640 = vadd.f32 %v623, %v636
        %v641 = vadd.f32 %v624, %v637
        %v642 = vadd.f32 %v625, %v638
        %v643 = vadd.f32 %v626, %v639
        %v644 = vrot.slane %v640, 1
        %v645 = vrot.slane %v641, 1
        %v646 = vrot.slane %v642, 1
        %v647 = vrot.slane %v643, 1
        %v648 = vsel %vm424, %v646, %v647
        %v649 = vsel %vm424, %v645, %v646
        %v650 = vsel %vm424, %v644, %v645
        %v651 = vsel %vm424, %v647, %v644
        %v652 = vsel %vm429, %v650, 0.0
        %v653 = vsel %vm430, %v649, 0.0
        %v654 = vsel %vm431, %v648, 0.0
        %v655 = vsel %vm432, %v651, 0.0
        %v656 = vadd.f32 %v640, %v652
        %v657 = vadd.f32 %v641, %v653
        %v658 = vadd.f32 %v642, %v654
        %v659 = vadd.f32 %v643, %v655
        %v660 = vrot.slane %v656, 2
        %v661 = vrot.slane %v657, 2
        %v662 = vrot.slane %v658, 2
        %v663 = vrot.slane %v659, 2
        %v664 = vsel %vm445, %v662, %v663
        %v665 = vsel %vm445, %v661, %v662
        %v666 = vsel %vm445, %v660, %v661
        %v667 = vsel %vm445, %v663, %v660
        %v668 = vsel %vm450, %v666, 0.0
        %v669 = vsel %vm451, %v665, 0.0
        %v670 = vsel %vm452, %v664, 0.0
        %v671 = vsel %vm453, %v667, 0.0
        %v672 = vadd.f32 %v656, %v668
        %v673 = vadd.f32 %v657, %v669
        %v674 = vadd.f32 %v658, %v670
        %v675 = vadd.f32 %v659, %v671
        %v676 = vrot.slane %v672, 4
        %v677 = vrot.slane %v673, 4
        %v678 = vrot.slane %v674, 4
        %v679 = vrot.slane %v675, 4
        %vm680 = vcmp.lt.s32.totalorder %v195, 4
        %v681 = vsel %vm680, %v678, %v679
        %v682 = vsel %vm680, %v677, %v678
        %v683 = vsel %vm680, %v676, %v677
        %v684 = vsel %vm680, %v679, %v676
        %vm685 = vcmp.lt.s32.totalorder %v195, 28
        %vm686 = vcmp.lt.s32.totalorder %v196, 28
        %vm687 = vcmp.lt.s32.totalorder %v197, 28
        %vm688 = vcmp.lt.s32.totalorder %v198, 28
        %v689 = vsel %vm685, %v683, 0.0
        %v690 = vsel %vm686, %v682, 0.0
        %v691 = vsel %vm687, %v681, 0.0
        %v692 = vsel %vm688, %v684, 0.0
        %v693 = vadd.f32 %v672, %v689
        %v694 = vadd.f32 %v673, %v690
        %v695 = vadd.f32 %v674, %v691
        %v696 = vadd.f32 %v675, %v692
        %vm697 = vcmp.lt.s32.totalorder %v195, 24
        %vm698 = vcmp.lt.s32.totalorder %v196, 24
        %vm699 = vcmp.lt.s32.totalorder %v197, 24
        %vm700 = vcmp.lt.s32.totalorder %v198, 24
        %v701 = vsel %vm697, %v694, 0.0
        %v702 = vsel %vm698, %v695, 0.0
        %v703 = vsel %vm699, %v696, 0.0
        %v704 = vsel %vm700, %v693, 0.0
        %v705 = vadd.f32 %v693, %v701
        %v706 = vadd.f32 %v694, %v702
        %v707 = vadd.f32 %v695, %v703
        %v708 = vadd.f32 %v696, %v704
        %v709 = vrot.slane %v705, 1
        %v710 = vrot.slane %v706, 1
        %v711 = vrot.slane %v707, 1
        %v712 = vrot.slane %v708, 1
        %v713 = vsel %vm424, %v711, %v712
        %v714 = vsel %vm424, %v710, %v711
        %v715 = vsel %vm424, %v709, %v710
        %v716 = vsel %vm424, %v712, %v709
        %vm717 = vcmp.ge.s32.totalorder %v195, 15
        %vm718 = vcmp.ge.s32.totalorder %v196, 15
        %vm719 = vcmp.ge.s32.totalorder %v197, 15
        %vm720 = vcmp.ge.s32.totalorder %v198, 15
        %v721 = vsel %vm717, %v713, 0.0
        %v722 = vsel %vm718, %v716, 0.0
        %v723 = vsel %vm719, %v715, 0.0
        %v724 = vsel %vm720, %v714, 0.0
        %v725 = vrot.slane %v693, 1
        %v726 = vrot.slane %v694, 1
        %v727 = vrot.slane %v695, 1
        %v728 = vrot.slane %v696, 1
        %v729 = vsel %vm424, %v727, %v728
        %v730 = vsel %vm424, %v726, %v727
        %v731 = vsel %vm424, %v725, %v726
        %v732 = vsel %vm424, %v728, %v725
        %v733 = vsel %vm429, %v731, 0.0
        %v734 = vsel %vm430, %v730, 0.0
        %v735 = vsel %vm431, %v729, 0.0
        %v736 = vsel %vm432, %v732, 0.0
        %v737 = vadd.f32 %v721, %v733
        %v738 = vadd.f32 %v722, %v734
        %v739 = vadd.f32 %v723, %v735
        %v740 = vadd.f32 %v724, %v736
        %v741 = vrot.slane %v672, 1
        %v742 = vrot.slane %v673, 1
        %v743 = vrot.slane %v674, 1
        %v744 = vrot.slane %v675, 1
        %v745 = vsel %vm424, %v743, %v744
        %v746 = vsel %vm424, %v742, %v743
        %v747 = vsel %vm424, %v741, %v742
        %v748 = vsel %vm424, %v744, %v741
        %vm749 = vcmp.lt.s32.totalorder %v195, 23
        %vm750 = vcmp.lt.s32.totalorder %v196, 23
        %vm751 = vcmp.lt.s32.totalorder %v197, 23
        %vm752 = vcmp.lt.s32.totalorder %v198, 23
        %v753 = vsel %vm749, %v746, 0.0
        %v754 = vsel %vm750, %v745, 0.0
        %v755 = vsel %vm751, %v748, 0.0
        %v756 = vsel %vm752, %v747, 0.0
        %v757 = vadd.f32 %v737, %v753
        %v758 = vadd.f32 %v738, %v754
        %v759 = vadd.f32 %v739, %v755
        %v760 = vadd.f32 %v740, %v756
        %v761 = vrot.slane %v656, 5
        %v762 = vrot.slane %v657, 5
        %v763 = vrot.slane %v658, 5
        %v764 = vrot.slane %v659, 5
        %vm765 = vcmp.lt.s32.totalorder %v195, 3
        %v766 = vsel %vm765, %v763, %v764
        %v767 = vsel %vm765, %v762, %v763
        %v768 = vsel %vm765, %v761, %v762
        %v769 = vsel %vm765, %v764, %v761
        %vm770 = vcmp.lt.s32.totalorder %v195, 19
        %vm771 = vcmp.lt.s32.totalorder %v196, 19
        %vm772 = vcmp.lt.s32.totalorder %v197, 19
        %vm773 = vcmp.lt.s32.totalorder %v198, 19
        %v774 = vsel %vm770, %v767, 0.0
        %v775 = vsel %vm771, %v766, 0.0
        %v776 = vsel %vm772, %v769, 0.0
        %v777 = vsel %vm773, %v768, 0.0
        %v778 = vadd.f32 %v757, %v774
        %v779 = vadd.f32 %v758, %v775
        %v780 = vadd.f32 %v759, %v776
        %v781 = vadd.f32 %v760, %v777
        %v782 = vrot.slane %v640, 7
        %v783 = vrot.slane %v641, 7
        %v784 = vrot.slane %v642, 7
        %v785 = vrot.slane %v643, 7
        %v786 = vsel %vm399, %v784, %v785
        %v787 = vsel %vm399, %v783, %v784
        %v788 = vsel %vm399, %v782, %v783
        %v789 = vsel %vm399, %v785, %v782
        %vm790 = vcmp.lt.s32.totalorder %v195, 17
        %vm791 = vcmp.lt.s32.totalorder %v196, 17
        %vm792 = vcmp.lt.s32.totalorder %v197, 17
        %vm793 = vcmp.lt.s32.totalorder %v198, 17
        %v794 = vsel %vm790, %v787, 0.0
        %v795 = vsel %vm791, %v786, 0.0
        %v796 = vsel %vm792, %v789, 0.0
        %v797 = vsel %vm793, %v788, 0.0
        %v798 = vadd.f32 %v778, %v794
        %v799 = vadd.f32 %v779, %v795
        %v800 = vadd.f32 %v780, %v796
        %v801 = vadd.f32 %v781, %v797
        %v802 = vmul.f32 %v798, %v236
        %v803 = vmul.f32 %v799, %v238
        %v804 = vmul.f32 %v800, %v240
        %v805 = vmul.f32 %v801, %v242
        %806 = vrot.lane.b32.xlu0 %v466, 127
        %v807 = vpop.permute.xlu0 %806
        %808 = vrot.lane.b32.xlu0 %v467, 127
        %v809 = vpop.permute.xlu0 %808
        %810 = vrot.lane.b32.xlu0 %v468, 127
        %v811 = vpop.permute.xlu0 %810
        %812 = vrot.lane.b32.xlu0 %v469, 127
        %v813 = vpop.permute.xlu0 %812
        %v814 = vsel %vm352, %v807, 0.0
        %v815 = vsel %vm352, %v809, 0.0
        %v816 = vsel %vm352, %v811, 0.0
        %v817 = vsel %vm352, %v813, 0.0
        %v818 = vadd.f32 %v466, %v814
        %v819 = vadd.f32 %v467, %v815
        %v820 = vadd.f32 %v468, %v816
        %v821 = vadd.f32 %v469, %v817
        %822 = vrot.lane.b32.xlu0 %v818, 126
        %v823 = vpop.permute.xlu0 %822
        %824 = vrot.lane.b32.xlu0 %v819, 126
        %v825 = vpop.permute.xlu0 %824
        %826 = vrot.lane.b32.xlu0 %v820, 126
        %v827 = vpop.permute.xlu0 %826
        %828 = vrot.lane.b32.xlu0 %v821, 126
        %v829 = vpop.permute.xlu0 %828
        %v830 = vsel %vm369, %v823, 0.0
        %v831 = vsel %vm369, %v825, 0.0
        %v832 = vsel %vm369, %v827, 0.0
        %v833 = vsel %vm369, %v829, 0.0
        %v834 = vadd.f32 %v818, %v830
        %v835 = vadd.f32 %v819, %v831
        %v836 = vadd.f32 %v820, %v832
        %v837 = vadd.f32 %v821, %v833
        %838 = vrot.lane.b32.xlu0 %v834, 124
        %v839 = vpop.permute.xlu0 %838
        %840 = vrot.lane.b32.xlu0 %v835, 124
        %v841 = vpop.permute.xlu0 %840
        %842 = vrot.lane.b32.xlu0 %v836, 124
        %v843 = vpop.permute.xlu0 %842
        %844 = vrot.lane.b32.xlu0 %v837, 124
        %v845 = vpop.permute.xlu0 %844
        %v846 = vsel %vm538, %v839, 0.0
        %v847 = vsel %vm538, %v841, 0.0
        %v848 = vsel %vm538, %v843, 0.0
        %v849 = vsel %vm538, %v845, 0.0
        %v850 = vadd.f32 %v834, %v846
        %v851 = vadd.f32 %v835, %v847
        %v852 = vadd.f32 %v836, %v848
        %v853 = vadd.f32 %v837, %v849
        %854 = vrot.lane.b32.xlu0 %v850, 120
        %v855 = vpop.permute.xlu0 %854
        %856 = vrot.lane.b32.xlu0 %v851, 120
        %v857 = vpop.permute.xlu0 %856
        %858 = vrot.lane.b32.xlu0 %v852, 120
        %v859 = vpop.permute.xlu0 %858
        %860 = vrot.lane.b32.xlu0 %v853, 120
        %v861 = vpop.permute.xlu0 %860
        %v862 = vsel %vm555, %v855, 0.0
        %v863 = vsel %vm555, %v857, 0.0
        %v864 = vsel %vm555, %v859, 0.0
        %v865 = vsel %vm555, %v861, 0.0
        %v866 = vadd.f32 %v850, %v862
        %v867 = vadd.f32 %v851, %v863
        %v868 = vadd.f32 %v852, %v864
        %v869 = vadd.f32 %v853, %v865
        %870 = vrot.lane.b32.xlu0 %v866, 15
        %v871 = vpop.permute.xlu0 %870
        %872 = vrot.lane.b32.xlu0 %v867, 15
        %v873 = vpop.permute.xlu0 %872
        %874 = vrot.lane.b32.xlu0 %v868, 15
        %v875 = vpop.permute.xlu0 %874
        %876 = vrot.lane.b32.xlu0 %v869, 15
        %v877 = vpop.permute.xlu0 %876
        %v878 = vsel %vm572, %v871, 0.0
        %v879 = vsel %vm572, %v873, 0.0
        %v880 = vsel %vm572, %v875, 0.0
        %v881 = vsel %vm572, %v877, 0.0
        %882 = vrot.lane.b32.xlu0 %v850, 127
        %v883 = vpop.permute.xlu0 %882
        %884 = vrot.lane.b32.xlu0 %v851, 127
        %v885 = vpop.permute.xlu0 %884
        %886 = vrot.lane.b32.xlu0 %v852, 127
        %v887 = vpop.permute.xlu0 %886
        %888 = vrot.lane.b32.xlu0 %v853, 127
        %v889 = vpop.permute.xlu0 %888
        %v890 = vsel %vm352, %v883, 0.0
        %v891 = vsel %vm352, %v885, 0.0
        %v892 = vsel %vm352, %v887, 0.0
        %v893 = vsel %vm352, %v889, 0.0
        %v894 = vadd.f32 %v878, %v890
        %v895 = vadd.f32 %v879, %v891
        %v896 = vadd.f32 %v880, %v892
        %v897 = vadd.f32 %v881, %v893
        %898 = vrot.lane.b32.xlu0 %v834, 119
        %v899 = vpop.permute.xlu0 %898
        %900 = vrot.lane.b32.xlu0 %v835, 119
        %v901 = vpop.permute.xlu0 %900
        %902 = vrot.lane.b32.xlu0 %v836, 119
        %v903 = vpop.permute.xlu0 %902
        %904 = vrot.lane.b32.xlu0 %v837, 119
        %v905 = vpop.permute.xlu0 %904
        %v906 = vsel %vm601, %v899, 0.0
        %v907 = vsel %vm601, %v901, 0.0
        %v908 = vsel %vm601, %v903, 0.0
        %v909 = vsel %vm601, %v905, 0.0
        %v910 = vadd.f32 %v894, %v906
        %v911 = vadd.f32 %v895, %v907
        %v912 = vadd.f32 %v896, %v908
        %v913 = vadd.f32 %v897, %v909
        %914 = vrot.lane.b32.xlu0 %v818, 115
        %v915 = vpop.permute.xlu0 %914
        %916 = vrot.lane.b32.xlu0 %v819, 115
        %v917 = vpop.permute.xlu0 %916
        %918 = vrot.lane.b32.xlu0 %v820, 115
        %v919 = vpop.permute.xlu0 %918
        %920 = vrot.lane.b32.xlu0 %v821, 115
        %v921 = vpop.permute.xlu0 %920
        %v922 = vsel %vm618, %v915, 0.0
        %v923 = vsel %vm618, %v917, 0.0
        %v924 = vsel %vm618, %v919, 0.0
        %v925 = vsel %vm618, %v921, 0.0
        %v926 = vadd.f32 %v910, %v922
        %v927 = vadd.f32 %v911, %v923
        %v928 = vadd.f32 %v912, %v924
        %v929 = vadd.f32 %v913, %v925
        %930 = vrot.lane.b32.xlu0 %v466, 113
        %v931 = vpop.permute.xlu0 %930
        %932 = vrot.lane.b32.xlu0 %v467, 113
        %v933 = vpop.permute.xlu0 %932
        %934 = vrot.lane.b32.xlu0 %v468, 113
        %v935 = vpop.permute.xlu0 %934
        %936 = vrot.lane.b32.xlu0 %v469, 113
        %v937 = vpop.permute.xlu0 %936
        %v938 = vsel %vm635, %v931, 0.0
        %v939 = vsel %vm635, %v933, 0.0
        %v940 = vsel %vm635, %v935, 0.0
        %v941 = vsel %vm635, %v937, 0.0
        %v942 = vadd.f32 %v926, %v938
        %v943 = vadd.f32 %v927, %v939
        %v944 = vadd.f32 %v928, %v940
        %v945 = vadd.f32 %v929, %v941
        %v946 = vrot.slane %v942, 1
        %v947 = vrot.slane %v943, 1
        %v948 = vrot.slane %v944, 1
        %v949 = vrot.slane %v945, 1
        %v950 = vsel %vm424, %v948, %v949
        %v951 = vsel %vm424, %v947, %v948
        %v952 = vsel %vm424, %v946, %v947
        %v953 = vsel %vm424, %v949, %v946
        %v954 = vsel %vm429, %v952, 0.0
        %v955 = vsel %vm430, %v951, 0.0
        %v956 = vsel %vm431, %v950, 0.0
        %v957 = vsel %vm432, %v953, 0.0
        %v958 = vadd.f32 %v942, %v954
        %v959 = vadd.f32 %v943, %v955
        %v960 = vadd.f32 %v944, %v956
        %v961 = vadd.f32 %v945, %v957
        %v962 = vrot.slane %v958, 2
        %v963 = vrot.slane %v959, 2
        %v964 = vrot.slane %v960, 2
        %v965 = vrot.slane %v961, 2
        %v966 = vsel %vm445, %v964, %v965
        %v967 = vsel %vm445, %v963, %v964
        %v968 = vsel %vm445, %v962, %v963
        %v969 = vsel %vm445, %v965, %v962
        %v970 = vsel %vm450, %v968, 0.0
        %v971 = vsel %vm451, %v967, 0.0
        %v972 = vsel %vm452, %v966, 0.0
        %v973 = vsel %vm453, %v969, 0.0
        %v974 = vadd.f32 %v958, %v970
        %v975 = vadd.f32 %v959, %v971
        %v976 = vadd.f32 %v960, %v972
        %v977 = vadd.f32 %v961, %v973
        %v978 = vrot.slane %v974, 4
        %v979 = vrot.slane %v975, 4
        %v980 = vrot.slane %v976, 4
        %v981 = vrot.slane %v977, 4
        %v982 = vsel %vm680, %v980, %v981
        %v983 = vsel %vm680, %v979, %v980
        %v984 = vsel %vm680, %v978, %v979
        %v985 = vsel %vm680, %v981, %v978
        %v986 = vsel %vm685, %v984, 0.0
        %v987 = vsel %vm686, %v983, 0.0
        %v988 = vsel %vm687, %v982, 0.0
        %v989 = vsel %vm688, %v985, 0.0
        %v990 = vadd.f32 %v974, %v986
        %v991 = vadd.f32 %v975, %v987
        %v992 = vadd.f32 %v976, %v988
        %v993 = vadd.f32 %v977, %v989
        %v994 = vsel %vm697, %v991, 0.0
        %v995 = vsel %vm698, %v992, 0.0
        %v996 = vsel %vm699, %v993, 0.0
        %v997 = vsel %vm700, %v990, 0.0
        %v998 = vadd.f32 %v990, %v994
        %v999 = vadd.f32 %v991, %v995
        %v1000 = vadd.f32 %v992, %v996
        %v1001 = vadd.f32 %v993, %v997
        %v1002 = vrot.slane %v998, 1
        %v1003 = vrot.slane %v999, 1
        %v1004 = vrot.slane %v1000, 1
        %v1005 = vrot.slane %v1001, 1
        %v1006 = vsel %vm424, %v1004, %v1005
        %v1007 = vsel %vm424, %v1003, %v1004
        %v1008 = vsel %vm424, %v1002, %v1003
        %v1009 = vsel %vm424, %v1005, %v1002
        %v1010 = vsel %vm717, %v1006, 0.0
        %v1011 = vsel %vm718, %v1009, 0.0
        %v1012 = vsel %vm719, %v1008, 0.0
        %v1013 = vsel %vm720, %v1007, 0.0
        %v1014 = vrot.slane %v990, 1
        %v1015 = vrot.slane %v991, 1
        %v1016 = vrot.slane %v992, 1
        %v1017 = vrot.slane %v993, 1
        %v1018 = vsel %vm424, %v1016, %v1017
        %v1019 = vsel %vm424, %v1015, %v1016
        %v1020 = vsel %vm424, %v1014, %v1015
        %v1021 = vsel %vm424, %v1017, %v1014
        %v1022 = vsel %vm429, %v1020, 0.0
        %v1023 = vsel %vm430, %v1019, 0.0
        %v1024 = vsel %vm431, %v1018, 0.0
        %v1025 = vsel %vm432, %v1021, 0.0
        %v1026 = vadd.f32 %v1010, %v1022
        %v1027 = vadd.f32 %v1011, %v1023
        %v1028 = vadd.f32 %v1012, %v1024
        %v1029 = vadd.f32 %v1013, %v1025
        %v1030 = vrot.slane %v974, 1
        %v1031 = vrot.slane %v975, 1
        %v1032 = vrot.slane %v976, 1
        %v1033 = vrot.slane %v977, 1
        %v1034 = vsel %vm424, %v1032, %v1033
        %v1035 = vsel %vm424, %v1031, %v1032
        %v1036 = vsel %vm424, %v1030, %v1031
        %v1037 = vsel %vm424, %v1033, %v1030
        %v1038 = vsel %vm749, %v1035, 0.0
        %v1039 = vsel %vm750, %v1034, 0.0
        %v1040 = vsel %vm751, %v1037, 0.0
        %v1041 = vsel %vm752, %v1036, 0.0
        %v1042 = vadd.f32 %v1026, %v1038
        %v1043 = vadd.f32 %v1027, %v1039
        %v1044 = vadd.f32 %v1028, %v1040
        %v1045 = vadd.f32 %v1029, %v1041
        %v1046 = vrot.slane %v958, 5
        %v1047 = vrot.slane %v959, 5
        %v1048 = vrot.slane %v960, 5
        %v1049 = vrot.slane %v961, 5
        %v1050 = vsel %vm765, %v1048, %v1049
        %v1051 = vsel %vm765, %v1047, %v1048
        %v1052 = vsel %vm765, %v1046, %v1047
        %v1053 = vsel %vm765, %v1049, %v1046
        %v1054 = vsel %vm770, %v1051, 0.0
        %v1055 = vsel %vm771, %v1050, 0.0
        %v1056 = vsel %vm772, %v1053, 0.0
        %v1057 = vsel %vm773, %v1052, 0.0
        %v1058 = vadd.f32 %v1042, %v1054
        %v1059 = vadd.f32 %v1043, %v1055
        %v1060 = vadd.f32 %v1044, %v1056
        %v1061 = vadd.f32 %v1045, %v1057
        %v1062 = vrot.slane %v942, 7
        %v1063 = vrot.slane %v943, 7
        %v1064 = vrot.slane %v944, 7
        %v1065 = vrot.slane %v945, 7
        %v1066 = vsel %vm399, %v1064, %v1065
        %v1067 = vsel %vm399, %v1063, %v1064
        %v1068 = vsel %vm399, %v1062, %v1063
        %v1069 = vsel %vm399, %v1065, %v1062
        %v1070 = vsel %vm790, %v1067, 0.0
        %v1071 = vsel %vm791, %v1066, 0.0
        %v1072 = vsel %vm792, %v1069, 0.0
        %v1073 = vsel %vm793, %v1068, 0.0
        %v1074 = vadd.f32 %v1058, %v1070
        %v1075 = vadd.f32 %v1059, %v1071
        %v1076 = vadd.f32 %v1060, %v1072
        %v1077 = vadd.f32 %v1061, %v1073
        %v1078 = vmul.f32 %v1074, %v236
        %v1079 = vmul.f32 %v1075, %v238
        %v1080 = vmul.f32 %v1076, %v240
        %v1081 = vmul.f32 %v1077, %v242
        %v1082 = vmul.f32 %v494, %v466
        %v1083 = vmul.f32 %v495, %v467
        %v1084 = vmul.f32 %v496, %v468
        %v1085 = vmul.f32 %v497, %v469
        %1086 = vrot.lane.b32.xlu0 %v1082, 127
        %v1087 = vpop.permute.xlu0 %1086
        %1088 = vrot.lane.b32.xlu0 %v1083, 127
        %v1089 = vpop.permute.xlu0 %1088
        %1090 = vrot.lane.b32.xlu0 %v1084, 127
        %v1091 = vpop.permute.xlu0 %1090
        %1092 = vrot.lane.b32.xlu0 %v1085, 127
        %v1093 = vpop.permute.xlu0 %1092
        %v1094 = vsel %vm352, %v1087, 0.0
        %v1095 = vsel %vm352, %v1089, 0.0
        %v1096 = vsel %vm352, %v1091, 0.0
        %v1097 = vsel %vm352, %v1093, 0.0
        %v1098 = vadd.f32 %v1082, %v1094
        %v1099 = vadd.f32 %v1083, %v1095
        %v1100 = vadd.f32 %v1084, %v1096
        %v1101 = vadd.f32 %v1085, %v1097
        %1102 = vrot.lane.b32.xlu0 %v1098, 126
        %v1103 = vpop.permute.xlu0 %1102
        %1104 = vrot.lane.b32.xlu0 %v1099, 126
        %v1105 = vpop.permute.xlu0 %1104
        %1106 = vrot.lane.b32.xlu0 %v1100, 126
        %v1107 = vpop.permute.xlu0 %1106
        %1108 = vrot.lane.b32.xlu0 %v1101, 126
        %v1109 = vpop.permute.xlu0 %1108
        %v1110 = vsel %vm369, %v1103, 0.0
        %v1111 = vsel %vm369, %v1105, 0.0
        %v1112 = vsel %vm369, %v1107, 0.0
        %v1113 = vsel %vm369, %v1109, 0.0
        %v1114 = vadd.f32 %v1098, %v1110
        %v1115 = vadd.f32 %v1099, %v1111
        %v1116 = vadd.f32 %v1100, %v1112
        %v1117 = vadd.f32 %v1101, %v1113
        %1118 = vrot.lane.b32.xlu0 %v1114, 124
        %v1119 = vpop.permute.xlu0 %1118
        %1120 = vrot.lane.b32.xlu0 %v1115, 124
        %v1121 = vpop.permute.xlu0 %1120
        %1122 = vrot.lane.b32.xlu0 %v1116, 124
        %v1123 = vpop.permute.xlu0 %1122
        %1124 = vrot.lane.b32.xlu0 %v1117, 124
        %v1125 = vpop.permute.xlu0 %1124
        %v1126 = vsel %vm538, %v1119, 0.0
        %v1127 = vsel %vm538, %v1121, 0.0
        %v1128 = vsel %vm538, %v1123, 0.0
        %v1129 = vsel %vm538, %v1125, 0.0
        %v1130 = vadd.f32 %v1114, %v1126
        %v1131 = vadd.f32 %v1115, %v1127
        %v1132 = vadd.f32 %v1116, %v1128
        %v1133 = vadd.f32 %v1117, %v1129
        %1134 = vrot.lane.b32.xlu0 %v1130, 120
        %v1135 = vpop.permute.xlu0 %1134
        %1136 = vrot.lane.b32.xlu0 %v1131, 120
        %v1137 = vpop.permute.xlu0 %1136
        %1138 = vrot.lane.b32.xlu0 %v1132, 120
        %v1139 = vpop.permute.xlu0 %1138
        %1140 = vrot.lane.b32.xlu0 %v1133, 120
        %v1141 = vpop.permute.xlu0 %1140
        %v1142 = vsel %vm555, %v1135, 0.0
        %v1143 = vsel %vm555, %v1137, 0.0
        %v1144 = vsel %vm555, %v1139, 0.0
        %v1145 = vsel %vm555, %v1141, 0.0
        %v1146 = vadd.f32 %v1130, %v1142
        %v1147 = vadd.f32 %v1131, %v1143
        %v1148 = vadd.f32 %v1132, %v1144
        %v1149 = vadd.f32 %v1133, %v1145
        %1150 = vrot.lane.b32.xlu0 %v1146, 15
        %v1151 = vpop.permute.xlu0 %1150
        %1152 = vrot.lane.b32.xlu0 %v1147, 15
        %v1153 = vpop.permute.xlu0 %1152
        %1154 = vrot.lane.b32.xlu0 %v1148, 15
        %v1155 = vpop.permute.xlu0 %1154
        %1156 = vrot.lane.b32.xlu0 %v1149, 15
        %v1157 = vpop.permute.xlu0 %1156
        %v1158 = vsel %vm572, %v1151, 0.0
        %v1159 = vsel %vm572, %v1153, 0.0
        %v1160 = vsel %vm572, %v1155, 0.0
        %v1161 = vsel %vm572, %v1157, 0.0
        %1162 = vrot.lane.b32.xlu0 %v1130, 127
        %v1163 = vpop.permute.xlu0 %1162
        %1164 = vrot.lane.b32.xlu0 %v1131, 127
        %v1165 = vpop.permute.xlu0 %1164
        %1166 = vrot.lane.b32.xlu0 %v1132, 127
        %v1167 = vpop.permute.xlu0 %1166
        %1168 = vrot.lane.b32.xlu0 %v1133, 127
        %v1169 = vpop.permute.xlu0 %1168
        %v1170 = vsel %vm352, %v1163, 0.0
        %v1171 = vsel %vm352, %v1165, 0.0
        %v1172 = vsel %vm352, %v1167, 0.0
        %v1173 = vsel %vm352, %v1169, 0.0
        %v1174 = vadd.f32 %v1158, %v1170
        %v1175 = vadd.f32 %v1159, %v1171
        %v1176 = vadd.f32 %v1160, %v1172
        %v1177 = vadd.f32 %v1161, %v1173
        %1178 = vrot.lane.b32.xlu0 %v1114, 119
        %v1179 = vpop.permute.xlu0 %1178
        %1180 = vrot.lane.b32.xlu0 %v1115, 119
        %v1181 = vpop.permute.xlu0 %1180
        %1182 = vrot.lane.b32.xlu0 %v1116, 119
        %v1183 = vpop.permute.xlu0 %1182
        %1184 = vrot.lane.b32.xlu0 %v1117, 119
        %v1185 = vpop.permute.xlu0 %1184
        %v1186 = vsel %vm601, %v1179, 0.0
        %v1187 = vsel %vm601, %v1181, 0.0
        %v1188 = vsel %vm601, %v1183, 0.0
        %v1189 = vsel %vm601, %v1185, 0.0
        %v1190 = vadd.f32 %v1174, %v1186
        %v1191 = vadd.f32 %v1175, %v1187
        %v1192 = vadd.f32 %v1176, %v1188
        %v1193 = vadd.f32 %v1177, %v1189
        %1194 = vrot.lane.b32.xlu0 %v1098, 115
        %v1195 = vpop.permute.xlu0 %1194
        %1196 = vrot.lane.b32.xlu0 %v1099, 115
        %v1197 = vpop.permute.xlu0 %1196
        %1198 = vrot.lane.b32.xlu0 %v1100, 115
        %v1199 = vpop.permute.xlu0 %1198
        %1200 = vrot.lane.b32.xlu0 %v1101, 115
        %v1201 = vpop.permute.xlu0 %1200
        %v1202 = vsel %vm618, %v1195, 0.0
        %v1203 = vsel %vm618, %v1197, 0.0
        %v1204 = vsel %vm618, %v1199, 0.0
        %v1205 = vsel %vm618, %v1201, 0.0
        %v1206 = vadd.f32 %v1190, %v1202
        %v1207 = vadd.f32 %v1191, %v1203
        %v1208 = vadd.f32 %v1192, %v1204
        %v1209 = vadd.f32 %v1193, %v1205
        %1210 = vrot.lane.b32.xlu0 %v1082, 113
        %v1211 = vpop.permute.xlu0 %1210
        %1212 = vrot.lane.b32.xlu0 %v1083, 113
        %v1213 = vpop.permute.xlu0 %1212
        %1214 = vrot.lane.b32.xlu0 %v1084, 113
        %v1215 = vpop.permute.xlu0 %1214
        %1216 = vrot.lane.b32.xlu0 %v1085, 113
        %v1217 = vpop.permute.xlu0 %1216
        %v1218 = vsel %vm635, %v1211, 0.0
        %v1219 = vsel %vm635, %v1213, 0.0
        %v1220 = vsel %vm635, %v1215, 0.0
        %v1221 = vsel %vm635, %v1217, 0.0
        %v1222 = vadd.f32 %v1206, %v1218
        %v1223 = vadd.f32 %v1207, %v1219
        %v1224 = vadd.f32 %v1208, %v1220
        %v1225 = vadd.f32 %v1209, %v1221
        %v1226 = vrot.slane %v1222, 1
        %v1227 = vrot.slane %v1223, 1
        %v1228 = vrot.slane %v1224, 1
        %v1229 = vrot.slane %v1225, 1
        %v1230 = vsel %vm424, %v1228, %v1229
        %v1231 = vsel %vm424, %v1227, %v1228
        %v1232 = vsel %vm424, %v1226, %v1227
        %v1233 = vsel %vm424, %v1229, %v1226
        %v1234 = vsel %vm429, %v1232, 0.0
        %v1235 = vsel %vm430, %v1231, 0.0
        %v1236 = vsel %vm431, %v1230, 0.0
        %v1237 = vsel %vm432, %v1233, 0.0
        %v1238 = vadd.f32 %v1222, %v1234
        %v1239 = vadd.f32 %v1223, %v1235
        %v1240 = vadd.f32 %v1224, %v1236
        %v1241 = vadd.f32 %v1225, %v1237
        %v1242 = vrot.slane %v1238, 2
        %v1243 = vrot.slane %v1239, 2
        %v1244 = vrot.slane %v1240, 2
        %v1245 = vrot.slane %v1241, 2
        %v1246 = vsel %vm445, %v1244, %v1245
        %v1247 = vsel %vm445, %v1243, %v1244
        %v1248 = vsel %vm445, %v1242, %v1243
        %v1249 = vsel %vm445, %v1245, %v1242
        %v1250 = vsel %vm450, %v1248, 0.0
        %v1251 = vsel %vm451, %v1247, 0.0
        %v1252 = vsel %vm452, %v1246, 0.0
        %v1253 = vsel %vm453, %v1249, 0.0
        %v1254 = vadd.f32 %v1238, %v1250
        %v1255 = vadd.f32 %v1239, %v1251
        %v1256 = vadd.f32 %v1240, %v1252
        %v1257 = vadd.f32 %v1241, %v1253
        %v1258 = vrot.slane %v1254, 4
        %v1259 = vrot.slane %v1255, 4
        %v1260 = vrot.slane %v1256, 4
        %v1261 = vrot.slane %v1257, 4
        %v1262 = vsel %vm680, %v1260, %v1261
        %v1263 = vsel %vm680, %v1259, %v1260
        %v1264 = vsel %vm680, %v1258, %v1259
        %v1265 = vsel %vm680, %v1261, %v1258
        %v1266 = vsel %vm685, %v1264, 0.0
        %v1267 = vsel %vm686, %v1263, 0.0
        %v1268 = vsel %vm687, %v1262, 0.0
        %v1269 = vsel %vm688, %v1265, 0.0
        %v1270 = vadd.f32 %v1254, %v1266
        %v1271 = vadd.f32 %v1255, %v1267
        %v1272 = vadd.f32 %v1256, %v1268
        %v1273 = vadd.f32 %v1257, %v1269
        %v1274 = vsel %vm697, %v1271, 0.0
        %v1275 = vsel %vm698, %v1272, 0.0
        %v1276 = vsel %vm699, %v1273, 0.0
        %v1277 = vsel %vm700, %v1270, 0.0
        %v1278 = vadd.f32 %v1270, %v1274
        %v1279 = vadd.f32 %v1271, %v1275
        %v1280 = vadd.f32 %v1272, %v1276
        %v1281 = vadd.f32 %v1273, %v1277
        %v1282 = vrot.slane %v1278, 1
        %v1283 = vrot.slane %v1279, 1
        %v1284 = vrot.slane %v1280, 1
        %v1285 = vrot.slane %v1281, 1
        %v1286 = vsel %vm424, %v1284, %v1285
        %v1287 = vsel %vm424, %v1283, %v1284
        %v1288 = vsel %vm424, %v1282, %v1283
        %v1289 = vsel %vm424, %v1285, %v1282
        %v1290 = vsel %vm717, %v1286, 0.0
        %v1291 = vsel %vm718, %v1289, 0.0
        %v1292 = vsel %vm719, %v1288, 0.0
        %v1293 = vsel %vm720, %v1287, 0.0
        %v1294 = vrot.slane %v1270, 1
        %v1295 = vrot.slane %v1271, 1
        %v1296 = vrot.slane %v1272, 1
        %v1297 = vrot.slane %v1273, 1
        %v1298 = vsel %vm424, %v1296, %v1297
        %v1299 = vsel %vm424, %v1295, %v1296
        %v1300 = vsel %vm424, %v1294, %v1295
        %v1301 = vsel %vm424, %v1297, %v1294
        %v1302 = vsel %vm429, %v1300, 0.0
        %v1303 = vsel %vm430, %v1299, 0.0
        %v1304 = vsel %vm431, %v1298, 0.0
        %v1305 = vsel %vm432, %v1301, 0.0
        %v1306 = vadd.f32 %v1290, %v1302
        %v1307 = vadd.f32 %v1291, %v1303
        %v1308 = vadd.f32 %v1292, %v1304
        %v1309 = vadd.f32 %v1293, %v1305
        %v1310 = vrot.slane %v1254, 1
        %v1311 = vrot.slane %v1255, 1
        %v1312 = vrot.slane %v1256, 1
        %v1313 = vrot.slane %v1257, 1
        %v1314 = vsel %vm424, %v1312, %v1313
        %v1315 = vsel %vm424, %v1311, %v1312
        %v1316 = vsel %vm424, %v1310, %v1311
        %v1317 = vsel %vm424, %v1313, %v1310
        %v1318 = vsel %vm749, %v1315, 0.0
        %v1319 = vsel %vm750, %v1314, 0.0
        %v1320 = vsel %vm751, %v1317, 0.0
        %v1321 = vsel %vm752, %v1316, 0.0
        %v1322 = vadd.f32 %v1306, %v1318
        %v1323 = vadd.f32 %v1307, %v1319
        %v1324 = vadd.f32 %v1308, %v1320
        %v1325 = vadd.f32 %v1309, %v1321
        %v1326 = vrot.slane %v1238, 5
        %v1327 = vrot.slane %v1239, 5
        %v1328 = vrot.slane %v1240, 5
        %v1329 = vrot.slane %v1241, 5
        %v1330 = vsel %vm765, %v1328, %v1329
        %v1331 = vsel %vm765, %v1327, %v1328
        %v1332 = vsel %vm765, %v1326, %v1327
        %v1333 = vsel %vm765, %v1329, %v1326
        %v1334 = vsel %vm770, %v1331, 0.0
        %v1335 = vsel %vm771, %v1330, 0.0
        %v1336 = vsel %vm772, %v1333, 0.0
        %v1337 = vsel %vm773, %v1332, 0.0
        %v1338 = vadd.f32 %v1322, %v1334
        %v1339 = vadd.f32 %v1323, %v1335
        %v1340 = vadd.f32 %v1324, %v1336
        %v1341 = vadd.f32 %v1325, %v1337
        %v1342 = vrot.slane %v1222, 7
        %v1343 = vrot.slane %v1223, 7
        %v1344 = vrot.slane %v1224, 7
        %v1345 = vrot.slane %v1225, 7
        %v1346 = vsel %vm399, %v1344, %v1345
        %v1347 = vsel %vm399, %v1343, %v1344
        %v1348 = vsel %vm399, %v1342, %v1343
        %v1349 = vsel %vm399, %v1345, %v1342
        %v1350 = vsel %vm790, %v1347, 0.0
        %v1351 = vsel %vm791, %v1346, 0.0
        %v1352 = vsel %vm792, %v1349, 0.0
        %v1353 = vsel %vm793, %v1348, 0.0
        %v1354 = vadd.f32 %v1338, %v1350
        %v1355 = vadd.f32 %v1339, %v1351
        %v1356 = vadd.f32 %v1340, %v1352
        %v1357 = vadd.f32 %v1341, %v1353
        %v1358 = vmul.f32 %v1354, %v236
        %v1359 = vmul.f32 %v1355, %v238
        %v1360 = vmul.f32 %v1356, %v240
        %v1361 = vmul.f32 %v1357, %v242
        %v1362 = vmul.f32 %v802, %v1078
        %v1363 = vmul.f32 %v803, %v1079
        %v1364 = vmul.f32 %v804, %v1080
        %v1365 = vmul.f32 %v805, %v1081
        %v1366 = vsub.f32 %v1358, %v1362
        %v1367 = vsub.f32 %v1359, %v1363
        %v1368 = vsub.f32 %v1360, %v1364
        %v1369 = vsub.f32 %v1361, %v1365
        %v1370 = vmul.f32 %v494, %v494
        %v1371 = vmul.f32 %v495, %v495
        %v1372 = vmul.f32 %v496, %v496
        %v1373 = vmul.f32 %v497, %v497
        %1374 = vrot.lane.b32.xlu0 %v1370, 127
        %v1375 = vpop.permute.xlu0 %1374
        %1376 = vrot.lane.b32.xlu0 %v1371, 127
        %v1377 = vpop.permute.xlu0 %1376
        %1378 = vrot.lane.b32.xlu0 %v1372, 127
        %v1379 = vpop.permute.xlu0 %1378
        %1380 = vrot.lane.b32.xlu0 %v1373, 127
        %v1381 = vpop.permute.xlu0 %1380
        %v1382 = vsel %vm352, %v1375, 0.0
        %v1383 = vsel %vm352, %v1377, 0.0
        %v1384 = vsel %vm352, %v1379, 0.0
        %v1385 = vsel %vm352, %v1381, 0.0
        %v1386 = vadd.f32 %v1370, %v1382
        %v1387 = vadd.f32 %v1371, %v1383
        %v1388 = vadd.f32 %v1372, %v1384
        %v1389 = vadd.f32 %v1373, %v1385
        %1390 = vrot.lane.b32.xlu0 %v1386, 126
        %v1391 = vpop.permute.xlu0 %1390
        %1392 = vrot.lane.b32.xlu0 %v1387, 126
        %v1393 = vpop.permute.xlu0 %1392
        %1394 = vrot.lane.b32.xlu0 %v1388, 126
        %v1395 = vpop.permute.xlu0 %1394
        %1396 = vrot.lane.b32.xlu0 %v1389, 126
        %v1397 = vpop.permute.xlu0 %1396
        %v1398 = vsel %vm369, %v1391, 0.0
        %v1399 = vsel %vm369, %v1393, 0.0
        %v1400 = vsel %vm369, %v1395, 0.0
        %v1401 = vsel %vm369, %v1397, 0.0
        %v1402 = vadd.f32 %v1386, %v1398
        %v1403 = vadd.f32 %v1387, %v1399
        %v1404 = vadd.f32 %v1388, %v1400
        %v1405 = vadd.f32 %v1389, %v1401
        %1406 = vrot.lane.b32.xlu0 %v1402, 124
        %v1407 = vpop.permute.xlu0 %1406
        %1408 = vrot.lane.b32.xlu0 %v1403, 124
        %v1409 = vpop.permute.xlu0 %1408
        %1410 = vrot.lane.b32.xlu0 %v1404, 124
        %v1411 = vpop.permute.xlu0 %1410
        %1412 = vrot.lane.b32.xlu0 %v1405, 124
        %v1413 = vpop.permute.xlu0 %1412
        %v1414 = vsel %vm538, %v1407, 0.0
        %v1415 = vsel %vm538, %v1409, 0.0
        %v1416 = vsel %vm538, %v1411, 0.0
        %v1417 = vsel %vm538, %v1413, 0.0
        %v1418 = vadd.f32 %v1402, %v1414
        %v1419 = vadd.f32 %v1403, %v1415
        %v1420 = vadd.f32 %v1404, %v1416
        %v1421 = vadd.f32 %v1405, %v1417
        %1422 = vrot.lane.b32.xlu0 %v1418, 120
        %v1423 = vpop.permute.xlu0 %1422
        %1424 = vrot.lane.b32.xlu0 %v1419, 120
        %v1425 = vpop.permute.xlu0 %1424
        %1426 = vrot.lane.b32.xlu0 %v1420, 120
        %v1427 = vpop.permute.xlu0 %1426
        %1428 = vrot.lane.b32.xlu0 %v1421, 120
        %v1429 = vpop.permute.xlu0 %1428
        %v1430 = vsel %vm555, %v1423, 0.0
        %v1431 = vsel %vm555, %v1425, 0.0
        %v1432 = vsel %vm555, %v1427, 0.0
        %v1433 = vsel %vm555, %v1429, 0.0
        %v1434 = vadd.f32 %v1418, %v1430
        %v1435 = vadd.f32 %v1419, %v1431
        %v1436 = vadd.f32 %v1420, %v1432
        %v1437 = vadd.f32 %v1421, %v1433
        %1438 = vrot.lane.b32.xlu0 %v1434, 15
        %v1439 = vpop.permute.xlu0 %1438
        %1440 = vrot.lane.b32.xlu0 %v1435, 15
        %v1441 = vpop.permute.xlu0 %1440
        %1442 = vrot.lane.b32.xlu0 %v1436, 15
        %v1443 = vpop.permute.xlu0 %1442
        %1444 = vrot.lane.b32.xlu0 %v1437, 15
        %v1445 = vpop.permute.xlu0 %1444
        %v1446 = vsel %vm572, %v1439, 0.0
        %v1447 = vsel %vm572, %v1441, 0.0
        %v1448 = vsel %vm572, %v1443, 0.0
        %v1449 = vsel %vm572, %v1445, 0.0
        %1450 = vrot.lane.b32.xlu0 %v1418, 127
        %v1451 = vpop.permute.xlu0 %1450
        %1452 = vrot.lane.b32.xlu0 %v1419, 127
        %v1453 = vpop.permute.xlu0 %1452
        %1454 = vrot.lane.b32.xlu0 %v1420, 127
        %v1455 = vpop.permute.xlu0 %1454
        %1456 = vrot.lane.b32.xlu0 %v1421, 127
        %v1457 = vpop.permute.xlu0 %1456
        %v1458 = vsel %vm352, %v1451, 0.0
        %v1459 = vsel %vm352, %v1453, 0.0
        %v1460 = vsel %vm352, %v1455, 0.0
        %v1461 = vsel %vm352, %v1457, 0.0
        %v1462 = vadd.f32 %v1446, %v1458
        %v1463 = vadd.f32 %v1447, %v1459
        %v1464 = vadd.f32 %v1448, %v1460
        %v1465 = vadd.f32 %v1449, %v1461
        %1466 = vrot.lane.b32.xlu0 %v1402, 119
        %v1467 = vpop.permute.xlu0 %1466
        %1468 = vrot.lane.b32.xlu0 %v1403, 119
        %v1469 = vpop.permute.xlu0 %1468
        %1470 = vrot.lane.b32.xlu0 %v1404, 119
        %v1471 = vpop.permute.xlu0 %1470
        %1472 = vrot.lane.b32.xlu0 %v1405, 119
        %v1473 = vpop.permute.xlu0 %1472
        %v1474 = vsel %vm601, %v1467, 0.0
        %v1475 = vsel %vm601, %v1469, 0.0
        %v1476 = vsel %vm601, %v1471, 0.0
        %v1477 = vsel %vm601, %v1473, 0.0
        %v1478 = vadd.f32 %v1462, %v1474
        %v1479 = vadd.f32 %v1463, %v1475
        %v1480 = vadd.f32 %v1464, %v1476
        %v1481 = vadd.f32 %v1465, %v1477
        %1482 = vrot.lane.b32.xlu0 %v1386, 115
        %v1483 = vpop.permute.xlu0 %1482
        %1484 = vrot.lane.b32.xlu0 %v1387, 115
        %v1485 = vpop.permute.xlu0 %1484
        %1486 = vrot.lane.b32.xlu0 %v1388, 115
        %v1487 = vpop.permute.xlu0 %1486
        %1488 = vrot.lane.b32.xlu0 %v1389, 115
        %v1489 = vpop.permute.xlu0 %1488
        %v1490 = vsel %vm618, %v1483, 0.0
        %v1491 = vsel %vm618, %v1485, 0.0
        %v1492 = vsel %vm618, %v1487, 0.0
        %v1493 = vsel %vm618, %v1489, 0.0
        %v1494 = vadd.f32 %v1478, %v1490
        %v1495 = vadd.f32 %v1479, %v1491
        %v1496 = vadd.f32 %v1480, %v1492
        %v1497 = vadd.f32 %v1481, %v1493
        %1498 = vrot.lane.b32.xlu0 %v1370, 113
        %v1499 = vpop.permute.xlu0 %1498
        %1500 = vrot.lane.b32.xlu0 %v1371, 113
        %v1501 = vpop.permute.xlu0 %1500
        %1502 = vrot.lane.b32.xlu0 %v1372, 113
        %v1503 = vpop.permute.xlu0 %1502
        %1504 = vrot.lane.b32.xlu0 %v1373, 113
        %v1505 = vpop.permute.xlu0 %1504
        %v1506 = vsel %vm635, %v1499, 0.0
        %v1507 = vsel %vm635, %v1501, 0.0
        %v1508 = vsel %vm635, %v1503, 0.0
        %v1509 = vsel %vm635, %v1505, 0.0
        %v1510 = vadd.f32 %v1494, %v1506
        %v1511 = vadd.f32 %v1495, %v1507
        %v1512 = vadd.f32 %v1496, %v1508
        %v1513 = vadd.f32 %v1497, %v1509
        %v1514 = vrot.slane %v1510, 1
        %v1515 = vrot.slane %v1511, 1
        %v1516 = vrot.slane %v1512, 1
        %v1517 = vrot.slane %v1513, 1
        %v1518 = vsel %vm424, %v1516, %v1517
        %v1519 = vsel %vm424, %v1515, %v1516
        %v1520 = vsel %vm424, %v1514, %v1515
        %v1521 = vsel %vm424, %v1517, %v1514
        %v1522 = vsel %vm429, %v1520, 0.0
        %v1523 = vsel %vm430, %v1519, 0.0
        %v1524 = vsel %vm431, %v1518, 0.0
        %v1525 = vsel %vm432, %v1521, 0.0
        %v1526 = vadd.f32 %v1510, %v1522
        %v1527 = vadd.f32 %v1511, %v1523
        %v1528 = vadd.f32 %v1512, %v1524
        %v1529 = vadd.f32 %v1513, %v1525
        %v1530 = vrot.slane %v1526, 2
        %v1531 = vrot.slane %v1527, 2
        %v1532 = vrot.slane %v1528, 2
        %v1533 = vrot.slane %v1529, 2
        %v1534 = vsel %vm445, %v1532, %v1533
        %v1535 = vsel %vm445, %v1531, %v1532
        %v1536 = vsel %vm445, %v1530, %v1531
        %v1537 = vsel %vm445, %v1533, %v1530
        %v1538 = vsel %vm450, %v1536, 0.0
        %v1539 = vsel %vm451, %v1535, 0.0
        %v1540 = vsel %vm452, %v1534, 0.0
        %v1541 = vsel %vm453, %v1537, 0.0
        %v1542 = vadd.f32 %v1526, %v1538
        %v1543 = vadd.f32 %v1527, %v1539
        %v1544 = vadd.f32 %v1528, %v1540
        %v1545 = vadd.f32 %v1529, %v1541
        %v1546 = vrot.slane %v1542, 4
        %v1547 = vrot.slane %v1543, 4
        %v1548 = vrot.slane %v1544, 4
        %v1549 = vrot.slane %v1545, 4
        %v1550 = vsel %vm680, %v1548, %v1549
        %v1551 = vsel %vm680, %v1547, %v1548
        %v1552 = vsel %vm680, %v1546, %v1547
        %v1553 = vsel %vm680, %v1549, %v1546
        %v1554 = vsel %vm685, %v1552, 0.0
        %v1555 = vsel %vm686, %v1551, 0.0
        %v1556 = vsel %vm687, %v1550, 0.0
        %v1557 = vsel %vm688, %v1553, 0.0
        %v1558 = vadd.f32 %v1542, %v1554
        %v1559 = vadd.f32 %v1543, %v1555
        %v1560 = vadd.f32 %v1544, %v1556
        %v1561 = vadd.f32 %v1545, %v1557
        %v1562 = vsel %vm697, %v1559, 0.0
        %v1563 = vsel %vm698, %v1560, 0.0
        %v1564 = vsel %vm699, %v1561, 0.0
        %v1565 = vsel %vm700, %v1558, 0.0
        %v1566 = vadd.f32 %v1558, %v1562
        %v1567 = vadd.f32 %v1559, %v1563
        %v1568 = vadd.f32 %v1560, %v1564
        %v1569 = vadd.f32 %v1561, %v1565
        %v1570 = vrot.slane %v1566, 1
        %v1571 = vrot.slane %v1567, 1
        %v1572 = vrot.slane %v1568, 1
        %v1573 = vrot.slane %v1569, 1
        %v1574 = vsel %vm424, %v1572, %v1573
        %v1575 = vsel %vm424, %v1571, %v1572
        %v1576 = vsel %vm424, %v1570, %v1571
        %v1577 = vsel %vm424, %v1573, %v1570
        %v1578 = vsel %vm717, %v1574, 0.0
        %v1579 = vsel %vm718, %v1577, 0.0
        %v1580 = vsel %vm719, %v1576, 0.0
        %v1581 = vsel %vm720, %v1575, 0.0
        %v1582 = vrot.slane %v1558, 1
        %v1583 = vrot.slane %v1559, 1
        %v1584 = vrot.slane %v1560, 1
        %v1585 = vrot.slane %v1561, 1
        %v1586 = vsel %vm424, %v1584, %v1585
        %v1587 = vsel %vm424, %v1583, %v1584
        %v1588 = vsel %vm424, %v1582, %v1583
        %v1589 = vsel %vm424, %v1585, %v1582
        %v1590 = vsel %vm429, %v1588, 0.0
        %v1591 = vsel %vm430, %v1587, 0.0
        %v1592 = vsel %vm431, %v1586, 0.0
        %v1593 = vsel %vm432, %v1589, 0.0
        %v1594 = vadd.f32 %v1578, %v1590
        %v1595 = vadd.f32 %v1579, %v1591
        %v1596 = vadd.f32 %v1580, %v1592
        %v1597 = vadd.f32 %v1581, %v1593
        %v1598 = vrot.slane %v1542, 1
        %v1599 = vrot.slane %v1543, 1
        %v1600 = vrot.slane %v1544, 1
        %v1601 = vrot.slane %v1545, 1
        %v1602 = vsel %vm424, %v1600, %v1601
        %v1603 = vsel %vm424, %v1599, %v1600
        %v1604 = vsel %vm424, %v1598, %v1599
        %v1605 = vsel %vm424, %v1601, %v1598
        %v1606 = vsel %vm749, %v1603, 0.0
        %v1607 = vsel %vm750, %v1602, 0.0
        %v1608 = vsel %vm751, %v1605, 0.0
        %v1609 = vsel %vm752, %v1604, 0.0
        %v1610 = vadd.f32 %v1594, %v1606
        %v1611 = vadd.f32 %v1595, %v1607
        %v1612 = vadd.f32 %v1596, %v1608
        %v1613 = vadd.f32 %v1597, %v1609
        %v1614 = vrot.slane %v1526, 5
        %v1615 = vrot.slane %v1527, 5
        %v1616 = vrot.slane %v1528, 5
        %v1617 = vrot.slane %v1529, 5
        %v1618 = vsel %vm765, %v1616, %v1617
        %v1619 = vsel %vm765, %v1615, %v1616
        %v1620 = vsel %vm765, %v1614, %v1615
        %v1621 = vsel %vm765, %v1617, %v1614
        %v1622 = vsel %vm770, %v1619, 0.0
        %v1623 = vsel %vm771, %v1618, 0.0
        %v1624 = vsel %vm772, %v1621, 0.0
        %v1625 = vsel %vm773, %v1620, 0.0
        %v1626 = vadd.f32 %v1610, %v1622
        %v1627 = vadd.f32 %v1611, %v1623
        %v1628 = vadd.f32 %v1612, %v1624
        %v1629 = vadd.f32 %v1613, %v1625
        %v1630 = vrot.slane %v1510, 7
        %v1631 = vrot.slane %v1511, 7
        %v1632 = vrot.slane %v1512, 7
        %v1633 = vrot.slane %v1513, 7
        %v1634 = vsel %vm399, %v1632, %v1633
        %v1635 = vsel %vm399, %v1631, %v1632
        %v1636 = vsel %vm399, %v1630, %v1631
        %v1637 = vsel %vm399, %v1633, %v1630
        %v1638 = vsel %vm790, %v1635, 0.0
        %v1639 = vsel %vm791, %v1634, 0.0
        %v1640 = vsel %vm792, %v1637, 0.0
        %v1641 = vsel %vm793, %v1636, 0.0
        %v1642 = vadd.f32 %v1626, %v1638
        %v1643 = vadd.f32 %v1627, %v1639
        %v1644 = vadd.f32 %v1628, %v1640
        %v1645 = vadd.f32 %v1629, %v1641
        %v1646 = vmul.f32 %v1642, %v236
        %v1647 = vmul.f32 %v1643, %v238
        %v1648 = vmul.f32 %v1644, %v240
        %v1649 = vmul.f32 %v1645, %v242
        %v1650 = vmul.f32 %v802, %v802
        %v1651 = vmul.f32 %v803, %v803
        %v1652 = vmul.f32 %v804, %v804
        %v1653 = vmul.f32 %v805, %v805
        %v1654 = vsub.f32 %v1646, %v1650
        %v1655 = vsub.f32 %v1647, %v1651
        %v1656 = vsub.f32 %v1648, %v1652
        %v1657 = vsub.f32 %v1649, %v1653
        %v1658 = vadd.f32 %v1654, 0.001
        %v1659 = vadd.f32 %v1655, 0.001
        %v1660 = vadd.f32 %v1656, 0.001
        %v1661 = vadd.f32 %v1657, 0.001
        %v1662 = vrcp.pop %v1658
        %v1663 = vmul.f32 %v1366, %v1662
        %v1664 = vrcp.pop %v1659
        %v1665 = vmul.f32 %v1367, %v1664
        %v1666 = vrcp.pop %v1660
        %v1667 = vmul.f32 %v1368, %v1666
        %v1668 = vrcp.pop %v1661
        %v1669 = vmul.f32 %v1369, %v1668
        %v1670 = vmul.f32 %v1663, %v802
        %v1671 = vmul.f32 %v1665, %v803
        %v1672 = vmul.f32 %v1667, %v804
        %v1673 = vmul.f32 %v1669, %v805
        %v1674 = vsub.f32 %v1078, %v1670
        %v1675 = vsub.f32 %v1079, %v1671
        %v1676 = vsub.f32 %v1080, %v1672
        %v1677 = vsub.f32 %v1081, %v1673
        %1678 = vrot.lane.b32.xlu0 %v1663, 127
        %v1679 = vpop.permute.xlu0 %1678
        %1680 = vrot.lane.b32.xlu0 %v1665, 127
        %v1681 = vpop.permute.xlu0 %1680
        %1682 = vrot.lane.b32.xlu0 %v1667, 127
        %v1683 = vpop.permute.xlu0 %1682
        %1684 = vrot.lane.b32.xlu0 %v1669, 127
        %v1685 = vpop.permute.xlu0 %1684
        %v1686 = vsel %vm352, %v1679, 0.0
        %v1687 = vsel %vm352, %v1681, 0.0
        %v1688 = vsel %vm352, %v1683, 0.0
        %v1689 = vsel %vm352, %v1685, 0.0
        %v1690 = vadd.f32 %v1663, %v1686
        %v1691 = vadd.f32 %v1665, %v1687
        %v1692 = vadd.f32 %v1667, %v1688
        %v1693 = vadd.f32 %v1669, %v1689
        %1694 = vrot.lane.b32.xlu0 %v1690, 126
        %v1695 = vpop.permute.xlu0 %1694
        %1696 = vrot.lane.b32.xlu0 %v1691, 126
        %v1697 = vpop.permute.xlu0 %1696
        %1698 = vrot.lane.b32.xlu0 %v1692, 126
        %v1699 = vpop.permute.xlu0 %1698
        %1700 = vrot.lane.b32.xlu0 %v1693, 126
        %v1701 = vpop.permute.xlu0 %1700
        %v1702 = vsel %vm369, %v1695, 0.0
        %v1703 = vsel %vm369, %v1697, 0.0
        %v1704 = vsel %vm369, %v1699, 0.0
        %v1705 = vsel %vm369, %v1701, 0.0
        %v1706 = vadd.f32 %v1690, %v1702
        %v1707 = vadd.f32 %v1691, %v1703
        %v1708 = vadd.f32 %v1692, %v1704
        %v1709 = vadd.f32 %v1693, %v1705
        %1710 = vrot.lane.b32.xlu0 %v1706, 124
        %v1711 = vpop.permute.xlu0 %1710
        %1712 = vrot.lane.b32.xlu0 %v1707, 124
        %v1713 = vpop.permute.xlu0 %1712
        %1714 = vrot.lane.b32.xlu0 %v1708, 124
        %v1715 = vpop.permute.xlu0 %1714
        %1716 = vrot.lane.b32.xlu0 %v1709, 124
        %v1717 = vpop.permute.xlu0 %1716
        %v1718 = vsel %vm538, %v1711, 0.0
        %v1719 = vsel %vm538, %v1713, 0.0
        %v1720 = vsel %vm538, %v1715, 0.0
        %v1721 = vsel %vm538, %v1717, 0.0
        %v1722 = vadd.f32 %v1706, %v1718
        %v1723 = vadd.f32 %v1707, %v1719
        %v1724 = vadd.f32 %v1708, %v1720
        %v1725 = vadd.f32 %v1709, %v1721
        %1726 = vrot.lane.b32.xlu0 %v1722, 120
        %v1727 = vpop.permute.xlu0 %1726
        %1728 = vrot.lane.b32.xlu0 %v1723, 120
        %v1729 = vpop.permute.xlu0 %1728
        %1730 = vrot.lane.b32.xlu0 %v1724, 120
        %v1731 = vpop.permute.xlu0 %1730
        %1732 = vrot.lane.b32.xlu0 %v1725, 120
        %v1733 = vpop.permute.xlu0 %1732
        %v1734 = vsel %vm555, %v1727, 0.0
        %v1735 = vsel %vm555, %v1729, 0.0
        %v1736 = vsel %vm555, %v1731, 0.0
        %v1737 = vsel %vm555, %v1733, 0.0
        %v1738 = vadd.f32 %v1722, %v1734
        %v1739 = vadd.f32 %v1723, %v1735
        %v1740 = vadd.f32 %v1724, %v1736
        %v1741 = vadd.f32 %v1725, %v1737
        %1742 = vrot.lane.b32.xlu0 %v1738, 15
        %v1743 = vpop.permute.xlu0 %1742
        %1744 = vrot.lane.b32.xlu0 %v1739, 15
        %v1745 = vpop.permute.xlu0 %1744
        %1746 = vrot.lane.b32.xlu0 %v1740, 15
        %v1747 = vpop.permute.xlu0 %1746
        %1748 = vrot.lane.b32.xlu0 %v1741, 15
        %v1749 = vpop.permute.xlu0 %1748
        %v1750 = vsel %vm572, %v1743, 0.0
        %v1751 = vsel %vm572, %v1745, 0.0
        %v1752 = vsel %vm572, %v1747, 0.0
        %v1753 = vsel %vm572, %v1749, 0.0
        %1754 = vrot.lane.b32.xlu0 %v1722, 127
        %v1755 = vpop.permute.xlu0 %1754
        %1756 = vrot.lane.b32.xlu0 %v1723, 127
        %v1757 = vpop.permute.xlu0 %1756
        %1758 = vrot.lane.b32.xlu0 %v1724, 127
        %v1759 = vpop.permute.xlu0 %1758
        %1760 = vrot.lane.b32.xlu0 %v1725, 127
        %v1761 = vpop.permute.xlu0 %1760
        %v1762 = vsel %vm352, %v1755, 0.0
        %v1763 = vsel %vm352, %v1757, 0.0
        %v1764 = vsel %vm352, %v1759, 0.0
        %v1765 = vsel %vm352, %v1761, 0.0
        %v1766 = vadd.f32 %v1750, %v1762
        %v1767 = vadd.f32 %v1751, %v1763
        %v1768 = vadd.f32 %v1752, %v1764
        %v1769 = vadd.f32 %v1753, %v1765
        %1770 = vrot.lane.b32.xlu0 %v1706, 119
        %v1771 = vpop.permute.xlu0 %1770
        %1772 = vrot.lane.b32.xlu0 %v1707, 119
        %v1773 = vpop.permute.xlu0 %1772
        %1774 = vrot.lane.b32.xlu0 %v1708, 119
        %v1775 = vpop.permute.xlu0 %1774
        %1776 = vrot.lane.b32.xlu0 %v1709, 119
        %v1777 = vpop.permute.xlu0 %1776
        %v1778 = vsel %vm601, %v1771, 0.0
        %v1779 = vsel %vm601, %v1773, 0.0
        %v1780 = vsel %vm601, %v1775, 0.0
        %v1781 = vsel %vm601, %v1777, 0.0
        %v1782 = vadd.f32 %v1766, %v1778
        %v1783 = vadd.f32 %v1767, %v1779
        %v1784 = vadd.f32 %v1768, %v1780
        %v1785 = vadd.f32 %v1769, %v1781
        %1786 = vrot.lane.b32.xlu0 %v1690, 115
        %v1787 = vpop.permute.xlu0 %1786
        %1788 = vrot.lane.b32.xlu0 %v1691, 115
        %v1789 = vpop.permute.xlu0 %1788
        %1790 = vrot.lane.b32.xlu0 %v1692, 115
        %v1791 = vpop.permute.xlu0 %1790
        %1792 = vrot.lane.b32.xlu0 %v1693, 115
        %v1793 = vpop.permute.xlu0 %1792
        %v1794 = vsel %vm618, %v1787, 0.0
        %v1795 = vsel %vm618, %v1789, 0.0
        %v1796 = vsel %vm618, %v1791, 0.0
        %v1797 = vsel %vm618, %v1793, 0.0
        %v1798 = vadd.f32 %v1782, %v1794
        %v1799 = vadd.f32 %v1783, %v1795
        %v1800 = vadd.f32 %v1784, %v1796
        %v1801 = vadd.f32 %v1785, %v1797
        %1802 = vrot.lane.b32.xlu0 %v1663, 113
        %v1803 = vpop.permute.xlu0 %1802
        %1804 = vrot.lane.b32.xlu0 %v1665, 113
        %v1805 = vpop.permute.xlu0 %1804
        %1806 = vrot.lane.b32.xlu0 %v1667, 113
        %v1807 = vpop.permute.xlu0 %1806
        %1808 = vrot.lane.b32.xlu0 %v1669, 113
        %v1809 = vpop.permute.xlu0 %1808
        %v1810 = vsel %vm635, %v1803, 0.0
        %v1811 = vsel %vm635, %v1805, 0.0
        %v1812 = vsel %vm635, %v1807, 0.0
        %v1813 = vsel %vm635, %v1809, 0.0
        %v1814 = vadd.f32 %v1798, %v1810
        %v1815 = vadd.f32 %v1799, %v1811
        %v1816 = vadd.f32 %v1800, %v1812
        %v1817 = vadd.f32 %v1801, %v1813
        %v1818 = vrot.slane %v1814, 1
        %v1819 = vrot.slane %v1815, 1
        %v1820 = vrot.slane %v1816, 1
        %v1821 = vrot.slane %v1817, 1
        %v1822 = vsel %vm424, %v1820, %v1821
        %v1823 = vsel %vm424, %v1819, %v1820
        %v1824 = vsel %vm424, %v1818, %v1819
        %v1825 = vsel %vm424, %v1821, %v1818
        %v1826 = vsel %vm429, %v1824, 0.0
        %v1827 = vsel %vm430, %v1823, 0.0
        %v1828 = vsel %vm431, %v1822, 0.0
        %v1829 = vsel %vm432, %v1825, 0.0
        %v1830 = vadd.f32 %v1814, %v1826
        %v1831 = vadd.f32 %v1815, %v1827
        %v1832 = vadd.f32 %v1816, %v1828
        %v1833 = vadd.f32 %v1817, %v1829
        %v1834 = vrot.slane %v1830, 2
        %v1835 = vrot.slane %v1831, 2
        %v1836 = vrot.slane %v1832, 2
        %v1837 = vrot.slane %v1833, 2
        %v1838 = vsel %vm445, %v1836, %v1837
        %v1839 = vsel %vm445, %v1835, %v1836
        %v1840 = vsel %vm445, %v1834, %v1835
        %v1841 = vsel %vm445, %v1837, %v1834
        %v1842 = vsel %vm450, %v1840, 0.0
        %v1843 = vsel %vm451, %v1839, 0.0
        %v1844 = vsel %vm452, %v1838, 0.0
        %v1845 = vsel %vm453, %v1841, 0.0
        %v1846 = vadd.f32 %v1830, %v1842
        %v1847 = vadd.f32 %v1831, %v1843
        %v1848 = vadd.f32 %v1832, %v1844
        %v1849 = vadd.f32 %v1833, %v1845
        %v1850 = vrot.slane %v1846, 4
        %v1851 = vrot.slane %v1847, 4
        %v1852 = vrot.slane %v1848, 4
        %v1853 = vrot.slane %v1849, 4
        %v1854 = vsel %vm680, %v1852, %v1853
        %v1855 = vsel %vm680, %v1851, %v1852
        %v1856 = vsel %vm680, %v1850, %v1851
        %v1857 = vsel %vm680, %v1853, %v1850
        %v1858 = vsel %vm685, %v1856, 0.0
        %v1859 = vsel %vm686, %v1855, 0.0
        %v1860 = vsel %vm687, %v1854, 0.0
        %v1861 = vsel %vm688, %v1857, 0.0
        %v1862 = vadd.f32 %v1846, %v1858
        %v1863 = vadd.f32 %v1847, %v1859
        %v1864 = vadd.f32 %v1848, %v1860
        %v1865 = vadd.f32 %v1849, %v1861
        %v1866 = vsel %vm697, %v1863, 0.0
        %v1867 = vsel %vm698, %v1864, 0.0
        %v1868 = vsel %vm699, %v1865, 0.0
        %v1869 = vsel %vm700, %v1862, 0.0
        %v1870 = vadd.f32 %v1862, %v1866
        %v1871 = vadd.f32 %v1863, %v1867
        %v1872 = vadd.f32 %v1864, %v1868
        %v1873 = vadd.f32 %v1865, %v1869
        %v1874 = vrot.slane %v1870, 1
        %v1875 = vrot.slane %v1871, 1
        %v1876 = vrot.slane %v1872, 1
        %v1877 = vrot.slane %v1873, 1
        %v1878 = vsel %vm424, %v1876, %v1877
        %v1879 = vsel %vm424, %v1875, %v1876
        %v1880 = vsel %vm424, %v1874, %v1875
        %v1881 = vsel %vm424, %v1877, %v1874
        %v1882 = vsel %vm717, %v1878, 0.0
        %v1883 = vsel %vm718, %v1881, 0.0
        %v1884 = vsel %vm719, %v1880, 0.0
        %v1885 = vsel %vm720, %v1879, 0.0
        %v1886 = vrot.slane %v1862, 1
        %v1887 = vrot.slane %v1863, 1
        %v1888 = vrot.slane %v1864, 1
        %v1889 = vrot.slane %v1865, 1
        %v1890 = vsel %vm424, %v1888, %v1889
        %v1891 = vsel %vm424, %v1887, %v1888
        %v1892 = vsel %vm424, %v1886, %v1887
        %v1893 = vsel %vm424, %v1889, %v1886
        %v1894 = vsel %vm429, %v1892, 0.0
        %v1895 = vsel %vm430, %v1891, 0.0
        %v1896 = vsel %vm431, %v1890, 0.0
        %v1897 = vsel %vm432, %v1893, 0.0
        %v1898 = vadd.f32 %v1882, %v1894
        %v1899 = vadd.f32 %v1883, %v1895
        %v1900 = vadd.f32 %v1884, %v1896
        %v1901 = vadd.f32 %v1885, %v1897
        %v1902 = vrot.slane %v1846, 1
        %v1903 = vrot.slane %v1847, 1
        %v1904 = vrot.slane %v1848, 1
        %v1905 = vrot.slane %v1849, 1
        %v1906 = vsel %vm424, %v1904, %v1905
        %v1907 = vsel %vm424, %v1903, %v1904
        %v1908 = vsel %vm424, %v1902, %v1903
        %v1909 = vsel %vm424, %v1905, %v1902
        %v1910 = vsel %vm749, %v1907, 0.0
        %v1911 = vsel %vm750, %v1906, 0.0
        %v1912 = vsel %vm751, %v1909, 0.0
        %v1913 = vsel %vm752, %v1908, 0.0
        %v1914 = vadd.f32 %v1898, %v1910
        %v1915 = vadd.f32 %v1899, %v1911
        %v1916 = vadd.f32 %v1900, %v1912
        %v1917 = vadd.f32 %v1901, %v1913
        %v1918 = vrot.slane %v1830, 5
        %v1919 = vrot.slane %v1831, 5
        %v1920 = vrot.slane %v1832, 5
        %v1921 = vrot.slane %v1833, 5
        %v1922 = vsel %vm765, %v1920, %v1921
        %v1923 = vsel %vm765, %v1919, %v1920
        %v1924 = vsel %vm765, %v1918, %v1919
        %v1925 = vsel %vm765, %v1921, %v1918
        %v1926 = vsel %vm770, %v1923, 0.0
        %v1927 = vsel %vm771, %v1922, 0.0
        %v1928 = vsel %vm772, %v1925, 0.0
        %v1929 = vsel %vm773, %v1924, 0.0
        %v1930 = vadd.f32 %v1914, %v1926
        %v1931 = vadd.f32 %v1915, %v1927
        %v1932 = vadd.f32 %v1916, %v1928
        %v1933 = vadd.f32 %v1917, %v1929
        %v1934 = vrot.slane %v1814, 7
        %v1935 = vrot.slane %v1815, 7
        %v1936 = vrot.slane %v1816, 7
        %v1937 = vrot.slane %v1817, 7
        %v1938 = vsel %vm399, %v1936, %v1937
        %v1939 = vsel %vm399, %v1935, %v1936
        %v1940 = vsel %vm399, %v1934, %v1935
        %v1941 = vsel %vm399, %v1937, %v1934
        %v1942 = vsel %vm790, %v1939, 0.0
        %v1943 = vsel %vm791, %v1938, 0.0
        %v1944 = vsel %vm792, %v1941, 0.0
        %v1945 = vsel %vm793, %v1940, 0.0
        %v1946 = vadd.f32 %v1930, %v1942
        %v1947 = vadd.f32 %v1931, %v1943
        %v1948 = vadd.f32 %v1932, %v1944
        %v1949 = vadd.f32 %v1933, %v1945
        %v1950 = vmul.f32 %v1946, %v236
        %v1951 = vmul.f32 %v1947, %v238
        %v1952 = vmul.f32 %v1948, %v240
        %v1953 = vmul.f32 %v1949, %v242
        %v1954 = vmul.f32 %v1950, %v494
        %v1955 = vmul.f32 %v1951, %v495
        %v1956 = vmul.f32 %v1952, %v496
        %v1957 = vmul.f32 %v1953, %v497
        %1958 = vrot.lane.b32.xlu0 %v1674, 127
        %v1959 = vpop.permute.xlu0 %1958
        %1960 = vrot.lane.b32.xlu0 %v1675, 127
        %v1961 = vpop.permute.xlu0 %1960
        %1962 = vrot.lane.b32.xlu0 %v1676, 127
        %v1963 = vpop.permute.xlu0 %1962
        %1964 = vrot.lane.b32.xlu0 %v1677, 127
        %v1965 = vpop.permute.xlu0 %1964
        %v1966 = vsel %vm352, %v1959, 0.0
        %v1967 = vsel %vm352, %v1961, 0.0
        %v1968 = vsel %vm352, %v1963, 0.0
        %v1969 = vsel %vm352, %v1965, 0.0
        %v1970 = vadd.f32 %v1674, %v1966
        %v1971 = vadd.f32 %v1675, %v1967
        %v1972 = vadd.f32 %v1676, %v1968
        %v1973 = vadd.f32 %v1677, %v1969
        %1974 = vrot.lane.b32.xlu0 %v1970, 126
        %v1975 = vpop.permute.xlu0 %1974
        %1976 = vrot.lane.b32.xlu0 %v1971, 126
        %v1977 = vpop.permute.xlu0 %1976
        %1978 = vrot.lane.b32.xlu0 %v1972, 126
        %v1979 = vpop.permute.xlu0 %1978
        %1980 = vrot.lane.b32.xlu0 %v1973, 126
        %v1981 = vpop.permute.xlu0 %1980
        %v1982 = vsel %vm369, %v1975, 0.0
        %v1983 = vsel %vm369, %v1977, 0.0
        %v1984 = vsel %vm369, %v1979, 0.0
        %v1985 = vsel %vm369, %v1981, 0.0
        %v1986 = vadd.f32 %v1970, %v1982
        %v1987 = vadd.f32 %v1971, %v1983
        %v1988 = vadd.f32 %v1972, %v1984
        %v1989 = vadd.f32 %v1973, %v1985
        %1990 = vrot.lane.b32.xlu0 %v1986, 124
        %v1991 = vpop.permute.xlu0 %1990
        %1992 = vrot.lane.b32.xlu0 %v1987, 124
        %v1993 = vpop.permute.xlu0 %1992
        %1994 = vrot.lane.b32.xlu0 %v1988, 124
        %v1995 = vpop.permute.xlu0 %1994
        %1996 = vrot.lane.b32.xlu0 %v1989, 124
        %v1997 = vpop.permute.xlu0 %1996
        %v1998 = vsel %vm538, %v1991, 0.0
        %v1999 = vsel %vm538, %v1993, 0.0
        %v2000 = vsel %vm538, %v1995, 0.0
        %v2001 = vsel %vm538, %v1997, 0.0
        %v2002 = vadd.f32 %v1986, %v1998
        %v2003 = vadd.f32 %v1987, %v1999
        %v2004 = vadd.f32 %v1988, %v2000
        %v2005 = vadd.f32 %v1989, %v2001
        %2006 = vrot.lane.b32.xlu0 %v2002, 120
        %v2007 = vpop.permute.xlu0 %2006
        %2008 = vrot.lane.b32.xlu0 %v2003, 120
        %v2009 = vpop.permute.xlu0 %2008
        %2010 = vrot.lane.b32.xlu0 %v2004, 120
        %v2011 = vpop.permute.xlu0 %2010
        %2012 = vrot.lane.b32.xlu0 %v2005, 120
        %v2013 = vpop.permute.xlu0 %2012
        %v2014 = vsel %vm555, %v2007, 0.0
        %v2015 = vsel %vm555, %v2009, 0.0
        %v2016 = vsel %vm555, %v2011, 0.0
        %v2017 = vsel %vm555, %v2013, 0.0
        %v2018 = vadd.f32 %v2002, %v2014
        %v2019 = vadd.f32 %v2003, %v2015
        %v2020 = vadd.f32 %v2004, %v2016
        %v2021 = vadd.f32 %v2005, %v2017
        %2022 = vrot.lane.b32.xlu0 %v2018, 15
        %v2023 = vpop.permute.xlu0 %2022
        %2024 = vrot.lane.b32.xlu0 %v2019, 15
        %v2025 = vpop.permute.xlu0 %2024
        %2026 = vrot.lane.b32.xlu0 %v2020, 15
        %v2027 = vpop.permute.xlu0 %2026
        %2028 = vrot.lane.b32.xlu0 %v2021, 15
        %v2029 = vpop.permute.xlu0 %2028
        %v2030 = vsel %vm572, %v2023, 0.0
        %v2031 = vsel %vm572, %v2025, 0.0
        %v2032 = vsel %vm572, %v2027, 0.0
        %v2033 = vsel %vm572, %v2029, 0.0
        %2034 = vrot.lane.b32.xlu0 %v2002, 127
        %v2035 = vpop.permute.xlu0 %2034
        %2036 = vrot.lane.b32.xlu0 %v2003, 127
        %v2037 = vpop.permute.xlu0 %2036
        %2038 = vrot.lane.b32.xlu0 %v2004, 127
        %v2039 = vpop.permute.xlu0 %2038
        %2040 = vrot.lane.b32.xlu0 %v2005, 127
        %v2041 = vpop.permute.xlu0 %2040
        %v2042 = vsel %vm352, %v2035, 0.0
        %v2043 = vsel %vm352, %v2037, 0.0
        %v2044 = vsel %vm352, %v2039, 0.0
        %v2045 = vsel %vm352, %v2041, 0.0
        %v2046 = vadd.f32 %v2030, %v2042
        %v2047 = vadd.f32 %v2031, %v2043
        %v2048 = vadd.f32 %v2032, %v2044
        %v2049 = vadd.f32 %v2033, %v2045
        %2050 = vrot.lane.b32.xlu0 %v1986, 119
        %v2051 = vpop.permute.xlu0 %2050
        %2052 = vrot.lane.b32.xlu0 %v1987, 119
        %v2053 = vpop.permute.xlu0 %2052
        %2054 = vrot.lane.b32.xlu0 %v1988, 119
        %v2055 = vpop.permute.xlu0 %2054
        %2056 = vrot.lane.b32.xlu0 %v1989, 119
        %v2057 = vpop.permute.xlu0 %2056
        %v2058 = vsel %vm601, %v2051, 0.0
        %v2059 = vsel %vm601, %v2053, 0.0
        %v2060 = vsel %vm601, %v2055, 0.0
        %v2061 = vsel %vm601, %v2057, 0.0
        %v2062 = vadd.f32 %v2046, %v2058
        %v2063 = vadd.f32 %v2047, %v2059
        %v2064 = vadd.f32 %v2048, %v2060
        %v2065 = vadd.f32 %v2049, %v2061
        %2066 = vrot.lane.b32.xlu0 %v1970, 115
        %v2067 = vpop.permute.xlu0 %2066
        %2068 = vrot.lane.b32.xlu0 %v1971, 115
        %v2069 = vpop.permute.xlu0 %2068
        %2070 = vrot.lane.b32.xlu0 %v1972, 115
        %v2071 = vpop.permute.xlu0 %2070
        %2072 = vrot.lane.b32.xlu0 %v1973, 115
        %v2073 = vpop.permute.xlu0 %2072
        %v2074 = vsel %vm618, %v2067, 0.0
        %v2075 = vsel %vm618, %v2069, 0.0
        %v2076 = vsel %vm618, %v2071, 0.0
        %v2077 = vsel %vm618, %v2073, 0.0
        %v2078 = vadd.f32 %v2062, %v2074
        %v2079 = vadd.f32 %v2063, %v2075
        %v2080 = vadd.f32 %v2064, %v2076
        %v2081 = vadd.f32 %v2065, %v2077
        %2082 = vrot.lane.b32.xlu0 %v1674, 113
        %v2083 = vpop.permute.xlu0 %2082
        %2084 = vrot.lane.b32.xlu0 %v1675, 113
        %v2085 = vpop.permute.xlu0 %2084
        %2086 = vrot.lane.b32.xlu0 %v1676, 113
        %v2087 = vpop.permute.xlu0 %2086
        %2088 = vrot.lane.b32.xlu0 %v1677, 113
        %v2089 = vpop.permute.xlu0 %2088
        %v2090 = vsel %vm635, %v2083, 0.0
        %v2091 = vsel %vm635, %v2085, 0.0
        %v2092 = vsel %vm635, %v2087, 0.0
        %v2093 = vsel %vm635, %v2089, 0.0
        %v2094 = vadd.f32 %v2078, %v2090
        %v2095 = vadd.f32 %v2079, %v2091
        %v2096 = vadd.f32 %v2080, %v2092
        %v2097 = vadd.f32 %v2081, %v2093
        %v2098 = vrot.slane %v2094, 1
        %v2099 = vrot.slane %v2095, 1
        %v2100 = vrot.slane %v2096, 1
        %v2101 = vrot.slane %v2097, 1
        %v2102 = vsel %vm424, %v2100, %v2101
        %v2103 = vsel %vm424, %v2099, %v2100
        %v2104 = vsel %vm424, %v2098, %v2099
        %v2105 = vsel %vm424, %v2101, %v2098
        %v2106 = vsel %vm429, %v2104, 0.0
        %v2107 = vsel %vm430, %v2103, 0.0
        %v2108 = vsel %vm431, %v2102, 0.0
        %v2109 = vsel %vm432, %v2105, 0.0
        %v2110 = vadd.f32 %v2094, %v2106
        %v2111 = vadd.f32 %v2095, %v2107
        %v2112 = vadd.f32 %v2096, %v2108
        %v2113 = vadd.f32 %v2097, %v2109
        %v2114 = vrot.slane %v2110, 2
        %v2115 = vrot.slane %v2111, 2
        %v2116 = vrot.slane %v2112, 2
        %v2117 = vrot.slane %v2113, 2
        %v2118 = vsel %vm445, %v2116, %v2117
        %v2119 = vsel %vm445, %v2115, %v2116
        %v2120 = vsel %vm445, %v2114, %v2115
        %v2121 = vsel %vm445, %v2117, %v2114
        %v2122 = vsel %vm450, %v2120, 0.0
        %v2123 = vsel %vm451, %v2119, 0.0
        %v2124 = vsel %vm452, %v2118, 0.0
        %v2125 = vsel %vm453, %v2121, 0.0
        %v2126 = vadd.f32 %v2110, %v2122
        %v2127 = vadd.f32 %v2111, %v2123
        %v2128 = vadd.f32 %v2112, %v2124
        %v2129 = vadd.f32 %v2113, %v2125
        %v2130 = vrot.slane %v2126, 4
        %v2131 = vrot.slane %v2127, 4
        %v2132 = vrot.slane %v2128, 4
        %v2133 = vrot.slane %v2129, 4
        %v2134 = vsel %vm680, %v2132, %v2133
        %v2135 = vsel %vm680, %v2131, %v2132
        %v2136 = vsel %vm680, %v2130, %v2131
        %v2137 = vsel %vm680, %v2133, %v2130
        %v2138 = vsel %vm685, %v2136, 0.0
        %v2139 = vsel %vm686, %v2135, 0.0
        %v2140 = vsel %vm687, %v2134, 0.0
        %v2141 = vsel %vm688, %v2137, 0.0
        %v2142 = vadd.f32 %v2126, %v2138
        %v2143 = vadd.f32 %v2127, %v2139
        %v2144 = vadd.f32 %v2128, %v2140
        %v2145 = vadd.f32 %v2129, %v2141
        %v2146 = vsel %vm697, %v2143, 0.0
        %v2147 = vsel %vm698, %v2144, 0.0
        %v2148 = vsel %vm699, %v2145, 0.0
        %v2149 = vsel %vm700, %v2142, 0.0
        %v2150 = vadd.f32 %v2142, %v2146
        %v2151 = vadd.f32 %v2143, %v2147
        %v2152 = vadd.f32 %v2144, %v2148
        %v2153 = vadd.f32 %v2145, %v2149
        %v2154 = vrot.slane %v2150, 1
        %v2155 = vrot.slane %v2151, 1
        %v2156 = vrot.slane %v2152, 1
        %v2157 = vrot.slane %v2153, 1
        %v2158 = vsel %vm424, %v2156, %v2157
        %v2159 = vsel %vm424, %v2155, %v2156
        %v2160 = vsel %vm424, %v2154, %v2155
        %v2161 = vsel %vm424, %v2157, %v2154
        %v2162 = vsel %vm717, %v2158, 0.0
        %v2163 = vsel %vm718, %v2161, 0.0
        %v2164 = vsel %vm719, %v2160, 0.0
        %v2165 = vsel %vm720, %v2159, 0.0
        %v2166 = vrot.slane %v2142, 1
        %v2167 = vrot.slane %v2143, 1
        %v2168 = vrot.slane %v2144, 1
        %v2169 = vrot.slane %v2145, 1
        %v2170 = vsel %vm424, %v2168, %v2169
        %v2171 = vsel %vm424, %v2167, %v2168
        %v2172 = vsel %vm424, %v2166, %v2167
        %v2173 = vsel %vm424, %v2169, %v2166
        %v2174 = vsel %vm429, %v2172, 0.0
        %v2175 = vsel %vm430, %v2171, 0.0
        %v2176 = vsel %vm431, %v2170, 0.0
        %v2177 = vsel %vm432, %v2173, 0.0
        %v2178 = vadd.f32 %v2162, %v2174
        %v2179 = vadd.f32 %v2163, %v2175
        %v2180 = vadd.f32 %v2164, %v2176
        %v2181 = vadd.f32 %v2165, %v2177
        %v2182 = vrot.slane %v2126, 1
        %v2183 = vrot.slane %v2127, 1
        %v2184 = vrot.slane %v2128, 1
        %v2185 = vrot.slane %v2129, 1
        %v2186 = vsel %vm424, %v2184, %v2185
        %v2187 = vsel %vm424, %v2183, %v2184
        %v2188 = vsel %vm424, %v2182, %v2183
        %v2189 = vsel %vm424, %v2185, %v2182
        %v2190 = vsel %vm749, %v2187, 0.0
        %v2191 = vsel %vm750, %v2186, 0.0
        %v2192 = vsel %vm751, %v2189, 0.0
        %v2193 = vsel %vm752, %v2188, 0.0
        %v2194 = vadd.f32 %v2178, %v2190
        %v2195 = vadd.f32 %v2179, %v2191
        %v2196 = vadd.f32 %v2180, %v2192
        %v2197 = vadd.f32 %v2181, %v2193
        %v2198 = vrot.slane %v2110, 5
        %v2199 = vrot.slane %v2111, 5
        %v2200 = vrot.slane %v2112, 5
        %v2201 = vrot.slane %v2113, 5
        %v2202 = vsel %vm765, %v2200, %v2201
        %v2203 = vsel %vm765, %v2199, %v2200
        %v2204 = vsel %vm765, %v2198, %v2199
        %v2205 = vsel %vm765, %v2201, %v2198
        %v2206 = vsel %vm770, %v2203, 0.0
        %v2207 = vsel %vm771, %v2202, 0.0
        %v2208 = vsel %vm772, %v2205, 0.0
        %v2209 = vsel %vm773, %v2204, 0.0
        %v2210 = vadd.f32 %v2194, %v2206
        %v2211 = vadd.f32 %v2195, %v2207
        %v2212 = vadd.f32 %v2196, %v2208
        %v2213 = vadd.f32 %v2197, %v2209
        %v2214 = vrot.slane %v2094, 7
        %v2215 = vrot.slane %v2095, 7
        %v2216 = vrot.slane %v2096, 7
        %v2217 = vrot.slane %v2097, 7
        %v2218 = vsel %vm399, %v2216, %v2217
        %v2219 = vsel %vm399, %v2215, %v2216
        %v2220 = vsel %vm399, %v2214, %v2215
        %v2221 = vsel %vm399, %v2217, %v2214
        %v2222 = vsel %vm790, %v2219, 0.0
        %v2223 = vsel %vm791, %v2218, 0.0
        %v2224 = vsel %vm792, %v2221, 0.0
        %v2225 = vsel %vm793, %v2220, 0.0
        %v2226 = vadd.f32 %v2210, %v2222
        %v2227 = vadd.f32 %v2211, %v2223
        %v2228 = vadd.f32 %v2212, %v2224
        %v2229 = vadd.f32 %v2213, %v2225
        %v2230 = vmul.f32 %v2226, %v236
        %v2231 = vmul.f32 %v2227, %v238
        %v2232 = vmul.f32 %v2228, %v240
        %v2233 = vmul.f32 %v2229, %v242
        %v2234 = vadd.f32 %v1954, %v2230
        %v2235 = vadd.f32 %v1955, %v2231
        %v2236 = vadd.f32 %v1956, %v2232
        %v2237 = vadd.f32 %v1957, %v2233
        %2238 = vst [vmem:[%s181] sm:$0xff] %v2234
        %2239 = vst [vmem:[%s181 + $0x8] sm:$0xff] %v2235
        %2240 = vst [vmem:[%s181 + $0x10] sm:$0xff] %v2236
        %2241 = vst [vmem:[%s181 + $0x18] sm:$0xff] %v2237
        %v2242 = vrcp.pop %v2234
        %v2243 = vrcp.pop %v2235
        %v2244 = vrcp.pop %v2236
        %v2245 = vrcp.pop %v2237
        %s2246 = sld [smem:[#allocation3 + %s243]]
        %v2247 = vld [vmem:[%s193] sm:$0xff]
        %v2248 = vld [vmem:[%s193 + $0x8] sm:$0xff]
        %v2249 = vld [vmem:[%s193 + $0x10] sm:$0xff]
        %v2250 = vld [vmem:[%s193 + $0x18] sm:$0xff]
        %v2251 = vmul.f32 %v2247, 0.5
        %v2252 = vmul.f32 %v2248, 0.5
        %v2253 = vmul.f32 %v2249, 0.5
        %v2254 = vmul.f32 %v2250, 0.5
        %s2255 = ssub.f32 0.5, %s2246
        %v2256 = vstv %s2255
        %v2257 = vadd.f32 %v2251, %v2256
        %v2258 = vadd.f32 %v2252, %v2256
        %v2259 = vadd.f32 %v2253, %v2256
        %v2260 = vadd.f32 %v2254, %v2256
        %v2261 = vmul.f32 %v2257, %v2242
        %v2262 = vmul.f32 %v2258, %v2243
        %v2263 = vmul.f32 %v2259, %v2244
        %v2264 = vmul.f32 %v2260, %v2245
        %v2265 = vstv %s2246
        %v2266 = vadd.f32 %v2261, %v2265
        %v2267 = vadd.f32 %v2262, %v2265
        %v2268 = vadd.f32 %v2263, %v2265
        %v2269 = vadd.f32 %v2264, %v2265
        %2270 = vst [vmem:[%s174] sm:$0xff] %v2266
        %2271 = vst [vmem:[%s174 + $0x8] sm:$0xff] %v2267
        %2272 = vst [vmem:[%s174 + $0x10] sm:$0xff] %v2268
        %2273 = vst [vmem:[%s174 + $0x18] sm:$0xff] %v2269
        %v2274 = vadd.f32 %v2265, 0.0
        %2275 = vst [vmem:[%s188] sm:$0xff] %v2274
        %2276 = vst [vmem:[%s188 + $0x8] sm:$0xff] %v2274
        %2277 = vst [vmem:[%s188 + $0x10] sm:$0xff] %v2274
        %2278 = vst [vmem:[%s188 + $0x18] sm:$0xff] %v2274
        %s2279 = sld [smem:[#allocation3 + %s262]]
        %v2280 = vld [vmem:[%s268] sm:$0xff]
        %v2281 = vld [vmem:[%s268 + $0x8] sm:$0xff]
        %v2282 = vld [vmem:[%s268 + $0x10] sm:$0xff]
        %v2283 = vld [vmem:[%s268 + $0x18] sm:$0xff]
        %v2284 = vmul.f32 %v2280, 0.5
        %v2285 = vmul.f32 %v2281, 0.5
        %v2286 = vmul.f32 %v2282, 0.5
        %v2287 = vmul.f32 %v2283, 0.5
        %s2288 = ssub.f32 0.5, %s2279
        %v2289 = vstv %s2288
        %v2290 = vadd.f32 %v2284, %v2289
        %v2291 = vadd.f32 %v2285, %v2289
        %v2292 = vadd.f32 %v2286, %v2289
        %v2293 = vadd.f32 %v2287, %v2289
        %v2294 = vmul.f32 %v2290, %v2242
        %v2295 = vmul.f32 %v2291, %v2243
        %v2296 = vmul.f32 %v2292, %v2244
        %v2297 = vmul.f32 %v2293, %v2245
        %v2298 = vstv %s2279
        %v2299 = vadd.f32 %v2294, %v2298
        %v2300 = vadd.f32 %v2295, %v2298
        %v2301 = vadd.f32 %v2296, %v2298
        %v2302 = vadd.f32 %v2297, %v2298
        %s2303 = scalar_lea.vmem %s174, 32 [#allocation4]
        %2304 = vst [vmem:[%s2303] sm:$0xff] %v2299
        %2305 = vst [vmem:[%s2303 + $0x8] sm:$0xff] %v2300
        %2306 = vst [vmem:[%s2303 + $0x10] sm:$0xff] %v2301
        %2307 = vst [vmem:[%s2303 + $0x18] sm:$0xff] %v2302
        %v2308 = vadd.f32 %v2298, 0.0
        %s2309 = scalar_lea.vmem %s188, 32 [#allocation8]
        %2310 = vst [vmem:[%s2309] sm:$0xff] %v2308
        %2311 = vst [vmem:[%s2309 + $0x8] sm:$0xff] %v2308
        %2312 = vst [vmem:[%s2309 + $0x10] sm:$0xff] %v2308
        %2313 = vst [vmem:[%s2309 + $0x18] sm:$0xff] %v2308
        %s2314 = sld [smem:[#allocation3 + %s286]]
        %v2315 = vld [vmem:[%s292] sm:$0xff]
        %v2316 = vld [vmem:[%s292 + $0x8] sm:$0xff]
        %v2317 = vld [vmem:[%s292 + $0x10] sm:$0xff]
        %v2318 = vld [vmem:[%s292 + $0x18] sm:$0xff]
        %v2319 = vmul.f32 %v2315, 0.5
        %v2320 = vmul.f32 %v2316, 0.5
        %v2321 = vmul.f32 %v2317, 0.5
        %v2322 = vmul.f32 %v2318, 0.5
        %s2323 = ssub.f32 0.5, %s2314
        %v2324 = vstv %s2323
        %v2325 = vadd.f32 %v2319, %v2324
        %v2326 = vadd.f32 %v2320, %v2324
        %v2327 = vadd.f32 %v2321, %v2324
        %v2328 = vadd.f32 %v2322, %v2324
        %v2329 = vmul.f32 %v2325, %v2242
        %v2330 = vmul.f32 %v2326, %v2243
        %v2331 = vmul.f32 %v2327, %v2244
        %v2332 = vmul.f32 %v2328, %v2245
        %v2333 = vstv %s2314
        %v2334 = vadd.f32 %v2329, %v2333
        %v2335 = vadd.f32 %v2330, %v2333
        %v2336 = vadd.f32 %v2331, %v2333
        %v2337 = vadd.f32 %v2332, %v2333
        %s2338 = scalar_lea.vmem %s174, 64 [#allocation4]
        %2339 = vst [vmem:[%s2338] sm:$0xff] %v2334
        %2340 = vst [vmem:[%s2338 + $0x8] sm:$0xff] %v2335
        %2341 = vst [vmem:[%s2338 + $0x10] sm:$0xff] %v2336
        %2342 = vst [vmem:[%s2338 + $0x18] sm:$0xff] %v2337
        %v2343 = vadd.f32 %v2333, 0.0
        %s2344 = scalar_lea.vmem %s188, 64 [#allocation8]
        %2345 = vst [vmem:[%s2344] sm:$0xff] %v2343
        %2346 = vst [vmem:[%s2344 + $0x8] sm:$0xff] %v2343
        %2347 = vst [vmem:[%s2344 + $0x10] sm:$0xff] %v2343
        %2348 = vst [vmem:[%s2344 + $0x18] sm:$0xff] %v2343
        %s2349 = sand.u32 %s62, 1
        %s2350 = scalar_lea.sflag [#allocation5], %s2349
        %s2351 = sand.u32 %s62, 1
        %s2352 = smul.addr %s2351, 96
        %s2353 = scalar_lea.vmem [#allocation4], %s2352
        %s2354 = sand.u32 %s28, 1
        %s2355 = scalar_lea.sflag [#allocation7], %s2354
        %s2356 = sand.u32 %s88, 1
        %s2357 = smul.addr %s2356, 32
        %s2358 = scalar_lea.vmem [#allocation6], %s2357
        %s2359 = sand.u32 %s28, 1
        %s2360 = scalar_lea.sflag [#allocation7], %s2359
        %s2361 = sand.u32 %s114, 1
        %s2362 = smul.addr %s2361, 96
        %s2363 = scalar_lea.vmem [#allocation8], %s2362
        // Predicated region
        $region25: #{dcp_dehaze_forward.3} parent=23 // pred_check
          %p2364 = pneg %p72
        $region26: #{dcp_dehaze_forward.3} parent=23 // pred_check_branch
          %2366 = sbr.rel (%p2364) target = $region28
        $region27: #{dcp_dehaze_forward.3} parent=23 // pred_region
          %s2368 = ssub.s32 1536, 1536
          %2369 = vsyncadd %s2350, %s2368
          %s2370 = smul.addr %s28, 12
          %s2371 = smul.addr %s2370, 128
          %s2372 = scalar_lea.hbm %s2, %s2371
          %s2373 = sshll.u32 %s2353, 4
          %s2374 = int_to_ptr.vmem [resolvable:$true] %s2373
          %2379 = dma.vmem_to_hbm [thread:$0]  %s2374, 1536, %s2372, %s2350, 128, 128, 8
        $region28: #{dcp_dehaze_forward.3} parent=23 // pred_fallthru
          _
        // Predicated region
        $region29: #{dcp_dehaze_forward.3} parent=23 // pred_check
          %p2380 = pneg %p98
        $region30: #{dcp_dehaze_forward.3} parent=23 // pred_check_branch
          %2382 = sbr.rel (%p2380) target = $region32
        $region31: #{dcp_dehaze_forward.3} parent=23 // pred_region
          %s2384 = ssub.s32 512, 512
          %2385 = vsyncadd %s2355, %s2384
          %s2386 = smul.addr %s28, 4
          %s2387 = smul.addr %s2386, 128
          %s2388 = scalar_lea.hbm %s3, %s2387
          %s2389 = sshll.u32 %s2358, 4
          %s2390 = int_to_ptr.vmem [resolvable:$true] %s2389
          %2395 = dma.vmem_to_hbm [thread:$0]  %s2390, 512, %s2388, %s2355, 128, 128, 8
        $region32: #{dcp_dehaze_forward.3} parent=23 // pred_fallthru
          _
        // Predicated region
        $region33: #{dcp_dehaze_forward.3} parent=23 // pred_check
          %p2396 = pneg %p124
        $region34: #{dcp_dehaze_forward.3} parent=23 // pred_check_branch
          %2398 = sbr.rel (%p2396) target = $region36
        $region35: #{dcp_dehaze_forward.3} parent=23 // pred_region
          %s2400 = ssub.s32 1536, 1536
          %2401 = vsyncadd %s2360, %s2400
          %s2402 = smul.addr %s28, 12
          %s2403 = smul.addr %s2402, 128
          %s2404 = scalar_lea.hbm %s4, %s2403
          %s2405 = sshll.u32 %s2363, 4
          %s2406 = int_to_ptr.vmem [resolvable:$true] %s2405
          %2411 = dma.vmem_to_hbm [thread:$0]  %s2406, 1536, %s2404, %s2360, 128, 128, 8
        $region36: #{dcp_dehaze_forward.3} parent=23 // pred_fallthru
          _
      $region24: #{dcp_dehaze_forward.3} parent=5 // pred_fallthru
        _
      %p2412 = scmp.le.s32.totalorder 2, %s23
      // Predicated region
      $region37: #{dcp_dehaze_forward.3} parent=5 // pred_check
        %p2413 = pneg %p2412
      $region38: #{dcp_dehaze_forward.3} parent=5 // pred_check_branch
        %2415 = sbr.rel (%p2413) target = $region40
      $region39: #{dcp_dehaze_forward.3} parent=5 // pred_region
        %s2416 = ssub.s32 %s23, 2
        // Predicated region
        $region41: #{dcp_dehaze_forward.3} parent=39 // pred_check
          %p2417 = pneg %p78
        $region42: #{dcp_dehaze_forward.3} parent=39 // pred_check_branch
          %2419 = sbr.rel (%p2417) target = $region44
        $region43: #{dcp_dehaze_forward.3} parent=39 // pred_region
          %s2420 = sand.u32 %s63, 1
          %s2421 = scalar_lea.sflag [#allocation5], %s2420
          %s2422 = sand.u32 %s63, 1
          %s2423 = smul.addr %s2422, 96
          %s2424 = scalar_lea.vmem [#allocation4], %s2423
          %2425 = dma.done %s2421, 1536
        $region44: #{dcp_dehaze_forward.3} parent=39 // pred_fallthru
          _
        // Predicated region
        $region45: #{dcp_dehaze_forward.3} parent=39 // pred_check
          %p2426 = pneg %p104
        $region46: #{dcp_dehaze_forward.3} parent=39 // pred_check_branch
          %2428 = sbr.rel (%p2426) target = $region48
        $region47: #{dcp_dehaze_forward.3} parent=39 // pred_region
          %s2429 = sand.u32 %s29, 1
          %s2430 = scalar_lea.sflag [#allocation7], %s2429
          %s2431 = sand.u32 %s89, 1
          %s2432 = smul.addr %s2431, 32
          %s2433 = scalar_lea.vmem [#allocation6], %s2432
          %2434 = dma.done %s2430, 512
        $region48: #{dcp_dehaze_forward.3} parent=39 // pred_fallthru
          _
        // Predicated region
        $region49: #{dcp_dehaze_forward.3} parent=39 // pred_check
          %p2435 = pneg %p130
        $region50: #{dcp_dehaze_forward.3} parent=39 // pred_check_branch
          %2437 = sbr.rel (%p2435) target = $region52
        $region51: #{dcp_dehaze_forward.3} parent=39 // pred_region
          %s2438 = sand.u32 %s29, 1
          %s2439 = scalar_lea.sflag [#allocation7], %s2438
          %s2440 = sand.u32 %s115, 1
          %s2441 = smul.addr %s2440, 96
          %s2442 = scalar_lea.vmem [#allocation8], %s2441
          %2443 = dma.done %s2439, 1536
        $region52: #{dcp_dehaze_forward.3} parent=39 // pred_fallthru
          _
      $region40: #{dcp_dehaze_forward.3} parent=5 // pred_fallthru
        _
    $region6: #{dcp_dehaze_forward.3} parent=1 // loop_footer
      %s27 = sadd.s32 1, %s23
    $region7: #{dcp_dehaze_forward.3} parent=1 // loop_footer_branch
      %22 = sbr.rel target = $region3
    $region8: #{dcp_dehaze_forward.3} parent=1 // loop_exit
      _
    %2444 = vsyncpa [#allocation5], 1
    %s2445 = scalar_lea.sflag [#allocation5], 1
    %2446 = vsyncpa %s2445, 1
    %2447 = vsyncpa [#allocation7], 1
    %s2448 = scalar_lea.sflag [#allocation7], 1
    %2449 = vsyncpa %s2448, 1

</llo_original>
